<compile_context>
chip_gen: v7x
topology: tpu7x:2x2x1
jax: 0.10.0
libtpu: 0.0.40
codegen_flags: <defaults>
</compile_context>

<pallas_src>
import numpy as np
import jax
import jax.numpy as jnp
from jax.experimental import pallas as pl
from jax.experimental.pallas import tpu as pltpu


# ----------------------------------------------------------------------------
# Per-axis resampling matrices (numpy glue).
# ----------------------------------------------------------------------------
def avgpool_matrix(size, k, stride, pad):
    """AvgPool2d per-axis matrix, count_include_pad=True (PyTorch default)."""
    out = (size + 2 * pad - k) // stride + 1
    P = np.zeros((out, size), np.float32)
    for o in range(out):
        start = o * stride - pad
        for t in range(k):
            idx = start + t
            if 0 <= idx < size:
                P[o, idx] = 1.0 / k
    return P


def bilinear_matrix(dst, src):
    """Per-axis bilinear interpolation matrix, align_corners=False (PyTorch)."""
    if src == 1:
        return np.ones((dst, 1), np.float32)
    scale = src / dst
    B = np.zeros((dst, src), np.float32)
    for d in range(dst):
        s = max((d + 0.5) * scale - 0.5, 0.0)
        i0 = min(int(np.floor(s)), src - 1)
        i1 = min(i0 + 1, src - 1)
        lam = s - i0
        B[d, i0] += 1.0 - lam
        B[d, i1] += lam
    return B


# ----------------------------------------------------------------------------
# Fused PAPPM forward: one Pallas kernel, grid over batch.
# ----------------------------------------------------------------------------
def pappm_forward(x_nchw, params, mxu_dtype=jnp.bfloat16):
    x_nchw = x_nchw.astype(jnp.float32)
    N, Cin, H, W = x_nchw.shape
    S = H * W
    bp, outC = params["bp"], params["outC"]
    G = 4

    # ---- pooling / upsampling matrices folded to (S, ho*wo) / (ho*wo, S) ----
    # PAPPM runs at 1/64 image resolution so these stay tiny; one matmul each.
    pool_cfg = [(5, 2, 2), (9, 4, 4), (17, 8, 8)]
    pool_T, up_T = [], []
    for (k, s, p) in pool_cfg:
        Ph = avgpool_matrix(H, k, s, p)                    # (ho, H)
        Pw = avgpool_matrix(W, k, s, p)                    # (wo, W)
        Bh = bilinear_matrix(H, Ph.shape[0])               # (H, ho)
        Bw = bilinear_matrix(W, Pw.shape[0])               # (W, wo)
        pool_T.append(jnp.asarray(np.kron(Ph, Pw).T))      # (S, ho*wo)
        up_T.append(jnp.asarray(np.kron(Bh, Bw).T))        # (ho*wo, S)

    # ---- parameters packaged channel-major / lane-dense friendly ----
    bns = params["bn_scale"][:, :, None]                   # (6, Cin, 1)
    bnb = params["bn_bias"][:, :, None]                    # (6, Cin, 1)
    w5 = params["w_scale"]                                 # (5, bp, Cin)
    wsc = params["w_shortcut"]                             # (outC, Cin)
    sps = params["sp_bn_scale"][:, None]                   # (4bp, 1)
    spb = params["sp_bn_bias"][:, None]                    # (4bp, 1)
    spw = jnp.transpose(params["sp_w"], (0, 1, 3, 4, 2)).reshape(G, bp, 9 * bp)  # im2col
    cs = params["c_bn_scale"][:, None]                     # (5bp, 1)
    cb = params["c_bn_bias"][:, None]                      # (5bp, 1)
    cw = params["c_w"]                                     # (outC, 5bp)

    x_cs = x_nchw.reshape(N, Cin, S)                       # channels-major, flat spatial

    def kernel(x_ref, bns_ref, bnb_ref, w5_ref, wsc_ref,
               pk1, uk1, pk2, uk2, pk3, uk3,
               sps_ref, spb_ref, spw_ref, cs_ref, cb_ref, cw_ref, o_ref):
        f32 = jnp.float32

        def mdot(a, b):
            # MXU matmul: bf16 operands (v6e/v7x-native) or f32, f32 accumulation.
            return jnp.dot(a.astype(mxu_dtype), b.astype(mxu_dtype),
                           preferred_element_type=f32)

        def bn_relu(v, sc, bi):
            return jnp.maximum(v * sc + bi, 0.0)

        x2 = x_ref[0]                                      # (Cin, S), lane-dense

        poolT = [pk1[...], pk2[...], pk3[...]]             # (S, ho*wo)
        upT = [uk1[...], uk2[...], uk3[...]]               # (ho*wo, S)
        sps_v, spb_v = sps_ref[...], spb_ref[...]
        cs_v, cb_v, cw_v = cs_ref[...], cb_ref[...], cw_ref[...]

        # scale0 (x_) and shortcut: fused BN -> ReLU -> 1x1 conv (lane-dense outputs)
        x_feat = mdot(w5_ref[0], bn_relu(x2, bns_ref[0], bnb_ref[0]))      # (bp, S)
        short = mdot(wsc_ref[...], bn_relu(x2, bns_ref[5], bnb_ref[5]))    # (outC, S)

        # pyramid branches 1..3: avg-pool -> BN -> ReLU -> 1x1 conv -> bilinear up (+x_)
        feats = []
        for i in range(3):
            pooled = mdot(x2, poolT[i])                                    # (Cin, ho*wo)
            hb = bn_relu(pooled, bns_ref[i + 1], bnb_ref[i + 1])
            y = mdot(w5_ref[i + 1], hb)                                    # (bp, ho*wo)
            feats.append(x_feat + mdot(y, upT[i]))                         # (bp, S)

        # scale4: global avg pool -> BN -> ReLU -> 1x1 conv -> broadcast (+x_)
        gm = jnp.mean(x2, axis=1, keepdims=True)                           # (Cin, 1)
        g_full = jnp.broadcast_to(bn_relu(gm, bns_ref[4], bnb_ref[4]), (Cin, S))
        feats.append(x_feat + mdot(w5_ref[4], g_full))                     # (bp, S)

        # scale_process: per-group BN -> ReLU -> 3x3 conv as ONE K=9*bp im2col matmul.
        # 3x3 windows via halo-pad + static shifts on the flat (4bp, S) slab; only the
        # (W+1)-wide halo is zero-filled, left/right wrap handled with lane masks.
        hcat = bn_relu(jnp.concatenate(feats, axis=0), sps_v, spb_v)       # (4bp, S)
        col = jax.lax.broadcasted_iota(jnp.int32, (1, S), 1) % W
        mask_l = jnp.where(col != 0, 1.0, 0.0).astype(f32)                 # dx = -1
        mask_r = jnp.where(col != (W - 1), 1.0, 0.0).astype(f32)           # dx = +1
        halo = jnp.zeros((G * bp, W + 1), f32)
        padded = jnp.concatenate([halo, hcat, halo], axis=1)               # (4bp, S+2W+2)
        taps = []
        for dy in (-1, 0, 1):
            for dx in (-1, 0, 1):
                start = (W + 1) + dy * W + dx
                win = padded[:, start:start + S]                           # (4bp, S)
                if dx == -1:
                    win = win * mask_l
                elif dx == 1:
                    win = win * mask_r
                taps.append(win)
        sp_out = []
        for g in range(G):
            im2col = jnp.concatenate([t[g * bp:(g + 1) * bp] for t in taps], axis=0)
            sp_out.append(mdot(spw_ref[g], im2col))                        # (bp, S)

        # compression over cat([x_, scale_out]) as one K=5*bp matmul + fused shortcut
        comp_in = jnp.concatenate([x_feat] + sp_out, axis=0)               # (5bp, S)
        out = short + mdot(cw_v, bn_relu(comp_in, cs_v, cb_v))             # (outC, S)
        o_ref[0] = out.astype(o_ref.dtype)

    def const_spec(arr):
        nd = arr.ndim
        return pl.BlockSpec(arr.shape, lambda n, _nd=nd: (0,) * _nd)

    args = [x_cs, bns, bnb, w5, wsc,
            pool_T[0], up_T[0], pool_T[1], up_T[1], pool_T[2], up_T[2],
            sps, spb, spw, cs, cb, cw]
    in_specs = ([pl.BlockSpec((1, Cin, S), lambda n: (n, 0, 0))]
                + [const_spec(a) for a in args[1:]])

    out = pl.pallas_call(
        kernel,
        out_shape=jax.ShapeDtypeStruct((N, outC, S), jnp.float32),
        grid=(N,),
        in_specs=in_specs,
        out_specs=pl.BlockSpec((1, outC, S), lambda n: (n, 0, 0)),
        compiler_params=pltpu.CompilerParams(dimension_semantics=("parallel",)),
    )(*args)
    return out.reshape(N, outC, H, W)


# ----------------------------------------------------------------------------
# Deterministic synthetic parameters (BN folded into scale/bias).
# ----------------------------------------------------------------------------
def init_params(key, inplanes, branch_planes, outplanes, eps=1e-5):
    bp, G = branch_planes, 4
    keys = jax.random.split(key, 8)

    def bn_fold(k, C):
        k1, k2, k3, k4 = jax.random.split(k, 4)
        gamma = jax.random.uniform(k1, (C,), jnp.float32, 0.5, 1.5)
        beta = jax.random.normal(k2, (C,), jnp.float32) * 0.1
        mean = jax.random.normal(k3, (C,), jnp.float32) * 0.1
        var = jax.random.uniform(k4, (C,), jnp.float32, 0.5, 1.5)
        sc = gamma * jax.lax.rsqrt(var + eps)
        return sc, beta - mean * sc

    bn_s, bn_b = [], []
    for i in range(6):  # scale0..scale4, shortcut (all over `inplanes`)
        sc, bi = bn_fold(jax.random.fold_in(keys[0], i), inplanes)
        bn_s.append(sc)
        bn_b.append(bi)

    w_scale = jax.random.normal(keys[1], (5, bp, inplanes), jnp.float32) / np.sqrt(inplanes)
    w_short = jax.random.normal(keys[2], (outplanes, inplanes), jnp.float32) / np.sqrt(inplanes)

    sp_s, sp_b = bn_fold(keys[3], G * bp)
    sp_w = jax.random.normal(keys[4], (G, bp, bp, 3, 3), jnp.float32) / np.sqrt(9 * bp)

    c_s, c_b = bn_fold(keys[5], 5 * bp)
    c_w = jax.random.normal(keys[6], (outplanes, 5 * bp), jnp.float32) / np.sqrt(5 * bp)

    return dict(bp=bp, outC=outplanes,
                bn_scale=jnp.stack(bn_s), bn_bias=jnp.stack(bn_b),
                w_scale=w_scale, w_shortcut=w_short,
                sp_bn_scale=sp_s, sp_bn_bias=sp_b, sp_w=sp_w,
                c_bn_scale=c_s, c_bn_bias=c_b, c_w=c_w)


# ----------------------------------------------------------------------------
# Independent pure-JAX (non-Pallas) f32 reference of the same module semantics.
# ----------------------------------------------------------------------------
def reference_forward(x_nchw, p):
    x = x_nchw.astype(jnp.float32)
    N, Cin, H, W = x.shape
    bp, outC = p["bp"], p["outC"]
    hp = jax.lax.Precision.HIGHEST

    def bnrelu(v, sc, bi):  # v: (N,C,h,w); sc,bi: (C,)
        return jnp.maximum(v * sc[None, :, None, None] + bi[None, :, None, None], 0.0)

    def conv1x1(v, wT):     # wT: (Cout, Cin)
        return jnp.einsum('oc,nchw->nohw', wT, v, precision=hp)

    x_ = conv1x1(bnrelu(x, p["bn_scale"][0], p["bn_bias"][0]), p["w_scale"][0])
    short = conv1x1(bnrelu(x, p["bn_scale"][5], p["bn_bias"][5]), p["w_shortcut"])

    feats = []
    for i, (k, s_, pd) in enumerate([(5, 2, 2), (9, 4, 4), (17, 8, 8)], start=1):
        Ph = jnp.asarray(avgpool_matrix(H, k, s_, pd))
        Pw = jnp.asarray(avgpool_matrix(W, k, s_, pd))
        pooled = jnp.einsum('oh,pw,nchw->ncop', Ph, Pw, x, precision=hp)
        y = conv1x1(bnrelu(pooled, p["bn_scale"][i], p["bn_bias"][i]), p["w_scale"][i])
        Bh = jnp.asarray(bilinear_matrix(H, Ph.shape[0]))
        Bw = jnp.asarray(bilinear_matrix(W, Pw.shape[0]))
        up = jnp.einsum('ro,sp,ncop->ncrs', Bh, Bw, y, precision=hp)
        feats.append(up + x_)
    gmean = jnp.mean(x, axis=(2, 3), keepdims=True)
    y4 = conv1x1(bnrelu(gmean, p["bn_scale"][4], p["bn_bias"][4]), p["w_scale"][4])
    feats.append(y4 + x_)

    cat = jnp.concatenate(feats, axis=1)                       # (N, 4bp, H, W)
    hcat = jnp.maximum(cat * p["sp_bn_scale"][None, :, None, None]
                       + p["sp_bn_bias"][None, :, None, None], 0.0)
    hpad = jnp.pad(hcat, ((0, 0), (0, 0), (1, 1), (1, 1)))
    sp_list = []
    for g in range(4):
        acc = jnp.zeros((N, bp, H, W), jnp.float32)
        for kh in range(3):
            for kw in range(3):
                win = hpad[:, g * bp:(g + 1) * bp, kh:kh + H, kw:kw + W]
                acc = acc + jnp.einsum('oc,nchw->nohw', p["sp_w"][g, :, :, kh, kw],
                                       win, precision=hp)
        sp_list.append(acc)
    comp_in = jnp.concatenate([x_] + sp_list, axis=1)          # (N, 5bp, H, W)
    hcomp = jnp.maximum(comp_in * p["c_bn_scale"][None, :, None, None]
                        + p["c_bn_bias"][None, :, None, None], 0.0)
    comp = jnp.einsum('oc,nchw->nohw', p["c_w"], hcomp, precision=hp)
    return comp + short


if __name__ == "__main__":
    key = jax.random.PRNGKey(0)
    kx, kp = jax.random.split(key)
    N, Cin, H, W = 2, 4, 16, 16            # inplanes = 4
    branch_planes, outplanes = 8, 8

    x = jax.random.normal(kx, (N, Cin, H, W), jnp.float32)
    params = init_params(kp, Cin, branch_planes, outplanes)

    ref = jax.block_until_ready(reference_forward(x, params))
    scale = float(jnp.max(jnp.abs(ref)))

    # tight check (f32 MXU operands)
    out_f32 = jax.block_until_ready(pappm_forward(x, params, mxu_dtype=jnp.float32))
    assert out_f32.shape == (N, outplanes, H, W)
    err_f32 = float(jnp.max(jnp.abs(out_f32 - ref)))
    assert np.isfinite(err_f32) and err_f32 < 2e-2 * (1.0 + scale), \
        f"f32 kernel mismatch: {err_f32}"

    # performance mode (bf16 MXU operands, f32 accumulation) -- looser tolerance
    out_bf16 = jax.block_until_ready(pappm_forward(x, params, mxu_dtype=jnp.bfloat16))
    assert out_bf16.shape == (N, outplanes, H, W)
    err_bf16 = float(jnp.max(jnp.abs(out_bf16 - ref)))
    assert np.isfinite(err_bf16) and err_bf16 < 1e-1 * (1.0 + scale), \
        f"bf16 kernel mismatch: {err_bf16}"

    print("KERNEL_OK")
</pallas_src>

<mosaic_0001>
module attributes {stable_mosaic.version = 11 : i64} {
  func.func @kernel(%arg0: i32, %arg1: memref<1x4x256xf32, #tpu.memory_space<vmem>>, %arg2: memref<6x4x1xf32, #tpu.memory_space<vmem>>, %arg3: memref<6x4x1xf32, #tpu.memory_space<vmem>>, %arg4: memref<5x8x4xf32, #tpu.memory_space<vmem>>, %arg5: memref<8x4xf32, #tpu.memory_space<vmem>>, %arg6: memref<256x64xf32, #tpu.memory_space<vmem>>, %arg7: memref<64x256xf32, #tpu.memory_space<vmem>>, %arg8: memref<256x16xf32, #tpu.memory_space<vmem>>, %arg9: memref<16x256xf32, #tpu.memory_space<vmem>>, %arg10: memref<256x4xf32, #tpu.memory_space<vmem>>, %arg11: memref<4x256xf32, #tpu.memory_space<vmem>>, %arg12: memref<32x1xf32, #tpu.memory_space<vmem>>, %arg13: memref<32x1xf32, #tpu.memory_space<vmem>>, %arg14: memref<4x8x72xf32, #tpu.memory_space<vmem>>, %arg15: memref<40x1xf32, #tpu.memory_space<vmem>>, %arg16: memref<40x1xf32, #tpu.memory_space<vmem>>, %arg17: memref<8x40xf32, #tpu.memory_space<vmem>>, %arg18: memref<1x8x256xf32, #tpu.memory_space<vmem>>) attributes {dimension_semantics = [#tpu.dimension_semantics<parallel>], iteration_bounds = array<i64: 2>, scalar_prefetch = 0 : i64, scratch_operands = 0 : i64, tpu.core_type = #tpu.core_type<tc>, window_params = [{transform_indices = @transform_0, window_bounds = array<i64: 1, 4, 256>}, {pipeline_mode = #tpu.pipeline_mode<synchronous>, transform_indices = @transform_1, window_bounds = array<i64: 6, 4, 1>}, {pipeline_mode = #tpu.pipeline_mode<synchronous>, transform_indices = @transform_2, window_bounds = array<i64: 6, 4, 1>}, {pipeline_mode = #tpu.pipeline_mode<synchronous>, transform_indices = @transform_3, window_bounds = array<i64: 5, 8, 4>}, {pipeline_mode = #tpu.pipeline_mode<synchronous>, transform_indices = @transform_4, window_bounds = array<i64: 8, 4>}, {pipeline_mode = #tpu.pipeline_mode<synchronous>, transform_indices = @transform_5, window_bounds = array<i64: 256, 64>}, {pipeline_mode = #tpu.pipeline_mode<synchronous>, transform_indices = @transform_6, window_bounds = array<i64: 64, 256>}, {pipeline_mode = #tpu.pipeline_mode<synchronous>, transform_indices = @transform_7, window_bounds = array<i64: 256, 16>}, {pipeline_mode = #tpu.pipeline_mode<synchronous>, transform_indices = @transform_8, window_bounds = array<i64: 16, 256>}, {pipeline_mode = #tpu.pipeline_mode<synchronous>, transform_indices = @transform_9, window_bounds = array<i64: 256, 4>}, {pipeline_mode = #tpu.pipeline_mode<synchronous>, transform_indices = @transform_10, window_bounds = array<i64: 4, 256>}, {pipeline_mode = #tpu.pipeline_mode<synchronous>, transform_indices = @transform_11, window_bounds = array<i64: 32, 1>}, {pipeline_mode = #tpu.pipeline_mode<synchronous>, transform_indices = @transform_12, window_bounds = array<i64: 32, 1>}, {pipeline_mode = #tpu.pipeline_mode<synchronous>, transform_indices = @transform_13, window_bounds = array<i64: 4, 8, 72>}, {pipeline_mode = #tpu.pipeline_mode<synchronous>, transform_indices = @transform_14, window_bounds = array<i64: 40, 1>}, {pipeline_mode = #tpu.pipeline_mode<synchronous>, transform_indices = @transform_15, window_bounds = array<i64: 40, 1>}, {pipeline_mode = #tpu.pipeline_mode<synchronous>, transform_indices = @transform_16, window_bounds = array<i64: 8, 40>}, {transform_indices = @transform_17, window_bounds = array<i64: 1, 8, 256>}]} {
    %c0 = arith.constant 0 : index
    %c0_0 = arith.constant 0 : index
    %c0_1 = arith.constant 0 : index
    %0 = vector.load %arg1[%c0, %c0_0, %c0_1] : memref<1x4x256xf32, #tpu.memory_space<vmem>>, vector<1x4x256xf32>
    %1 = vector.shape_cast %0 : vector<1x4x256xf32> to vector<4x256xf32>
    %c0_2 = arith.constant 0 : index
    %c0_3 = arith.constant 0 : index
    %2 = vector.load %arg6[%c0_2, %c0_3] : memref<256x64xf32, #tpu.memory_space<vmem>>, vector<256x64xf32>
    %c0_4 = arith.constant 0 : index
    %c0_5 = arith.constant 0 : index
    %3 = vector.load %arg8[%c0_4, %c0_5] : memref<256x16xf32, #tpu.memory_space<vmem>>, vector<256x16xf32>
    %c0_6 = arith.constant 0 : index
    %c0_7 = arith.constant 0 : index
    %4 = vector.load %arg10[%c0_6, %c0_7] : memref<256x4xf32, #tpu.memory_space<vmem>>, vector<256x4xf32>
    %c0_8 = arith.constant 0 : index
    %c0_9 = arith.constant 0 : index
    %5 = vector.load %arg7[%c0_8, %c0_9] : memref<64x256xf32, #tpu.memory_space<vmem>>, vector<64x256xf32>
    %c0_10 = arith.constant 0 : index
    %c0_11 = arith.constant 0 : index
    %6 = vector.load %arg9[%c0_10, %c0_11] : memref<16x256xf32, #tpu.memory_space<vmem>>, vector<16x256xf32>
    %c0_12 = arith.constant 0 : index
    %c0_13 = arith.constant 0 : index
    %7 = vector.load %arg11[%c0_12, %c0_13] : memref<4x256xf32, #tpu.memory_space<vmem>>, vector<4x256xf32>
    %c0_14 = arith.constant 0 : index
    %c0_15 = arith.constant 0 : index
    %8 = vector.load %arg12[%c0_14, %c0_15] : memref<32x1xf32, #tpu.memory_space<vmem>>, vector<32x1xf32>
    %c0_16 = arith.constant 0 : index
    %c0_17 = arith.constant 0 : index
    %9 = vector.load %arg13[%c0_16, %c0_17] : memref<32x1xf32, #tpu.memory_space<vmem>>, vector<32x1xf32>
    %c0_18 = arith.constant 0 : index
    %c0_19 = arith.constant 0 : index
    %10 = vector.load %arg15[%c0_18, %c0_19] : memref<40x1xf32, #tpu.memory_space<vmem>>, vector<40x1xf32>
    %c0_20 = arith.constant 0 : index
    %c0_21 = arith.constant 0 : index
    %11 = vector.load %arg16[%c0_20, %c0_21] : memref<40x1xf32, #tpu.memory_space<vmem>>, vector<40x1xf32>
    %c0_22 = arith.constant 0 : index
    %c0_23 = arith.constant 0 : index
    %12 = vector.load %arg17[%c0_22, %c0_23] : memref<8x40xf32, #tpu.memory_space<vmem>>, vector<8x40xf32>
    %c0_24 = arith.constant 0 : index
    %c0_25 = arith.constant 0 : index
    %c0_26 = arith.constant 0 : index
    %13 = vector.load %arg4[%c0_24, %c0_25, %c0_26] : memref<5x8x4xf32, #tpu.memory_space<vmem>>, vector<1x8x4xf32>
    %14 = vector.shape_cast %13 : vector<1x8x4xf32> to vector<8x4xf32>
    %c0_27 = arith.constant 0 : index
    %c0_28 = arith.constant 0 : index
    %c0_29 = arith.constant 0 : index
    %15 = vector.load %arg2[%c0_27, %c0_28, %c0_29] : memref<6x4x1xf32, #tpu.memory_space<vmem>>, vector<1x4x1xf32>
    %16 = vector.shape_cast %15 : vector<1x4x1xf32> to vector<4x1xf32>
    %c0_30 = arith.constant 0 : index
    %c0_31 = arith.constant 0 : index
    %c0_32 = arith.constant 0 : index
    %17 = vector.load %arg3[%c0_30, %c0_31, %c0_32] : memref<6x4x1xf32, #tpu.memory_space<vmem>>, vector<1x4x1xf32>
    %18 = vector.shape_cast %17 : vector<1x4x1xf32> to vector<4x1xf32>
    %19 = vector.broadcast %16 : vector<4x1xf32> to vector<4x256xf32>
    %20 = arith.mulf %1, %19 : vector<4x256xf32>
    %21 = vector.broadcast %18 : vector<4x1xf32> to vector<4x256xf32>
    %22 = arith.addf %20, %21 : vector<4x256xf32>
    %cst = arith.constant 0.000000e+00 : f32
    %23 = vector.broadcast %cst : f32 to vector<4x256xf32>
    %24 = arith.maximumf %22, %23 : vector<4x256xf32>
    %cst_33 = arith.constant dense<0.000000e+00> : vector<8x256xf32>
    %25 = tpu.matmul %14, %24, %cst_33 {dimension_numbers = #tpu.dot_dimension_numbers<[1], [0], [0], [1], [0, 0, 1, 1], [], []>} : vector<8x4xf32>, vector<4x256xf32>, vector<8x256xf32> -> vector<8x256xf32>
    %c0_34 = arith.constant 0 : index
    %c0_35 = arith.constant 0 : index
    %26 = vector.load %arg5[%c0_34, %c0_35] : memref<8x4xf32, #tpu.memory_space<vmem>>, vector<8x4xf32>
    %c5 = arith.constant 5 : index
    %c0_36 = arith.constant 0 : index
    %c0_37 = arith.constant 0 : index
    %27 = vector.load %arg2[%c5, %c0_36, %c0_37] : memref<6x4x1xf32, #tpu.memory_space<vmem>>, vector<1x4x1xf32>
    %28 = vector.shape_cast %27 : vector<1x4x1xf32> to vector<4x1xf32>
    %c5_38 = arith.constant 5 : index
    %c0_39 = arith.constant 0 : index
    %c0_40 = arith.constant 0 : index
    %29 = vector.load %arg3[%c5_38, %c0_39, %c0_40] : memref<6x4x1xf32, #tpu.memory_space<vmem>>, vector<1x4x1xf32>
    %30 = vector.shape_cast %29 : vector<1x4x1xf32> to vector<4x1xf32>
    %31 = vector.broadcast %28 : vector<4x1xf32> to vector<4x256xf32>
    %32 = arith.mulf %1, %31 : vector<4x256xf32>
    %33 = vector.broadcast %30 : vector<4x1xf32> to vector<4x256xf32>
    %34 = arith.addf %32, %33 : vector<4x256xf32>
    %cst_41 = arith.constant 0.000000e+00 : f32
    %35 = vector.broadcast %cst_41 : f32 to vector<4x256xf32>
    %36 = arith.maximumf %34, %35 : vector<4x256xf32>
    %cst_42 = arith.constant dense<0.000000e+00> : vector<8x256xf32>
    %37 = tpu.matmul %26, %36, %cst_42 {dimension_numbers = #tpu.dot_dimension_numbers<[1], [0], [0], [1], [0, 0, 1, 1], [], []>} : vector<8x4xf32>, vector<4x256xf32>, vector<8x256xf32> -> vector<8x256xf32>
    %cst_43 = arith.constant dense<0.000000e+00> : vector<4x64xf32>
    %38 = tpu.matmul %1, %2, %cst_43 {dimension_numbers = #tpu.dot_dimension_numbers<[1], [0], [0], [1], [0, 0, 1, 1], [], []>} : vector<4x256xf32>, vector<256x64xf32>, vector<4x64xf32> -> vector<4x64xf32>
    %c1 = arith.constant 1 : index
    %c0_44 = arith.constant 0 : index
    %c0_45 = arith.constant 0 : index
    %39 = vector.load %arg2[%c1, %c0_44, %c0_45] : memref<6x4x1xf32, #tpu.memory_space<vmem>>, vector<1x4x1xf32>
    %40 = vector.shape_cast %39 : vector<1x4x1xf32> to vector<4x1xf32>
    %c1_46 = arith.constant 1 : index
    %c0_47 = arith.constant 0 : index
    %c0_48 = arith.constant 0 : index
    %41 = vector.load %arg3[%c1_46, %c0_47, %c0_48] : memref<6x4x1xf32, #tpu.memory_space<vmem>>, vector<1x4x1xf32>
    %42 = vector.shape_cast %41 : vector<1x4x1xf32> to vector<4x1xf32>
    %43 = vector.broadcast %40 : vector<4x1xf32> to vector<4x64xf32>
    %44 = arith.mulf %38, %43 : vector<4x64xf32>
    %45 = vector.broadcast %42 : vector<4x1xf32> to vector<4x64xf32>
    %46 = arith.addf %44, %45 : vector<4x64xf32>
    %cst_49 = arith.constant 0.000000e+00 : f32
    %47 = vector.broadcast %cst_49 : f32 to vector<4x64xf32>
    %48 = arith.maximumf %46, %47 : vector<4x64xf32>
    %c1_50 = arith.constant 1 : index
    %c0_51 = arith.constant 0 : index
    %c0_52 = arith.constant 0 : index
    %49 = vector.load %arg4[%c1_50, %c0_51, %c0_52] : memref<5x8x4xf32, #tpu.memory_space<vmem>>, vector<1x8x4xf32>
    %50 = vector.shape_cast %49 : vector<1x8x4xf32> to vector<8x4xf32>
    %cst_53 = arith.constant dense<0.000000e+00> : vector<8x64xf32>
    %51 = tpu.matmul %50, %48, %cst_53 {dimension_numbers = #tpu.dot_dimension_numbers<[1], [0], [0], [1], [0, 0, 1, 1], [], []>} : vector<8x4xf32>, vector<4x64xf32>, vector<8x64xf32> -> vector<8x64xf32>
    %cst_54 = arith.constant dense<0.000000e+00> : vector<8x256xf32>
    %52 = tpu.matmul %51, %5, %cst_54 {dimension_numbers = #tpu.dot_dimension_numbers<[1], [0], [0], [1], [0, 0, 1, 1], [], []>} : vector<8x64xf32>, vector<64x256xf32>, vector<8x256xf32> -> vector<8x256xf32>
    %53 = arith.addf %25, %52 : vector<8x256xf32>
    %cst_55 = arith.constant dense<0.000000e+00> : vector<4x16xf32>
    %54 = tpu.matmul %1, %3, %cst_55 {dimension_numbers = #tpu.dot_dimension_numbers<[1], [0], [0], [1], [0, 0, 1, 1], [], []>} : vector<4x256xf32>, vector<256x16xf32>, vector<4x16xf32> -> vector<4x16xf32>
    %c2 = arith.constant 2 : index
    %c0_56 = arith.constant 0 : index
    %c0_57 = arith.constant 0 : index
    %55 = vector.load %arg2[%c2, %c0_56, %c0_57] : memref<6x4x1xf32, #tpu.memory_space<vmem>>, vector<1x4x1xf32>
    %56 = vector.shape_cast %55 : vector<1x4x1xf32> to vector<4x1xf32>
    %c2_58 = arith.constant 2 : index
    %c0_59 = arith.constant 0 : index
    %c0_60 = arith.constant 0 : index
    %57 = vector.load %arg3[%c2_58, %c0_59, %c0_60] : memref<6x4x1xf32, #tpu.memory_space<vmem>>, vector<1x4x1xf32>
    %58 = vector.shape_cast %57 : vector<1x4x1xf32> to vector<4x1xf32>
    %59 = vector.broadcast %56 : vector<4x1xf32> to vector<4x16xf32>
    %60 = arith.mulf %54, %59 : vector<4x16xf32>
    %61 = vector.broadcast %58 : vector<4x1xf32> to vector<4x16xf32>
    %62 = arith.addf %60, %61 : vector<4x16xf32>
    %cst_61 = arith.constant 0.000000e+00 : f32
    %63 = vector.broadcast %cst_61 : f32 to vector<4x16xf32>
    %64 = arith.maximumf %62, %63 : vector<4x16xf32>
    %c2_62 = arith.constant 2 : index
    %c0_63 = arith.constant 0 : index
    %c0_64 = arith.constant 0 : index
    %65 = vector.load %arg4[%c2_62, %c0_63, %c0_64] : memref<5x8x4xf32, #tpu.memory_space<vmem>>, vector<1x8x4xf32>
    %66 = vector.shape_cast %65 : vector<1x8x4xf32> to vector<8x4xf32>
    %cst_65 = arith.constant dense<0.000000e+00> : vector<8x16xf32>
    %67 = tpu.matmul %66, %64, %cst_65 {dimension_numbers = #tpu.dot_dimension_numbers<[1], [0], [0], [1], [0, 0, 1, 1], [], []>} : vector<8x4xf32>, vector<4x16xf32>, vector<8x16xf32> -> vector<8x16xf32>
    %cst_66 = arith.constant dense<0.000000e+00> : vector<8x256xf32>
    %68 = tpu.matmul %67, %6, %cst_66 {dimension_numbers = #tpu.dot_dimension_numbers<[1], [0], [0], [1], [0, 0, 1, 1], [], []>} : vector<8x16xf32>, vector<16x256xf32>, vector<8x256xf32> -> vector<8x256xf32>
    %69 = arith.addf %25, %68 : vector<8x256xf32>
    %cst_67 = arith.constant dense<0.000000e+00> : vector<4x4xf32>
    %70 = tpu.matmul %1, %4, %cst_67 {dimension_numbers = #tpu.dot_dimension_numbers<[1], [0], [0], [1], [0, 0, 1, 1], [], []>} : vector<4x256xf32>, vector<256x4xf32>, vector<4x4xf32> -> vector<4x4xf32>
    %c3 = arith.constant 3 : index
    %c0_68 = arith.constant 0 : index
    %c0_69 = arith.constant 0 : index
    %71 = vector.load %arg2[%c3, %c0_68, %c0_69] : memref<6x4x1xf32, #tpu.memory_space<vmem>>, vector<1x4x1xf32>
    %72 = vector.shape_cast %71 : vector<1x4x1xf32> to vector<4x1xf32>
    %c3_70 = arith.constant 3 : index
    %c0_71 = arith.constant 0 : index
    %c0_72 = arith.constant 0 : index
    %73 = vector.load %arg3[%c3_70, %c0_71, %c0_72] : memref<6x4x1xf32, #tpu.memory_space<vmem>>, vector<1x4x1xf32>
    %74 = vector.shape_cast %73 : vector<1x4x1xf32> to vector<4x1xf32>
    %75 = vector.broadcast %72 : vector<4x1xf32> to vector<4x4xf32>
    %76 = arith.mulf %70, %75 : vector<4x4xf32>
    %77 = vector.broadcast %74 : vector<4x1xf32> to vector<4x4xf32>
    %78 = arith.addf %76, %77 : vector<4x4xf32>
    %cst_73 = arith.constant 0.000000e+00 : f32
    %79 = vector.broadcast %cst_73 : f32 to vector<4x4xf32>
    %80 = arith.maximumf %78, %79 : vector<4x4xf32>
    %c3_74 = arith.constant 3 : index
    %c0_75 = arith.constant 0 : index
    %c0_76 = arith.constant 0 : index
    %81 = vector.load %arg4[%c3_74, %c0_75, %c0_76] : memref<5x8x4xf32, #tpu.memory_space<vmem>>, vector<1x8x4xf32>
    %82 = vector.shape_cast %81 : vector<1x8x4xf32> to vector<8x4xf32>
    %cst_77 = arith.constant dense<0.000000e+00> : vector<8x4xf32>
    %83 = tpu.matmul %82, %80, %cst_77 {dimension_numbers = #tpu.dot_dimension_numbers<[1], [0], [0], [1], [0, 0, 1, 1], [], []>} : vector<8x4xf32>, vector<4x4xf32>, vector<8x4xf32> -> vector<8x4xf32>
    %cst_78 = arith.constant dense<0.000000e+00> : vector<8x256xf32>
    %84 = tpu.matmul %83, %7, %cst_78 {dimension_numbers = #tpu.dot_dimension_numbers<[1], [0], [0], [1], [0, 0, 1, 1], [], []>} : vector<8x4xf32>, vector<4x256xf32>, vector<8x256xf32> -> vector<8x256xf32>
    %85 = arith.addf %25, %84 : vector<8x256xf32>
    %cst_79 = arith.constant dense<0.000000e+00> : vector<4xf32>
    %86 = vector.multi_reduction <add>, %1, %cst_79 [1] : vector<4x256xf32> to vector<4xf32>
    %87 = vector.shape_cast %86 : vector<4xf32> to vector<4x1xf32>
    %cst_80 = arith.constant 2.560000e+02 : f32
    %88 = vector.broadcast %cst_80 : f32 to vector<4x1xf32>
    %89 = arith.divf %87, %88 : vector<4x1xf32>
    %c4 = arith.constant 4 : index
    %c0_81 = arith.constant 0 : index
    %c0_82 = arith.constant 0 : index
    %90 = vector.load %arg2[%c4, %c0_81, %c0_82] : memref<6x4x1xf32, #tpu.memory_space<vmem>>, vector<1x4x1xf32>
    %91 = vector.shape_cast %90 : vector<1x4x1xf32> to vector<4x1xf32>
    %c4_83 = arith.constant 4 : index
    %c0_84 = arith.constant 0 : index
    %c0_85 = arith.constant 0 : index
    %92 = vector.load %arg3[%c4_83, %c0_84, %c0_85] : memref<6x4x1xf32, #tpu.memory_space<vmem>>, vector<1x4x1xf32>
    %93 = vector.shape_cast %92 : vector<1x4x1xf32> to vector<4x1xf32>
    %94 = arith.mulf %89, %91 : vector<4x1xf32>
    %95 = arith.addf %94, %93 : vector<4x1xf32>
    %cst_86 = arith.constant 0.000000e+00 : f32
    %96 = vector.broadcast %cst_86 : f32 to vector<4x1xf32>
    %97 = arith.maximumf %95, %96 : vector<4x1xf32>
    %98 = vector.shape_cast %97 : vector<4x1xf32> to vector<4x1xf32>
    %99 = vector.broadcast %98 : vector<4x1xf32> to vector<4x256xf32>
    %c4_87 = arith.constant 4 : index
    %c0_88 = arith.constant 0 : index
    %c0_89 = arith.constant 0 : index
    %100 = vector.load %arg4[%c4_87, %c0_88, %c0_89] : memref<5x8x4xf32, #tpu.memory_space<vmem>>, vector<1x8x4xf32>
    %101 = vector.shape_cast %100 : vector<1x8x4xf32> to vector<8x4xf32>
    %cst_90 = arith.constant dense<0.000000e+00> : vector<8x256xf32>
    %102 = tpu.matmul %101, %99, %cst_90 {dimension_numbers = #tpu.dot_dimension_numbers<[1], [0], [0], [1], [0, 0, 1, 1], [], []>} : vector<8x4xf32>, vector<4x256xf32>, vector<8x256xf32> -> vector<8x256xf32>
    %103 = arith.addf %25, %102 : vector<8x256xf32>
    %104 = tpu.concatenate %53, %69, %85, %103 in 0 : vector<8x256xf32>, vector<8x256xf32>, vector<8x256xf32>, vector<8x256xf32> -> vector<32x256xf32>
    %105 = vector.broadcast %8 : vector<32x1xf32> to vector<32x256xf32>
    %106 = arith.mulf %104, %105 : vector<32x256xf32>
    %107 = vector.broadcast %9 : vector<32x1xf32> to vector<32x256xf32>
    %108 = arith.addf %106, %107 : vector<32x256xf32>
    %cst_91 = arith.constant 0.000000e+00 : f32
    %109 = vector.broadcast %cst_91 : f32 to vector<32x256xf32>
    %110 = arith.maximumf %108, %109 : vector<32x256xf32>
    %111 = tpu.iota {dimensions = array<i32: 1>} : vector<1x256xi32>
    %c16_i32 = arith.constant 16 : i32
    %c0_i32 = arith.constant 0 : i32
    %112 = arith.cmpi eq, %c16_i32, %c0_i32 : i32
    %c1_i32 = arith.constant 1 : i32
    %113 = arith.select %112, %c1_i32, %c16_i32 : i32
    %114 = vector.broadcast %113 : i32 to vector<1x256xi32>
    %115 = arith.remsi %111, %114 : vector<1x256xi32>
    %c0_i32_92 = arith.constant 0 : i32
    %116 = vector.broadcast %c0_i32_92 : i32 to vector<1x256xi32>
    %117 = arith.cmpi ne, %115, %116 : vector<1x256xi32>
    %c0_i32_93 = arith.constant 0 : i32
    %118 = vector.broadcast %c0_i32_93 : i32 to vector<1x256xi32>
    %119 = arith.cmpi slt, %115, %118 : vector<1x256xi32>
    %c0_i32_94 = arith.constant 0 : i32
    %120 = arith.cmpi slt, %113, %c0_i32_94 : i32
    %121 = vector.broadcast %120 : i1 to vector<1x256xi1>
    %122 = vector.broadcast %121 : vector<1x256xi1> to vector<1x256xi1>
    %123 = arith.xori %119, %122 : vector<1x256xi1>
    %124 = arith.andi %123, %117 : vector<1x256xi1>
    %125 = vector.broadcast %113 : i32 to vector<1x256xi32>
    %126 = arith.addi %115, %125 : vector<1x256xi32>
    %127 = arith.select %124, %126, %115 : vector<1x256xi1>, vector<1x256xi32>
    %c0_i32_95 = arith.constant 0 : i32
    %128 = vector.broadcast %c0_i32_95 : i32 to vector<1x256xi32>
    %129 = arith.cmpi ne, %127, %128 : vector<1x256xi32>
    %cst_96 = arith.constant 1.000000e+00 : f32
    %cst_97 = arith.constant 0.000000e+00 : f32
    %130 = vector.broadcast %cst_96 : f32 to vector<1x256xf32>
    %131 = vector.broadcast %cst_97 : f32 to vector<1x256xf32>
    %132 = arith.select %129, %130, %131 : vector<1x256xi1>, vector<1x256xf32>
    %c15_i32 = arith.constant 15 : i32
    %133 = vector.broadcast %c15_i32 : i32 to vector<1x256xi32>
    %134 = arith.cmpi ne, %127, %133 : vector<1x256xi32>
    %cst_98 = arith.constant 1.000000e+00 : f32
    %cst_99 = arith.constant 0.000000e+00 : f32
    %135 = vector.broadcast %cst_98 : f32 to vector<1x256xf32>
    %136 = vector.broadcast %cst_99 : f32 to vector<1x256xf32>
    %137 = arith.select %134, %135, %136 : vector<1x256xi1>, vector<1x256xf32>
    %cst_100 = arith.constant 0.000000e+00 : f32
    %138 = vector.broadcast %cst_100 : f32 to vector<32x17xf32>
    %139 = tpu.concatenate %138, %110, %138 in 1 : vector<32x17xf32>, vector<32x256xf32>, vector<32x17xf32> -> vector<32x290xf32>
    %140 = vector.extract_strided_slice %139 {offsets = [0, 0], sizes = [32, 256], strides = [1, 1]} : vector<32x290xf32> to vector<32x256xf32>
    %141 = vector.broadcast %132 : vector<1x256xf32> to vector<32x256xf32>
    %142 = arith.mulf %140, %141 : vector<32x256xf32>
    %143 = vector.extract_strided_slice %139 {offsets = [0, 1], sizes = [32, 256], strides = [1, 1]} : vector<32x290xf32> to vector<32x256xf32>
    %144 = vector.extract_strided_slice %139 {offsets = [0, 2], sizes = [32, 256], strides = [1, 1]} : vector<32x290xf32> to vector<32x256xf32>
    %145 = vector.broadcast %137 : vector<1x256xf32> to vector<32x256xf32>
    %146 = arith.mulf %144, %145 : vector<32x256xf32>
    %147 = vector.extract_strided_slice %139 {offsets = [0, 16], sizes = [32, 256], strides = [1, 1]} : vector<32x290xf32> to vector<32x256xf32>
    %148 = vector.broadcast %132 : vector<1x256xf32> to vector<32x256xf32>
    %149 = arith.mulf %147, %148 : vector<32x256xf32>
    %150 = vector.extract_strided_slice %139 {offsets = [0, 17], sizes = [32, 256], strides = [1, 1]} : vector<32x290xf32> to vector<32x256xf32>
    %151 = vector.extract_strided_slice %139 {offsets = [0, 18], sizes = [32, 256], strides = [1, 1]} : vector<32x290xf32> to vector<32x256xf32>
    %152 = vector.broadcast %137 : vector<1x256xf32> to vector<32x256xf32>
    %153 = arith.mulf %151, %152 : vector<32x256xf32>
    %154 = vector.extract_strided_slice %139 {offsets = [0, 32], sizes = [32, 256], strides = [1, 1]} : vector<32x290xf32> to vector<32x256xf32>
    %155 = vector.broadcast %132 : vector<1x256xf32> to vector<32x256xf32>
    %156 = arith.mulf %154, %155 : vector<32x256xf32>
    %157 = vector.extract_strided_slice %139 {offsets = [0, 33], sizes = [32, 256], strides = [1, 1]} : vector<32x290xf32> to vector<32x256xf32>
    %158 = vector.extract_strided_slice %139 {offsets = [0, 34], sizes = [32, 256], strides = [1, 1]} : vector<32x290xf32> to vector<32x256xf32>
    %159 = vector.broadcast %137 : vector<1x256xf32> to vector<32x256xf32>
    %160 = arith.mulf %158, %159 : vector<32x256xf32>
    %161 = vector.extract_strided_slice %142 {offsets = [0, 0], sizes = [8, 256], strides = [1, 1]} : vector<32x256xf32> to vector<8x256xf32>
    %162 = vector.extract_strided_slice %143 {offsets = [0, 0], sizes = [8, 256], strides = [1, 1]} : vector<32x256xf32> to vector<8x256xf32>
    %163 = vector.extract_strided_slice %146 {offsets = [0, 0], sizes = [8, 256], strides = [1, 1]} : vector<32x256xf32> to vector<8x256xf32>
    %164 = vector.extract_strided_slice %149 {offsets = [0, 0], sizes = [8, 256], strides = [1, 1]} : vector<32x256xf32> to vector<8x256xf32>
    %165 = vector.extract_strided_slice %150 {offsets = [0, 0], sizes = [8, 256], strides = [1, 1]} : vector<32x256xf32> to vector<8x256xf32>
    %166 = vector.extract_strided_slice %153 {offsets = [0, 0], sizes = [8, 256], strides = [1, 1]} : vector<32x256xf32> to vector<8x256xf32>
    %167 = vector.extract_strided_slice %156 {offsets = [0, 0], sizes = [8, 256], strides = [1, 1]} : vector<32x256xf32> to vector<8x256xf32>
    %168 = vector.extract_strided_slice %157 {offsets = [0, 0], sizes = [8, 256], strides = [1, 1]} : vector<32x256xf32> to vector<8x256xf32>
    %169 = vector.extract_strided_slice %160 {offsets = [0, 0], sizes = [8, 256], strides = [1, 1]} : vector<32x256xf32> to vector<8x256xf32>
    %170 = tpu.concatenate %161, %162, %163, %164, %165, %166, %167, %168, %169 in 0 : vector<8x256xf32>, vector<8x256xf32>, vector<8x256xf32>, vector<8x256xf32>, vector<8x256xf32>, vector<8x256xf32>, vector<8x256xf32>, vector<8x256xf32>, vector<8x256xf32> -> vector<72x256xf32>
    %c0_101 = arith.constant 0 : index
    %c0_102 = arith.constant 0 : index
    %c0_103 = arith.constant 0 : index
    %171 = vector.load %arg14[%c0_101, %c0_102, %c0_103] : memref<4x8x72xf32, #tpu.memory_space<vmem>>, vector<1x8x72xf32>
    %172 = vector.shape_cast %171 : vector<1x8x72xf32> to vector<8x72xf32>
    %cst_104 = arith.constant dense<0.000000e+00> : vector<8x256xf32>
    %173 = tpu.matmul %172, %170, %cst_104 {dimension_numbers = #tpu.dot_dimension_numbers<[1], [0], [0], [1], [0, 0, 1, 1], [], []>} : vector<8x72xf32>, vector<72x256xf32>, vector<8x256xf32> -> vector<8x256xf32>
    %174 = vector.extract_strided_slice %142 {offsets = [8, 0], sizes = [8, 256], strides = [1, 1]} : vector<32x256xf32> to vector<8x256xf32>
    %175 = vector.extract_strided_slice %143 {offsets = [8, 0], sizes = [8, 256], strides = [1, 1]} : vector<32x256xf32> to vector<8x256xf32>
    %176 = vector.extract_strided_slice %146 {offsets = [8, 0], sizes = [8, 256], strides = [1, 1]} : vector<32x256xf32> to vector<8x256xf32>
    %177 = vector.extract_strided_slice %149 {offsets = [8, 0], sizes = [8, 256], strides = [1, 1]} : vector<32x256xf32> to vector<8x256xf32>
    %178 = vector.extract_strided_slice %150 {offsets = [8, 0], sizes = [8, 256], strides = [1, 1]} : vector<32x256xf32> to vector<8x256xf32>
    %179 = vector.extract_strided_slice %153 {offsets = [8, 0], sizes = [8, 256], strides = [1, 1]} : vector<32x256xf32> to vector<8x256xf32>
    %180 = vector.extract_strided_slice %156 {offsets = [8, 0], sizes = [8, 256], strides = [1, 1]} : vector<32x256xf32> to vector<8x256xf32>
    %181 = vector.extract_strided_slice %157 {offsets = [8, 0], sizes = [8, 256], strides = [1, 1]} : vector<32x256xf32> to vector<8x256xf32>
    %182 = vector.extract_strided_slice %160 {offsets = [8, 0], sizes = [8, 256], strides = [1, 1]} : vector<32x256xf32> to vector<8x256xf32>
    %183 = tpu.concatenate %174, %175, %176, %177, %178, %179, %180, %181, %182 in 0 : vector<8x256xf32>, vector<8x256xf32>, vector<8x256xf32>, vector<8x256xf32>, vector<8x256xf32>, vector<8x256xf32>, vector<8x256xf32>, vector<8x256xf32>, vector<8x256xf32> -> vector<72x256xf32>
    %c1_105 = arith.constant 1 : index
    %c0_106 = arith.constant 0 : index
    %c0_107 = arith.constant 0 : index
    %184 = vector.load %arg14[%c1_105, %c0_106, %c0_107] : memref<4x8x72xf32, #tpu.memory_space<vmem>>, vector<1x8x72xf32>
    %185 = vector.shape_cast %184 : vector<1x8x72xf32> to vector<8x72xf32>
    %cst_108 = arith.constant dense<0.000000e+00> : vector<8x256xf32>
    %186 = tpu.matmul %185, %183, %cst_108 {dimension_numbers = #tpu.dot_dimension_numbers<[1], [0], [0], [1], [0, 0, 1, 1], [], []>} : vector<8x72xf32>, vector<72x256xf32>, vector<8x256xf32> -> vector<8x256xf32>
    %187 = vector.extract_strided_slice %142 {offsets = [16, 0], sizes = [8, 256], strides = [1, 1]} : vector<32x256xf32> to vector<8x256xf32>
    %188 = vector.extract_strided_slice %143 {offsets = [16, 0], sizes = [8, 256], strides = [1, 1]} : vector<32x256xf32> to vector<8x256xf32>
    %189 = vector.extract_strided_slice %146 {offsets = [16, 0], sizes = [8, 256], strides = [1, 1]} : vector<32x256xf32> to vector<8x256xf32>
    %190 = vector.extract_strided_slice %149 {offsets = [16, 0], sizes = [8, 256], strides = [1, 1]} : vector<32x256xf32> to vector<8x256xf32>
    %191 = vector.extract_strided_slice %150 {offsets = [16, 0], sizes = [8, 256], strides = [1, 1]} : vector<32x256xf32> to vector<8x256xf32>
    %192 = vector.extract_strided_slice %153 {offsets = [16, 0], sizes = [8, 256], strides = [1, 1]} : vector<32x256xf32> to vector<8x256xf32>
    %193 = vector.extract_strided_slice %156 {offsets = [16, 0], sizes = [8, 256], strides = [1, 1]} : vector<32x256xf32> to vector<8x256xf32>
    %194 = vector.extract_strided_slice %157 {offsets = [16, 0], sizes = [8, 256], strides = [1, 1]} : vector<32x256xf32> to vector<8x256xf32>
    %195 = vector.extract_strided_slice %160 {offsets = [16, 0], sizes = [8, 256], strides = [1, 1]} : vector<32x256xf32> to vector<8x256xf32>
    %196 = tpu.concatenate %187, %188, %189, %190, %191, %192, %193, %194, %195 in 0 : vector<8x256xf32>, vector<8x256xf32>, vector<8x256xf32>, vector<8x256xf32>, vector<8x256xf32>, vector<8x256xf32>, vector<8x256xf32>, vector<8x256xf32>, vector<8x256xf32> -> vector<72x256xf32>
    %c2_109 = arith.constant 2 : index
    %c0_110 = arith.constant 0 : index
    %c0_111 = arith.constant 0 : index
    %197 = vector.load %arg14[%c2_109, %c0_110, %c0_111] : memref<4x8x72xf32, #tpu.memory_space<vmem>>, vector<1x8x72xf32>
    %198 = vector.shape_cast %197 : vector<1x8x72xf32> to vector<8x72xf32>
    %cst_112 = arith.constant dense<0.000000e+00> : vector<8x256xf32>
    %199 = tpu.matmul %198, %196, %cst_112 {dimension_numbers = #tpu.dot_dimension_numbers<[1], [0], [0], [1], [0, 0, 1, 1], [], []>} : vector<8x72xf32>, vector<72x256xf32>, vector<8x256xf32> -> vector<8x256xf32>
    %200 = vector.extract_strided_slice %142 {offsets = [24, 0], sizes = [8, 256], strides = [1, 1]} : vector<32x256xf32> to vector<8x256xf32>
    %201 = vector.extract_strided_slice %143 {offsets = [24, 0], sizes = [8, 256], strides = [1, 1]} : vector<32x256xf32> to vector<8x256xf32>
    %202 = vector.extract_strided_slice %146 {offsets = [24, 0], sizes = [8, 256], strides = [1, 1]} : vector<32x256xf32> to vector<8x256xf32>
    %203 = vector.extract_strided_slice %149 {offsets = [24, 0], sizes = [8, 256], strides = [1, 1]} : vector<32x256xf32> to vector<8x256xf32>
    %204 = vector.extract_strided_slice %150 {offsets = [24, 0], sizes = [8, 256], strides = [1, 1]} : vector<32x256xf32> to vector<8x256xf32>
    %205 = vector.extract_strided_slice %153 {offsets = [24, 0], sizes = [8, 256], strides = [1, 1]} : vector<32x256xf32> to vector<8x256xf32>
    %206 = vector.extract_strided_slice %156 {offsets = [24, 0], sizes = [8, 256], strides = [1, 1]} : vector<32x256xf32> to vector<8x256xf32>
    %207 = vector.extract_strided_slice %157 {offsets = [24, 0], sizes = [8, 256], strides = [1, 1]} : vector<32x256xf32> to vector<8x256xf32>
    %208 = vector.extract_strided_slice %160 {offsets = [24, 0], sizes = [8, 256], strides = [1, 1]} : vector<32x256xf32> to vector<8x256xf32>
    %209 = tpu.concatenate %200, %201, %202, %203, %204, %205, %206, %207, %208 in 0 : vector<8x256xf32>, vector<8x256xf32>, vector<8x256xf32>, vector<8x256xf32>, vector<8x256xf32>, vector<8x256xf32>, vector<8x256xf32>, vector<8x256xf32>, vector<8x256xf32> -> vector<72x256xf32>
    %c3_113 = arith.constant 3 : index
    %c0_114 = arith.constant 0 : index
    %c0_115 = arith.constant 0 : index
    %210 = vector.load %arg14[%c3_113, %c0_114, %c0_115] : memref<4x8x72xf32, #tpu.memory_space<vmem>>, vector<1x8x72xf32>
    %211 = vector.shape_cast %210 : vector<1x8x72xf32> to vector<8x72xf32>
    %cst_116 = arith.constant dense<0.000000e+00> : vector<8x256xf32>
    %212 = tpu.matmul %211, %209, %cst_116 {dimension_numbers = #tpu.dot_dimension_numbers<[1], [0], [0], [1], [0, 0, 1, 1], [], []>} : vector<8x72xf32>, vector<72x256xf32>, vector<8x256xf32> -> vector<8x256xf32>
    %213 = tpu.concatenate %25, %173, %186, %199, %212 in 0 : vector<8x256xf32>, vector<8x256xf32>, vector<8x256xf32>, vector<8x256xf32>, vector<8x256xf32> -> vector<40x256xf32>
    %214 = vector.broadcast %10 : vector<40x1xf32> to vector<40x256xf32>
    %215 = arith.mulf %213, %214 : vector<40x256xf32>
    %216 = vector.broadcast %11 : vector<40x1xf32> to vector<40x256xf32>
    %217 = arith.addf %215, %216 : vector<40x256xf32>
    %cst_117 = arith.constant 0.000000e+00 : f32
    %218 = vector.broadcast %cst_117 : f32 to vector<40x256xf32>
    %219 = arith.maximumf %217, %218 : vector<40x256xf32>
    %cst_118 = arith.constant dense<0.000000e+00> : vector<8x256xf32>
    %220 = tpu.matmul %12, %219, %cst_118 {dimension_numbers = #tpu.dot_dimension_numbers<[1], [0], [0], [1], [0, 0, 1, 1], [], []>} : vector<8x40xf32>, vector<40x256xf32>, vector<8x256xf32> -> vector<8x256xf32>
    %221 = arith.addf %37, %220 : vector<8x256xf32>
    %c0_119 = arith.constant 0 : index
    %c0_120 = arith.constant 0 : index
    %c0_121 = arith.constant 0 : index
    %222 = vector.load %arg18[%c0_119, %c0_120, %c0_121] : memref<1x8x256xf32, #tpu.memory_space<vmem>>, vector<1x8x256xf32>
    %223 = vector.shape_cast %222 : vector<1x8x256xf32> to vector<8x256xf32>
    %224 = vector.shape_cast %221 : vector<8x256xf32> to vector<1x8x256xf32>
    tpu.vector_store %arg18[%c0_119, %c0_120, %c0_121], %224 {strides = array<i32>} : memref<1x8x256xf32, #tpu.memory_space<vmem>>, vector<1x8x256xf32>,
    return
  }
  func.func @transform_0(%arg0: i32) -> (i32, i32, i32) {
    %c0_i32 = arith.constant 0 : i32
    %c0_i32_0 = arith.constant 0 : i32
    %c0_i32_1 = arith.constant 0 : i32
    return %arg0, %c0_i32, %c0_i32_0 : i32, i32, i32
  }
  func.func @transform_1(%arg0: i32) -> (i32, i32, i32) {
    %c0_i32 = arith.constant 0 : i32
    %c0_i32_0 = arith.constant 0 : i32
    %c0_i32_1 = arith.constant 0 : i32
    %c0_i32_2 = arith.constant 0 : i32
    return %c0_i32, %c0_i32_0, %c0_i32_1 : i32, i32, i32
  }
  func.func @transform_2(%arg0: i32) -> (i32, i32, i32) {
    %c0_i32 = arith.constant 0 : i32
    %c0_i32_0 = arith.constant 0 : i32
    %c0_i32_1 = arith.constant 0 : i32
    %c0_i32_2 = arith.constant 0 : i32
    return %c0_i32, %c0_i32_0, %c0_i32_1 : i32, i32, i32
  }
  func.func @transform_3(%arg0: i32) -> (i32, i32, i32) {
    %c0_i32 = arith.constant 0 : i32
    %c0_i32_0 = arith.constant 0 : i32
    %c0_i32_1 = arith.constant 0 : i32
    %c0_i32_2 = arith.constant 0 : i32
    return %c0_i32, %c0_i32_0, %c0_i32_1 : i32, i32, i32
  }
  func.func @transform_4(%arg0: i32) -> (i32, i32) {
    %c0_i32 = arith.constant 0 : i32
    %c0_i32_0 = arith.constant 0 : i32
    %c0_i32_1 = arith.constant 0 : i32
    return %c0_i32, %c0_i32_0 : i32, i32
  }
  func.func @transform_5(%arg0: i32) -> (i32, i32) {
    %c0_i32 = arith.constant 0 : i32
    %c0_i32_0 = arith.constant 0 : i32
    %c0_i32_1 = arith.constant 0 : i32
    return %c0_i32, %c0_i32_0 : i32, i32
  }
  func.func @transform_6(%arg0: i32) -> (i32, i32) {
    %c0_i32 = arith.constant 0 : i32
    %c0_i32_0 = arith.constant 0 : i32
    %c0_i32_1 = arith.constant 0 : i32
    return %c0_i32, %c0_i32_0 : i32, i32
  }
  func.func @transform_7(%arg0: i32) -> (i32, i32) {
    %c0_i32 = arith.constant 0 : i32
    %c0_i32_0 = arith.constant 0 : i32
    %c0_i32_1 = arith.constant 0 : i32
    return %c0_i32, %c0_i32_0 : i32, i32
  }
  func.func @transform_8(%arg0: i32) -> (i32, i32) {
    %c0_i32 = arith.constant 0 : i32
    %c0_i32_0 = arith.constant 0 : i32
    %c0_i32_1 = arith.constant 0 : i32
    return %c0_i32, %c0_i32_0 : i32, i32
  }
  func.func @transform_9(%arg0: i32) -> (i32, i32) {
    %c0_i32 = arith.constant 0 : i32
    %c0_i32_0 = arith.constant 0 : i32
    %c0_i32_1 = arith.constant 0 : i32
    return %c0_i32, %c0_i32_0 : i32, i32
  }
  func.func @transform_10(%arg0: i32) -> (i32, i32) {
    %c0_i32 = arith.constant 0 : i32
    %c0_i32_0 = arith.constant 0 : i32
    %c0_i32_1 = arith.constant 0 : i32
    return %c0_i32, %c0_i32_0 : i32, i32
  }
  func.func @transform_11(%arg0: i32) -> (i32, i32) {
    %c0_i32 = arith.constant 0 : i32
    %c0_i32_0 = arith.constant 0 : i32
    %c0_i32_1 = arith.constant 0 : i32
    return %c0_i32, %c0_i32_0 : i32, i32
  }
  func.func @transform_12(%arg0: i32) -> (i32, i32) {
    %c0_i32 = arith.constant 0 : i32
    %c0_i32_0 = arith.constant 0 : i32
    %c0_i32_1 = arith.constant 0 : i32
    return %c0_i32, %c0_i32_0 : i32, i32
  }
  func.func @transform_13(%arg0: i32) -> (i32, i32, i32) {
    %c0_i32 = arith.constant 0 : i32
    %c0_i32_0 = arith.constant 0 : i32
    %c0_i32_1 = arith.constant 0 : i32
    %c0_i32_2 = arith.constant 0 : i32
    return %c0_i32, %c0_i32_0, %c0_i32_1 : i32, i32, i32
  }
  func.func @transform_14(%arg0: i32) -> (i32, i32) {
    %c0_i32 = arith.constant 0 : i32
    %c0_i32_0 = arith.constant 0 : i32
    %c0_i32_1 = arith.constant 0 : i32
    return %c0_i32, %c0_i32_0 : i32, i32
  }
  func.func @transform_15(%arg0: i32) -> (i32, i32) {
    %c0_i32 = arith.constant 0 : i32
    %c0_i32_0 = arith.constant 0 : i32
    %c0_i32_1 = arith.constant 0 : i32
    return %c0_i32, %c0_i32_0 : i32, i32
  }
  func.func @transform_16(%arg0: i32) -> (i32, i32) {
    %c0_i32 = arith.constant 0 : i32
    %c0_i32_0 = arith.constant 0 : i32
    %c0_i32_1 = arith.constant 0 : i32
    return %c0_i32, %c0_i32_0 : i32, i32
  }
  func.func @transform_17(%arg0: i32) -> (i32, i32, i32) {
    %c0_i32 = arith.constant 0 : i32
    %c0_i32_0 = arith.constant 0 : i32
    %c0_i32_1 = arith.constant 0 : i32
    return %arg0, %c0_i32, %c0_i32_0 : i32, i32, i32
  }
}

</mosaic_0001>

<llo_original>
// kernel: tpu_custom_call.1
$region0: #{tpu_custom_call.1}
  #allocation0 [shape = 'u32[]', space=smem, size = 0x4, offset = 0x4, fixed_abs, tag = 'smem constant byte address 0x4 - core index']
  #allocation1 [shape = 'u32[144,128]{1,0:T(1,128)}', space=vmem, size = 0x12000, scoped, tag = 'internal scratch']
  %s0 = inlined_call_operand.vmem [shape: f32[2,4,256], index: 0, kind: input, shape index: {}]
  %s1 = inlined_call_operand.vmem [shape: f32[6,4,1], index: 1, kind: input, shape index: {}]
  %s2 = inlined_call_operand.vmem [shape: f32[6,4,1], index: 2, kind: input, shape index: {}]
  %s3 = inlined_call_operand.vmem [shape: f32[5,8,4], index: 3, kind: input, shape index: {}]
  %s4 = inlined_call_operand.vmem [shape: f32[8,4], index: 4, kind: input, shape index: {}]
  %s5 = inlined_call_operand.vmem [shape: f32[256,64], index: 5, kind: input, shape index: {}]
  %s6 = inlined_call_operand.vmem [shape: f32[64,256], index: 6, kind: input, shape index: {}]
  %s7 = inlined_call_operand.vmem [shape: f32[256,16], index: 7, kind: input, shape index: {}]
  %s8 = inlined_call_operand.vmem [shape: f32[16,256], index: 8, kind: input, shape index: {}]
  %s9 = inlined_call_operand.vmem [shape: f32[256,4], index: 9, kind: input, shape index: {}]
  %s10 = inlined_call_operand.vmem [shape: f32[4,256], index: 10, kind: input, shape index: {}]
  %s11 = inlined_call_operand.vmem [shape: f32[32,1], index: 11, kind: input, shape index: {}]
  %s12 = inlined_call_operand.vmem [shape: f32[32,1], index: 12, kind: input, shape index: {}]
  %s13 = inlined_call_operand.vmem [shape: f32[4,8,72], index: 13, kind: input, shape index: {}]
  %s14 = inlined_call_operand.vmem [shape: f32[40,1], index: 14, kind: input, shape index: {}]
  %s15 = inlined_call_operand.vmem [shape: f32[40,1], index: 15, kind: input, shape index: {}]
  %s16 = inlined_call_operand.vmem [shape: f32[8,40], index: 16, kind: input, shape index: {}]
  %s17 = inlined_call_operand.hbm [shape: f32[2,8,256], index: 17, kind: output, shape index: {}]
  %s18 = sld [smem:[#allocation0]]
  $region101: #{tpu_custom_call.1} parent=0
    _
  %s20 = ssub.s32 1, %s18
  %s21 = scalar_select 0, %s20, %s18
  $region1: #{tpu_custom_call.1} parent=0
    #allocation2 [shape = 'u8[16384]{0}', space=vmem, size = 0x4000, scoped, tag = 'output window, operand 0']
    #allocation3 [shape = 's32[2]{0}', space=sflag, size = 0x8, scoped, tag = 'scoped memory for tpu_custom_call.1']
    %22 = vsyncpa [#allocation3], 0
    %s23 = scalar_lea.sflag [#allocation3], 1
    %24 = vsyncpa %s23, 0
    loop: start=0, step=1, limit=4
    $region2: #{tpu_custom_call.1} parent=1 // loop_pre_header
      _
    $region3: #{tpu_custom_call.1} parent=1 // loop_header
      %s26 = sphi 0, %s30
      %p27 = scmp.ge.s32.totalorder %s26, 4
      %s36 = sphi 0, %s38
      %s39 = sphi 0, %s36
      %s40 = sphi 0, %s39
      %s56 = sphi 0, %s40
      %s60 = sphi 0, %s60
      %s62 = sphi 0, %s60
      %s63 = sphi 0, %s62
      %s77 = sphi 0, %s63
      %s81 = sphi 0, %s81
      %s83 = sphi 0, %s81
      %s84 = sphi 0, %s83
      %s98 = sphi 0, %s84
      %s102 = sphi 0, %s102
      %s104 = sphi 0, %s102
      %s105 = sphi 0, %s104
      %s119 = sphi 0, %s105
      %s123 = sphi 0, %s123
      %s125 = sphi 0, %s123
      %s126 = sphi 0, %s125
      %s140 = sphi 0, %s126
      %s144 = sphi 0, %s144
      %s146 = sphi 0, %s144
      %s147 = sphi 0, %s146
      %s161 = sphi 0, %s147
      %s165 = sphi 0, %s165
      %s167 = sphi 0, %s165
      %s168 = sphi 0, %s167
      %s182 = sphi 0, %s168
      %s186 = sphi 0, %s186
      %s188 = sphi 0, %s186
      %s189 = sphi 0, %s188
      %s203 = sphi 0, %s189
      %s207 = sphi 0, %s207
      %s209 = sphi 0, %s207
      %s210 = sphi 0, %s209
      %s224 = sphi 0, %s210
      %s228 = sphi 0, %s228
      %s230 = sphi 0, %s228
      %s231 = sphi 0, %s230
      %s245 = sphi 0, %s231
      %s249 = sphi 0, %s249
      %s251 = sphi 0, %s249
      %s252 = sphi 0, %s251
      %s266 = sphi 0, %s252
      %s270 = sphi 0, %s270
      %s272 = sphi 0, %s270
      %s273 = sphi 0, %s272
      %s287 = sphi 0, %s273
      %s291 = sphi 0, %s291
      %s293 = sphi 0, %s291
      %s294 = sphi 0, %s293
      %s308 = sphi 0, %s294
      %s312 = sphi 0, %s312
      %s314 = sphi 0, %s312
      %s315 = sphi 0, %s314
      %s329 = sphi 0, %s315
      %s333 = sphi 0, %s333
      %s335 = sphi 0, %s333
      %s336 = sphi 0, %s335
      %s350 = sphi 0, %s336
      %s354 = sphi 0, %s354
      %s356 = sphi 0, %s354
      %s357 = sphi 0, %s356
      %s371 = sphi 0, %s357
      %s375 = sphi 0, %s375
      %s377 = sphi 0, %s375
      %s378 = sphi 0, %s377
      %s392 = sphi 0, %s378
      %s398 = sphi 0, %s400
      %s401 = sphi 0, %s398
      %s402 = sphi 0, %s401
      %s418 = sphi 0, %s402
    $region4: #{tpu_custom_call.1} parent=1 // loop_header_branch
      %29 = sbr.rel (%p27) target = $region8
    $region5: #{tpu_custom_call.1} parent=1 // loop_body
      %s31 = ssub.s32 %s26, 1
      %s32 = ssub.s32 %s26, 2
      %s33 = sadd.s32 %s26, 1
      %s34 = ssub.s32 %s26, %s33
      %p35 = scmp.eq.s32.totalorder %s34, 0
      %s37 = sadd.s32 %s36, 1
      %s38 = scalar_select %p35, %s36, %s37
      %p41 = pneg %p35
      %p42 = scmp.eq.s32.totalorder %s26, 1
      %p43 = por %p41, %p42
      %p44 = scmp.ne.s32.totalorder %s36, %s39
      %p45 = scmp.eq.s32.totalorder %s26, 0
      %p46 = por %p44, %p45
      %p47 = scmp.ne.s32.totalorder %s36, %s39
      %p48 = scmp.eq.s32.totalorder %s31, 1
      %p49 = por %p47, %p48
      %p50 = scmp.ne.s32.totalorder %s39, %s40
      %p51 = scmp.eq.s32.totalorder %s31, 0
      %p52 = por %p50, %p51
      %p53 = scmp.ne.s32.totalorder %s39, %s40
      %p54 = scmp.eq.s32.totalorder %s32, 1
      %p55 = por %p53, %p54
      %p57 = scmp.ne.s32.totalorder %s40, %s56
      %p58 = scmp.eq.s32.totalorder %s32, 0
      %p59 = por %p57, %p58
      %s61 = sadd.s32 %s60, 1
      %p64 = scmp.eq.s32.totalorder %s26, 1
      %p65 = scmp.ne.s32.totalorder %s60, %s62
      %p66 = scmp.eq.s32.totalorder %s26, 0
      %p67 = por %p65, %p66
      %p68 = scmp.ne.s32.totalorder %s60, %s62
      %p69 = scmp.eq.s32.totalorder %s31, 1
      %p70 = por %p68, %p69
      %p71 = scmp.ne.s32.totalorder %s62, %s63
      %p72 = scmp.eq.s32.totalorder %s31, 0
      %p73 = por %p71, %p72
      %p74 = scmp.ne.s32.totalorder %s62, %s63
      %p75 = scmp.eq.s32.totalorder %s32, 1
      %p76 = por %p74, %p75
      %p78 = scmp.ne.s32.totalorder %s63, %s77
      %p79 = scmp.eq.s32.totalorder %s32, 0
      %p80 = por %p78, %p79
      %s82 = sadd.s32 %s81, 1
      %p85 = scmp.eq.s32.totalorder %s26, 1
      %p86 = scmp.ne.s32.totalorder %s81, %s83
      %p87 = scmp.eq.s32.totalorder %s26, 0
      %p88 = por %p86, %p87
      %p89 = scmp.ne.s32.totalorder %s81, %s83
      %p90 = scmp.eq.s32.totalorder %s31, 1
      %p91 = por %p89, %p90
      %p92 = scmp.ne.s32.totalorder %s83, %s84
      %p93 = scmp.eq.s32.totalorder %s31, 0
      %p94 = por %p92, %p93
      %p95 = scmp.ne.s32.totalorder %s83, %s84
      %p96 = scmp.eq.s32.totalorder %s32, 1
      %p97 = por %p95, %p96
      %p99 = scmp.ne.s32.totalorder %s84, %s98
      %p100 = scmp.eq.s32.totalorder %s32, 0
      %p101 = por %p99, %p100
      %s103 = sadd.s32 %s102, 1
      %p106 = scmp.eq.s32.totalorder %s26, 1
      %p107 = scmp.ne.s32.totalorder %s102, %s104
      %p108 = scmp.eq.s32.totalorder %s26, 0
      %p109 = por %p107, %p108
      %p110 = scmp.ne.s32.totalorder %s102, %s104
      %p111 = scmp.eq.s32.totalorder %s31, 1
      %p112 = por %p110, %p111
      %p113 = scmp.ne.s32.totalorder %s104, %s105
      %p114 = scmp.eq.s32.totalorder %s31, 0
      %p115 = por %p113, %p114
      %p116 = scmp.ne.s32.totalorder %s104, %s105
      %p117 = scmp.eq.s32.totalorder %s32, 1
      %p118 = por %p116, %p117
      %p120 = scmp.ne.s32.totalorder %s105, %s119
      %p121 = scmp.eq.s32.totalorder %s32, 0
      %p122 = por %p120, %p121
      %s124 = sadd.s32 %s123, 1
      %p127 = scmp.eq.s32.totalorder %s26, 1
      %p128 = scmp.ne.s32.totalorder %s123, %s125
      %p129 = scmp.eq.s32.totalorder %s26, 0
      %p130 = por %p128, %p129
      %p131 = scmp.ne.s32.totalorder %s123, %s125
      %p132 = scmp.eq.s32.totalorder %s31, 1
      %p133 = por %p131, %p132
      %p134 = scmp.ne.s32.totalorder %s125, %s126
      %p135 = scmp.eq.s32.totalorder %s31, 0
      %p136 = por %p134, %p135
      %p137 = scmp.ne.s32.totalorder %s125, %s126
      %p138 = scmp.eq.s32.totalorder %s32, 1
      %p139 = por %p137, %p138
      %p141 = scmp.ne.s32.totalorder %s126, %s140
      %p142 = scmp.eq.s32.totalorder %s32, 0
      %p143 = por %p141, %p142
      %s145 = sadd.s32 %s144, 1
      %p148 = scmp.eq.s32.totalorder %s26, 1
      %p149 = scmp.ne.s32.totalorder %s144, %s146
      %p150 = scmp.eq.s32.totalorder %s26, 0
      %p151 = por %p149, %p150
      %p152 = scmp.ne.s32.totalorder %s144, %s146
      %p153 = scmp.eq.s32.totalorder %s31, 1
      %p154 = por %p152, %p153
      %p155 = scmp.ne.s32.totalorder %s146, %s147
      %p156 = scmp.eq.s32.totalorder %s31, 0
      %p157 = por %p155, %p156
      %p158 = scmp.ne.s32.totalorder %s146, %s147
      %p159 = scmp.eq.s32.totalorder %s32, 1
      %p160 = por %p158, %p159
      %p162 = scmp.ne.s32.totalorder %s147, %s161
      %p163 = scmp.eq.s32.totalorder %s32, 0
      %p164 = por %p162, %p163
      %s166 = sadd.s32 %s165, 1
      %p169 = scmp.eq.s32.totalorder %s26, 1
      %p170 = scmp.ne.s32.totalorder %s165, %s167
      %p171 = scmp.eq.s32.totalorder %s26, 0
      %p172 = por %p170, %p171
      %p173 = scmp.ne.s32.totalorder %s165, %s167
      %p174 = scmp.eq.s32.totalorder %s31, 1
      %p175 = por %p173, %p174
      %p176 = scmp.ne.s32.totalorder %s167, %s168
      %p177 = scmp.eq.s32.totalorder %s31, 0
      %p178 = por %p176, %p177
      %p179 = scmp.ne.s32.totalorder %s167, %s168
      %p180 = scmp.eq.s32.totalorder %s32, 1
      %p181 = por %p179, %p180
      %p183 = scmp.ne.s32.totalorder %s168, %s182
      %p184 = scmp.eq.s32.totalorder %s32, 0
      %p185 = por %p183, %p184
      %s187 = sadd.s32 %s186, 1
      %p190 = scmp.eq.s32.totalorder %s26, 1
      %p191 = scmp.ne.s32.totalorder %s186, %s188
      %p192 = scmp.eq.s32.totalorder %s26, 0
      %p193 = por %p191, %p192
      %p194 = scmp.ne.s32.totalorder %s186, %s188
      %p195 = scmp.eq.s32.totalorder %s31, 1
      %p196 = por %p194, %p195
      %p197 = scmp.ne.s32.totalorder %s188, %s189
      %p198 = scmp.eq.s32.totalorder %s31, 0
      %p199 = por %p197, %p198
      %p200 = scmp.ne.s32.totalorder %s188, %s189
      %p201 = scmp.eq.s32.totalorder %s32, 1
      %p202 = por %p200, %p201
      %p204 = scmp.ne.s32.totalorder %s189, %s203
      %p205 = scmp.eq.s32.totalorder %s32, 0
      %p206 = por %p204, %p205
      %s208 = sadd.s32 %s207, 1
      %p211 = scmp.eq.s32.totalorder %s26, 1
      %p212 = scmp.ne.s32.totalorder %s207, %s209
      %p213 = scmp.eq.s32.totalorder %s26, 0
      %p214 = por %p212, %p213
      %p215 = scmp.ne.s32.totalorder %s207, %s209
      %p216 = scmp.eq.s32.totalorder %s31, 1
      %p217 = por %p215, %p216
      %p218 = scmp.ne.s32.totalorder %s209, %s210
      %p219 = scmp.eq.s32.totalorder %s31, 0
      %p220 = por %p218, %p219
      %p221 = scmp.ne.s32.totalorder %s209, %s210
      %p222 = scmp.eq.s32.totalorder %s32, 1
      %p223 = por %p221, %p222
      %p225 = scmp.ne.s32.totalorder %s210, %s224
      %p226 = scmp.eq.s32.totalorder %s32, 0
      %p227 = por %p225, %p226
      %s229 = sadd.s32 %s228, 1
      %p232 = scmp.eq.s32.totalorder %s26, 1
      %p233 = scmp.ne.s32.totalorder %s228, %s230
      %p234 = scmp.eq.s32.totalorder %s26, 0
      %p235 = por %p233, %p234
      %p236 = scmp.ne.s32.totalorder %s228, %s230
      %p237 = scmp.eq.s32.totalorder %s31, 1
      %p238 = por %p236, %p237
      %p239 = scmp.ne.s32.totalorder %s230, %s231
      %p240 = scmp.eq.s32.totalorder %s31, 0
      %p241 = por %p239, %p240
      %p242 = scmp.ne.s32.totalorder %s230, %s231
      %p243 = scmp.eq.s32.totalorder %s32, 1
      %p244 = por %p242, %p243
      %p246 = scmp.ne.s32.totalorder %s231, %s245
      %p247 = scmp.eq.s32.totalorder %s32, 0
      %p248 = por %p246, %p247
      %s250 = sadd.s32 %s249, 1
      %p253 = scmp.eq.s32.totalorder %s26, 1
      %p254 = scmp.ne.s32.totalorder %s249, %s251
      %p255 = scmp.eq.s32.totalorder %s26, 0
      %p256 = por %p254, %p255
      %p257 = scmp.ne.s32.totalorder %s249, %s251
      %p258 = scmp.eq.s32.totalorder %s31, 1
      %p259 = por %p257, %p258
      %p260 = scmp.ne.s32.totalorder %s251, %s252
      %p261 = scmp.eq.s32.totalorder %s31, 0
      %p262 = por %p260, %p261
      %p263 = scmp.ne.s32.totalorder %s251, %s252
      %p264 = scmp.eq.s32.totalorder %s32, 1
      %p265 = por %p263, %p264
      %p267 = scmp.ne.s32.totalorder %s252, %s266
      %p268 = scmp.eq.s32.totalorder %s32, 0
      %p269 = por %p267, %p268
      %s271 = sadd.s32 %s270, 1
      %p274 = scmp.eq.s32.totalorder %s26, 1
      %p275 = scmp.ne.s32.totalorder %s270, %s272
      %p276 = scmp.eq.s32.totalorder %s26, 0
      %p277 = por %p275, %p276
      %p278 = scmp.ne.s32.totalorder %s270, %s272
      %p279 = scmp.eq.s32.totalorder %s31, 1
      %p280 = por %p278, %p279
      %p281 = scmp.ne.s32.totalorder %s272, %s273
      %p282 = scmp.eq.s32.totalorder %s31, 0
      %p283 = por %p281, %p282
      %p284 = scmp.ne.s32.totalorder %s272, %s273
      %p285 = scmp.eq.s32.totalorder %s32, 1
      %p286 = por %p284, %p285
      %p288 = scmp.ne.s32.totalorder %s273, %s287
      %p289 = scmp.eq.s32.totalorder %s32, 0
      %p290 = por %p288, %p289
      %s292 = sadd.s32 %s291, 1
      %p295 = scmp.eq.s32.totalorder %s26, 1
      %p296 = scmp.ne.s32.totalorder %s291, %s293
      %p297 = scmp.eq.s32.totalorder %s26, 0
      %p298 = por %p296, %p297
      %p299 = scmp.ne.s32.totalorder %s291, %s293
      %p300 = scmp.eq.s32.totalorder %s31, 1
      %p301 = por %p299, %p300
      %p302 = scmp.ne.s32.totalorder %s293, %s294
      %p303 = scmp.eq.s32.totalorder %s31, 0
      %p304 = por %p302, %p303
      %p305 = scmp.ne.s32.totalorder %s293, %s294
      %p306 = scmp.eq.s32.totalorder %s32, 1
      %p307 = por %p305, %p306
      %p309 = scmp.ne.s32.totalorder %s294, %s308
      %p310 = scmp.eq.s32.totalorder %s32, 0
      %p311 = por %p309, %p310
      %s313 = sadd.s32 %s312, 1
      %p316 = scmp.eq.s32.totalorder %s26, 1
      %p317 = scmp.ne.s32.totalorder %s312, %s314
      %p318 = scmp.eq.s32.totalorder %s26, 0
      %p319 = por %p317, %p318
      %p320 = scmp.ne.s32.totalorder %s312, %s314
      %p321 = scmp.eq.s32.totalorder %s31, 1
      %p322 = por %p320, %p321
      %p323 = scmp.ne.s32.totalorder %s314, %s315
      %p324 = scmp.eq.s32.totalorder %s31, 0
      %p325 = por %p323, %p324
      %p326 = scmp.ne.s32.totalorder %s314, %s315
      %p327 = scmp.eq.s32.totalorder %s32, 1
      %p328 = por %p326, %p327
      %p330 = scmp.ne.s32.totalorder %s315, %s329
      %p331 = scmp.eq.s32.totalorder %s32, 0
      %p332 = por %p330, %p331
      %s334 = sadd.s32 %s333, 1
      %p337 = scmp.eq.s32.totalorder %s26, 1
      %p338 = scmp.ne.s32.totalorder %s333, %s335
      %p339 = scmp.eq.s32.totalorder %s26, 0
      %p340 = por %p338, %p339
      %p341 = scmp.ne.s32.totalorder %s333, %s335
      %p342 = scmp.eq.s32.totalorder %s31, 1
      %p343 = por %p341, %p342
      %p344 = scmp.ne.s32.totalorder %s335, %s336
      %p345 = scmp.eq.s32.totalorder %s31, 0
      %p346 = por %p344, %p345
      %p347 = scmp.ne.s32.totalorder %s335, %s336
      %p348 = scmp.eq.s32.totalorder %s32, 1
      %p349 = por %p347, %p348
      %p351 = scmp.ne.s32.totalorder %s336, %s350
      %p352 = scmp.eq.s32.totalorder %s32, 0
      %p353 = por %p351, %p352
      %s355 = sadd.s32 %s354, 1
      %p358 = scmp.eq.s32.totalorder %s26, 1
      %p359 = scmp.ne.s32.totalorder %s354, %s356
      %p360 = scmp.eq.s32.totalorder %s26, 0
      %p361 = por %p359, %p360
      %p362 = scmp.ne.s32.totalorder %s354, %s356
      %p363 = scmp.eq.s32.totalorder %s31, 1
      %p364 = por %p362, %p363
      %p365 = scmp.ne.s32.totalorder %s356, %s357
      %p366 = scmp.eq.s32.totalorder %s31, 0
      %p367 = por %p365, %p366
      %p368 = scmp.ne.s32.totalorder %s356, %s357
      %p369 = scmp.eq.s32.totalorder %s32, 1
      %p370 = por %p368, %p369
      %p372 = scmp.ne.s32.totalorder %s357, %s371
      %p373 = scmp.eq.s32.totalorder %s32, 0
      %p374 = por %p372, %p373
      %s376 = sadd.s32 %s375, 1
      %p379 = scmp.eq.s32.totalorder %s26, 1
      %p380 = scmp.ne.s32.totalorder %s375, %s377
      %p381 = scmp.eq.s32.totalorder %s26, 0
      %p382 = por %p380, %p381
      %p383 = scmp.ne.s32.totalorder %s375, %s377
      %p384 = scmp.eq.s32.totalorder %s31, 1
      %p385 = por %p383, %p384
      %p386 = scmp.ne.s32.totalorder %s377, %s378
      %p387 = scmp.eq.s32.totalorder %s31, 0
      %p388 = por %p386, %p387
      %p389 = scmp.ne.s32.totalorder %s377, %s378
      %p390 = scmp.eq.s32.totalorder %s32, 1
      %p391 = por %p389, %p390
      %p393 = scmp.ne.s32.totalorder %s378, %s392
      %p394 = scmp.eq.s32.totalorder %s32, 0
      %p395 = por %p393, %p394
      %s396 = ssub.s32 %s26, %s33
      %p397 = scmp.eq.s32.totalorder %s396, 0
      %s399 = sadd.s32 %s398, 1
      %s400 = scalar_select %p397, %s398, %s399
      %p403 = pneg %p397
      %p404 = scmp.eq.s32.totalorder %s26, 1
      %p405 = por %p403, %p404
      %p406 = scmp.ne.s32.totalorder %s398, %s401
      %p407 = scmp.eq.s32.totalorder %s26, 0
      %p408 = por %p406, %p407
      %p409 = scmp.ne.s32.totalorder %s398, %s401
      %p410 = scmp.eq.s32.totalorder %s31, 1
      %p411 = por %p409, %p410
      %p412 = scmp.ne.s32.totalorder %s401, %s402
      %p413 = scmp.eq.s32.totalorder %s31, 0
      %p414 = por %p412, %p413
      %p415 = scmp.ne.s32.totalorder %s401, %s402
      %p416 = scmp.eq.s32.totalorder %s32, 1
      %p417 = por %p415, %p416
      %p419 = scmp.ne.s32.totalorder %s402, %s418
      %p420 = scmp.eq.s32.totalorder %s32, 0
      %p421 = por %p419, %p420
      %p422 = scmp.le.s32.totalorder 1, %s26
      %p423 = scmp.lt.s32.totalorder %s26, 3
      %p424 = pnand %p422, %p423
      %p425 = pneg %p424
      // Predicated region
      $region9: #{tpu_custom_call.1} parent=5 // pred_check
        _
      $region10: #{tpu_custom_call.1} parent=5 // pred_check_branch
        %427 = sbr.rel (%p424) target = $region12
      $region11: #{tpu_custom_call.1} parent=5 // pred_region
        %s428 = ssub.s32 %s26, 1
        // Predicated region
        $region13: #{tpu_custom_call.1} parent=11 // pred_check
          %p429 = pneg %p73
        $region14: #{tpu_custom_call.1} parent=11 // pred_check_branch
          %431 = sbr.rel (%p429) target = $region16
        $region15: #{tpu_custom_call.1} parent=11 // pred_region
          _
        $region16: #{tpu_custom_call.1} parent=11 // pred_fallthru
          _
        // Predicated region
        $region17: #{tpu_custom_call.1} parent=11 // pred_check
          %p432 = pneg %p94
        $region18: #{tpu_custom_call.1} parent=11 // pred_check_branch
          %434 = sbr.rel (%p432) target = $region20
        $region19: #{tpu_custom_call.1} parent=11 // pred_region
          _
        $region20: #{tpu_custom_call.1} parent=11 // pred_fallthru
          _
        // Predicated region
        $region21: #{tpu_custom_call.1} parent=11 // pred_check
          %p435 = pneg %p115
        $region22: #{tpu_custom_call.1} parent=11 // pred_check_branch
          %437 = sbr.rel (%p435) target = $region24
        $region23: #{tpu_custom_call.1} parent=11 // pred_region
          _
        $region24: #{tpu_custom_call.1} parent=11 // pred_fallthru
          _
        // Predicated region
        $region25: #{tpu_custom_call.1} parent=11 // pred_check
          %p438 = pneg %p136
        $region26: #{tpu_custom_call.1} parent=11 // pred_check_branch
          %440 = sbr.rel (%p438) target = $region28
        $region27: #{tpu_custom_call.1} parent=11 // pred_region
          _
        $region28: #{tpu_custom_call.1} parent=11 // pred_fallthru
          _
        // Predicated region
        $region29: #{tpu_custom_call.1} parent=11 // pred_check
          %p441 = pneg %p157
        $region30: #{tpu_custom_call.1} parent=11 // pred_check_branch
          %443 = sbr.rel (%p441) target = $region32
        $region31: #{tpu_custom_call.1} parent=11 // pred_region
          _
        $region32: #{tpu_custom_call.1} parent=11 // pred_fallthru
          _
        // Predicated region
        $region33: #{tpu_custom_call.1} parent=11 // pred_check
          %p444 = pneg %p178
        $region34: #{tpu_custom_call.1} parent=11 // pred_check_branch
          %446 = sbr.rel (%p444) target = $region36
        $region35: #{tpu_custom_call.1} parent=11 // pred_region
          _
        $region36: #{tpu_custom_call.1} parent=11 // pred_fallthru
          _
        // Predicated region
        $region37: #{tpu_custom_call.1} parent=11 // pred_check
          %p447 = pneg %p199
        $region38: #{tpu_custom_call.1} parent=11 // pred_check_branch
          %449 = sbr.rel (%p447) target = $region40
        $region39: #{tpu_custom_call.1} parent=11 // pred_region
          _
        $region40: #{tpu_custom_call.1} parent=11 // pred_fallthru
          _
        // Predicated region
        $region41: #{tpu_custom_call.1} parent=11 // pred_check
          %p450 = pneg %p220
        $region42: #{tpu_custom_call.1} parent=11 // pred_check_branch
          %452 = sbr.rel (%p450) target = $region44
        $region43: #{tpu_custom_call.1} parent=11 // pred_region
          _
        $region44: #{tpu_custom_call.1} parent=11 // pred_fallthru
          _
        // Predicated region
        $region45: #{tpu_custom_call.1} parent=11 // pred_check
          %p453 = pneg %p241
        $region46: #{tpu_custom_call.1} parent=11 // pred_check_branch
          %455 = sbr.rel (%p453) target = $region48
        $region47: #{tpu_custom_call.1} parent=11 // pred_region
          _
        $region48: #{tpu_custom_call.1} parent=11 // pred_fallthru
          _
        // Predicated region
        $region49: #{tpu_custom_call.1} parent=11 // pred_check
          %p456 = pneg %p262
        $region50: #{tpu_custom_call.1} parent=11 // pred_check_branch
          %458 = sbr.rel (%p456) target = $region52
        $region51: #{tpu_custom_call.1} parent=11 // pred_region
          _
        $region52: #{tpu_custom_call.1} parent=11 // pred_fallthru
          _
        // Predicated region
        $region53: #{tpu_custom_call.1} parent=11 // pred_check
          %p459 = pneg %p283
        $region54: #{tpu_custom_call.1} parent=11 // pred_check_branch
          %461 = sbr.rel (%p459) target = $region56
        $region55: #{tpu_custom_call.1} parent=11 // pred_region
          _
        $region56: #{tpu_custom_call.1} parent=11 // pred_fallthru
          _
        // Predicated region
        $region57: #{tpu_custom_call.1} parent=11 // pred_check
          %p462 = pneg %p304
        $region58: #{tpu_custom_call.1} parent=11 // pred_check_branch
          %464 = sbr.rel (%p462) target = $region60
        $region59: #{tpu_custom_call.1} parent=11 // pred_region
          _
        $region60: #{tpu_custom_call.1} parent=11 // pred_fallthru
          _
        // Predicated region
        $region61: #{tpu_custom_call.1} parent=11 // pred_check
          %p465 = pneg %p325
        $region62: #{tpu_custom_call.1} parent=11 // pred_check_branch
          %467 = sbr.rel (%p465) target = $region64
        $region63: #{tpu_custom_call.1} parent=11 // pred_region
          _
        $region64: #{tpu_custom_call.1} parent=11 // pred_fallthru
          _
        // Predicated region
        $region65: #{tpu_custom_call.1} parent=11 // pred_check
          %p468 = pneg %p346
        $region66: #{tpu_custom_call.1} parent=11 // pred_check_branch
          %470 = sbr.rel (%p468) target = $region68
        $region67: #{tpu_custom_call.1} parent=11 // pred_region
          _
        $region68: #{tpu_custom_call.1} parent=11 // pred_fallthru
          _
        // Predicated region
        $region69: #{tpu_custom_call.1} parent=11 // pred_check
          %p471 = pneg %p367
        $region70: #{tpu_custom_call.1} parent=11 // pred_check_branch
          %473 = sbr.rel (%p471) target = $region72
        $region71: #{tpu_custom_call.1} parent=11 // pred_region
          _
        $region72: #{tpu_custom_call.1} parent=11 // pred_fallthru
          _
        // Predicated region
        $region73: #{tpu_custom_call.1} parent=11 // pred_check
          %p474 = pneg %p388
        $region74: #{tpu_custom_call.1} parent=11 // pred_check_branch
          %476 = sbr.rel (%p474) target = $region76
        $region75: #{tpu_custom_call.1} parent=11 // pred_region
          _
        $region76: #{tpu_custom_call.1} parent=11 // pred_fallthru
          _
      $region12: #{tpu_custom_call.1} parent=5 // pred_fallthru
        _
      %p477 = scmp.lt.s32.totalorder %s26, 2
      // Predicated region
      $region77: #{tpu_custom_call.1} parent=5 // pred_check
        %p478 = pneg %p477
      $region78: #{tpu_custom_call.1} parent=5 // pred_check_branch
        %480 = sbr.rel (%p478) target = $region80
      $region79: #{tpu_custom_call.1} parent=5 // pred_region
        // Predicated region
        $region81: #{tpu_custom_call.1} parent=79 // pred_check
          %p481 = pneg %p46
        $region82: #{tpu_custom_call.1} parent=79 // pred_check_branch
          %483 = sbr.rel (%p481) target = $region84
        $region83: #{tpu_custom_call.1} parent=79 // pred_region
          %p484 = scmp.lt.s32.totalorder %s26, 1
          %s485 = scalar_select %p484, %s26, 1
          %s486 = smul.addr %s485, 2
          %s487 = smul.addr %s486, 4
          %s488 = scalar_lea.vmem %s0, %s487
        $region84: #{tpu_custom_call.1} parent=79 // pred_fallthru
          _
      $region80: #{tpu_custom_call.1} parent=5 // pred_fallthru
        _
      %p489 = scmp.le.s32.totalorder 1, %s26
      %p490 = scmp.lt.s32.totalorder %s26, 3
      %p491 = pnand %p489, %p490
      %p492 = pneg %p491
      // Predicated region
      $region85: #{tpu_custom_call.1} parent=5 // pred_check
        _
      $region86: #{tpu_custom_call.1} parent=5 // pred_check_branch
        %494 = sbr.rel (%p491) target = $region88
      $region87: #{tpu_custom_call.1} parent=5 // pred_region
        %s495 = ssub.s32 %s26, 1
        %p496 = scmp.lt.s32.totalorder %s31, 1
        %s497 = scalar_select %p496, %s31, 1
        %s498 = smul.addr %s497, 2
        %s499 = smul.addr %s498, 4
        %s500 = scalar_lea.vmem %s0, %s499
        %p501 = pneg %p52
        %p502 = pneg %p49
        %p503 = pneg %p73
        %p504 = pneg %p70
        %p505 = pneg %p94
        %p506 = pneg %p91
        %p507 = pneg %p115
        %p508 = pneg %p112
        %p509 = pneg %p136
        %p510 = pneg %p133
        %p511 = pneg %p157
        %p512 = pneg %p154
        %p513 = pneg %p178
        %p514 = pneg %p175
        %p515 = pneg %p199
        %p516 = pneg %p196
        %p517 = pneg %p220
        %p518 = pneg %p217
        %p519 = pneg %p241
        %p520 = pneg %p238
        %p521 = pneg %p262
        %p522 = pneg %p259
        %p523 = pneg %p283
        %p524 = pneg %p280
        %p525 = pneg %p304
        %p526 = pneg %p301
        %p527 = pneg %p325
        %p528 = pneg %p322
        %p529 = pneg %p346
        %p530 = pneg %p343
        %p531 = pneg %p367
        %p532 = pneg %p364
        %p533 = pneg %p388
        %p534 = pneg %p385
        %p535 = pneg %p414
        %p536 = pneg %p411
        %s537 = sand.u32 %s401, 1
        %s538 = scalar_lea.sflag [#allocation3], %s537
        %s539 = sand.u32 %s401, 1
        %s540 = smul.addr %s539, 16
        %s541 = scalar_lea.vmem [#allocation2], %s540
        %p542 = scmp.lt.s32.totalorder %s31, 1
        %s543 = scalar_select %p542, %s31, 1
        %s544 = smul.addr %s543, 2
        %s545 = smul.addr %s544, 4
        %s546 = scalar_lea.vmem %s0, %s545
        %v547 = vld [vmem:[%s546] sm:$0xff]
        %v548 = vld [vmem:[%s5] sm:$0xff]
        %v549 = vld [vmem:[%s5 + $0x8] sm:$0xff]
        %v550 = vld [vmem:[%s5 + $0x10] sm:$0xff]
        %v551 = vld [vmem:[%s5 + $0x18] sm:$0xff]
        %v552 = vld [vmem:[%s5 + $0x20] sm:$0xff]
        %v553 = vld [vmem:[%s5 + $0x28] sm:$0xff]
        %v554 = vld [vmem:[%s5 + $0x30] sm:$0xff]
        %v555 = vld [vmem:[%s5 + $0x38] sm:$0xff]
        %v556 = vld [vmem:[%s5 + $0x40] sm:$0xff]
        %v557 = vld [vmem:[%s5 + $0x48] sm:$0xff]
        %v558 = vld [vmem:[%s5 + $0x50] sm:$0xff]
        %v559 = vld [vmem:[%s5 + $0x58] sm:$0xff]
        %v560 = vld [vmem:[%s5 + $0x60] sm:$0xff]
        %v561 = vld [vmem:[%s5 + $0x68] sm:$0xff]
        %v562 = vld [vmem:[%s5 + $0x70] sm:$0xff]
        %v563 = vld [vmem:[%s5 + $0x78] sm:$0xff]
        %v564 = vld [vmem:[%s5 + $0x80] sm:$0xff]
        %v565 = vld [vmem:[%s5 + $0x88] sm:$0xff]
        %v566 = vld [vmem:[%s5 + $0x90] sm:$0xff]
        %v567 = vld [vmem:[%s5 + $0x98] sm:$0xff]
        %v568 = vld [vmem:[%s5 + $0xa0] sm:$0xff]
        %v569 = vld [vmem:[%s5 + $0xa8] sm:$0xff]
        %v570 = vld [vmem:[%s5 + $0xb0] sm:$0xff]
        %v571 = vld [vmem:[%s5 + $0xb8] sm:$0xff]
        %v572 = vld [vmem:[%s5 + $0xc0] sm:$0xff]
        %v573 = vld [vmem:[%s5 + $0xc8] sm:$0xff]
        %v574 = vld [vmem:[%s5 + $0xd0] sm:$0xff]
        %v575 = vld [vmem:[%s5 + $0xd8] sm:$0xff]
        %v576 = vld [vmem:[%s5 + $0xe0] sm:$0xff]
        %v577 = vld [vmem:[%s5 + $0xe8] sm:$0xff]
        %v578 = vld [vmem:[%s5 + $0xf0] sm:$0xff]
        %v579 = vld [vmem:[%s5 + $0xf8] sm:$0xff]
        %v580 = vld [vmem:[%s7] sm:$0xff]
        %v581 = vld [vmem:[%s7 + $0x8] sm:$0xff]
        %v582 = vld [vmem:[%s7 + $0x10] sm:$0xff]
        %v583 = vld [vmem:[%s7 + $0x18] sm:$0xff]
        %v584 = vld [vmem:[%s7 + $0x20] sm:$0xff]
        %v585 = vld [vmem:[%s7 + $0x28] sm:$0xff]
        %v586 = vld [vmem:[%s7 + $0x30] sm:$0xff]
        %v587 = vld [vmem:[%s7 + $0x38] sm:$0xff]
        %v588 = vld [vmem:[%s7 + $0x40] sm:$0xff]
        %v589 = vld [vmem:[%s7 + $0x48] sm:$0xff]
        %v590 = vld [vmem:[%s7 + $0x50] sm:$0xff]
        %v591 = vld [vmem:[%s7 + $0x58] sm:$0xff]
        %v592 = vld [vmem:[%s7 + $0x60] sm:$0xff]
        %v593 = vld [vmem:[%s7 + $0x68] sm:$0xff]
        %v594 = vld [vmem:[%s7 + $0x70] sm:$0xff]
        %v595 = vld [vmem:[%s7 + $0x78] sm:$0xff]
        %v596 = vld [vmem:[%s7 + $0x80] sm:$0xff]
        %v597 = vld [vmem:[%s7 + $0x88] sm:$0xff]
        %v598 = vld [vmem:[%s7 + $0x90] sm:$0xff]
        %v599 = vld [vmem:[%s7 + $0x98] sm:$0xff]
        %v600 = vld [vmem:[%s7 + $0xa0] sm:$0xff]
        %v601 = vld [vmem:[%s7 + $0xa8] sm:$0xff]
        %v602 = vld [vmem:[%s7 + $0xb0] sm:$0xff]
        %v603 = vld [vmem:[%s7 + $0xb8] sm:$0xff]
        %v604 = vld [vmem:[%s7 + $0xc0] sm:$0xff]
        %v605 = vld [vmem:[%s7 + $0xc8] sm:$0xff]
        %v606 = vld [vmem:[%s7 + $0xd0] sm:$0xff]
        %v607 = vld [vmem:[%s7 + $0xd8] sm:$0xff]
        %v608 = vld [vmem:[%s7 + $0xe0] sm:$0xff]
        %v609 = vld [vmem:[%s7 + $0xe8] sm:$0xff]
        %v610 = vld [vmem:[%s7 + $0xf0] sm:$0xff]
        %v611 = vld [vmem:[%s7 + $0xf8] sm:$0xff]
        %v612 = vld [vmem:[%s9] sm:$0xff]
        %v613 = vld [vmem:[%s9 + $0x8] sm:$0xff]
        %v614 = vld [vmem:[%s9 + $0x10] sm:$0xff]
        %v615 = vld [vmem:[%s9 + $0x18] sm:$0xff]
        %v616 = vld [vmem:[%s9 + $0x20] sm:$0xff]
        %v617 = vld [vmem:[%s9 + $0x28] sm:$0xff]
        %v618 = vld [vmem:[%s9 + $0x30] sm:$0xff]
        %v619 = vld [vmem:[%s9 + $0x38] sm:$0xff]
        %v620 = vld [vmem:[%s9 + $0x40] sm:$0xff]
        %v621 = vld [vmem:[%s9 + $0x48] sm:$0xff]
        %v622 = vld [vmem:[%s9 + $0x50] sm:$0xff]
        %v623 = vld [vmem:[%s9 + $0x58] sm:$0xff]
        %v624 = vld [vmem:[%s9 + $0x60] sm:$0xff]
        %v625 = vld [vmem:[%s9 + $0x68] sm:$0xff]
        %v626 = vld [vmem:[%s9 + $0x70] sm:$0xff]
        %v627 = vld [vmem:[%s9 + $0x78] sm:$0xff]
        %v628 = vld [vmem:[%s9 + $0x80] sm:$0xff]
        %v629 = vld [vmem:[%s9 + $0x88] sm:$0xff]
        %v630 = vld [vmem:[%s9 + $0x90] sm:$0xff]
        %v631 = vld [vmem:[%s9 + $0x98] sm:$0xff]
        %v632 = vld [vmem:[%s9 + $0xa0] sm:$0xff]
        %v633 = vld [vmem:[%s9 + $0xa8] sm:$0xff]
        %v634 = vld [vmem:[%s9 + $0xb0] sm:$0xff]
        %v635 = vld [vmem:[%s9 + $0xb8] sm:$0xff]
        %v636 = vld [vmem:[%s9 + $0xc0] sm:$0xff]
        %v637 = vld [vmem:[%s9 + $0xc8] sm:$0xff]
        %v638 = vld [vmem:[%s9 + $0xd0] sm:$0xff]
        %v639 = vld [vmem:[%s9 + $0xd8] sm:$0xff]
        %v640 = vld [vmem:[%s9 + $0xe0] sm:$0xff]
        %v641 = vld [vmem:[%s9 + $0xe8] sm:$0xff]
        %v642 = vld [vmem:[%s9 + $0xf0] sm:$0xff]
        %v643 = vld [vmem:[%s9 + $0xf8] sm:$0xff]
        %v644 = vld [vmem:[%s6] sm:$0xff]
        %v645 = vld [vmem:[%s6 + $0x8] sm:$0xff]
        %v646 = vld [vmem:[%s6 + $0x10] sm:$0xff]
        %v647 = vld [vmem:[%s6 + $0x18] sm:$0xff]
        %v648 = vld [vmem:[%s6 + $0x20] sm:$0xff]
        %v649 = vld [vmem:[%s6 + $0x28] sm:$0xff]
        %v650 = vld [vmem:[%s6 + $0x30] sm:$0xff]
        %v651 = vld [vmem:[%s6 + $0x38] sm:$0xff]
        %v652 = vld [vmem:[%s6 + $0x40] sm:$0xff]
        %v653 = vld [vmem:[%s6 + $0x48] sm:$0xff]
        %v654 = vld [vmem:[%s6 + $0x50] sm:$0xff]
        %v655 = vld [vmem:[%s6 + $0x58] sm:$0xff]
        %v656 = vld [vmem:[%s6 + $0x60] sm:$0xff]
        %v657 = vld [vmem:[%s6 + $0x68] sm:$0xff]
        %v658 = vld [vmem:[%s6 + $0x70] sm:$0xff]
        %v659 = vld [vmem:[%s6 + $0x78] sm:$0xff]
        %v660 = vld [vmem:[%s8] sm:$0xff]
        %v661 = vld [vmem:[%s8 + $0x8] sm:$0xff]
        %v662 = vld [vmem:[%s8 + $0x10] sm:$0xff]
        %v663 = vld [vmem:[%s8 + $0x18] sm:$0xff]
        %v664 = vld [vmem:[%s10] sm:$0xff]
        %v665 = vld [vmem:[%s11] sm:$0xff]
        %v666 = vld [vmem:[%s11 + $0x8] sm:$0xff]
        %v667 = vld [vmem:[%s11 + $0x10] sm:$0xff]
        %v668 = vld [vmem:[%s11 + $0x18] sm:$0xff]
        %v669 = vld [vmem:[%s12] sm:$0xff]
        %v670 = vld [vmem:[%s12 + $0x8] sm:$0xff]
        %v671 = vld [vmem:[%s12 + $0x10] sm:$0xff]
        %v672 = vld [vmem:[%s12 + $0x18] sm:$0xff]
        %v673 = vld [vmem:[%s14] sm:$0xff]
        %v674 = vld [vmem:[%s14 + $0x8] sm:$0xff]
        %v675 = vld [vmem:[%s14 + $0x10] sm:$0xff]
        %v676 = vld [vmem:[%s14 + $0x18] sm:$0xff]
        %v677 = vld [vmem:[%s14 + $0x20] sm:$0xff]
        %v678 = vld [vmem:[%s15] sm:$0xff]
        %v679 = vld [vmem:[%s15 + $0x8] sm:$0xff]
        %v680 = vld [vmem:[%s15 + $0x10] sm:$0xff]
        %v681 = vld [vmem:[%s15 + $0x18] sm:$0xff]
        %v682 = vld [vmem:[%s15 + $0x20] sm:$0xff]
        %v683 = vld [vmem:[%s16] sm:$0xff]
        %v684 = vld [vmem:[%s3] sm:$0xff]
        %v685 = vld [vmem:[%s1] sm:$0xf]
        %v686 = vld [vmem:[%s2] sm:$0xf]
        %688 = vset.pattern.permute.xlu0 0
        %689 = vperm.xlu0 %688, %v685
        %v690 = vpop.permute.xlu0 %689
        %v692 = vunpack.c.l.s4 839922192
        %v693 = vunpack.c.0.s8 %v692
        %v694 = vlaneseq
        %v695 = vshrl.u32 %v694, 7
        %v696 = vsub.s32 %v693, %v695
        %v697 = vrot.slane %v690, %v696
        %v699 = vmul.f32 %v547, %v697
        %701 = vset.pattern.permute.xlu0 0
        %702 = vperm.xlu0 %701, %v686
        %v703 = vpop.permute.xlu0 %702
        %v705 = vunpack.c.l.s4 839922192
        %v706 = vunpack.c.0.s8 %v705
        %v707 = vlaneseq
        %v708 = vshrl.u32 %v707, 7
        %v709 = vsub.s32 %v706, %v708
        %v710 = vrot.slane %v703, %v709
        %v712 = vadd.f32 %v699, %v710
        %v713 = vmax.f32 %v712, 0.0
        %v715 = vcombine.high %v713, %v713
        %vm716 = vcmask 31744
        %v718 = vsel %vm716, %v684, 0
        %vm720 = vcmask 1043456
        %v721 = vsel %vm720, %v713, 0
        %v723 = vsel %vm720, %v715, 0
        %725 = vmatprep.subr.mxu0 %v723
        %726 = vmatpush1.msra.mxu0 %v721
        %727 = vmatprep.subr.mxu0 0.0
        %728 = vmatpush1.msra.mxu0 0.0
        %729 = vmatprep.subr.mxu0 0.0
        %730 = vmatpush1.msra.mxu0 0.0
        %731 = vmatprep.subr.mxu0 0.0
        %732 = vmatpush1.msra.mxu0 0.0
        %733 = vmatprep.subr.mxu0 0.0
        %734 = vmatpush1.msra.mxu0 0.0
        %735 = vmatprep.subr.mxu0 0.0
        %736 = vmatpush1.msra.mxu0 0.0
        %737 = vmatprep.subr.mxu0 0.0
        %738 = vmatpush1.msra.mxu0 0.0
        %739 = vmatprep.subr.mxu0 0.0
        %740 = vmatpush1.msra.mxu0 0.0
        %741 = vmatprep.subr.mxu0 0.0
        %742 = vmatpush1.msra.mxu0 0.0
        %743 = vmatprep.subr.mxu0 0.0
        %744 = vmatpush1.msra.mxu0 0.0
        %745 = vmatprep.subr.mxu0 0.0
        %746 = vmatpush1.msra.mxu0 0.0
        %747 = vmatprep.subr.mxu0 0.0
        %748 = vmatpush1.msra.mxu0 0.0
        %749 = vmatprep.subr.mxu0 0.0
        %750 = vmatpush1.msra.mxu0 0.0
        %751 = vmatprep.subr.mxu0 0.0
        %752 = vmatpush1.msra.mxu0 0.0
        %753 = vmatprep.subr.mxu0 0.0
        %754 = vmatpush1.msra.mxu0 0.0
        %755 = vmatprep.subr.mxu0 0.0
        %756 = vmatpush1.msra.mxu0 0.0
        %757 = vmatprep.subr.mxu0 0.0
        %758 = vmatpush1.msra.mxu0 0.0
        %759 = vmatprep.subr.mxu0 0.0
        %760 = vmatpush1.msra.mxu0 0.0
        %761 = vmatprep.subr.mxu0 0.0
        %762 = vmatpush1.msra.mxu0 0.0
        %763 = vmatprep.subr.mxu0 0.0
        %764 = vmatpush1.msra.mxu0 0.0
        %765 = vmatprep.subr.mxu0 0.0
        %766 = vmatpush1.msra.mxu0 0.0
        %767 = vmatprep.subr.mxu0 0.0
        %768 = vmatpush1.msra.mxu0 0.0
        %769 = vmatprep.subr.mxu0 0.0
        %770 = vmatpush1.msra.mxu0 0.0
        %771 = vmatprep.subr.mxu0 0.0
        %772 = vmatpush1.msra.mxu0 0.0
        %773 = vmatprep.subr.mxu0 0.0
        %774 = vmatpush1.msra.mxu0 0.0
        %775 = vmatprep.subr.mxu0 0.0
        %776 = vmatpush1.msra.mxu0 0.0
        %777 = vmatprep.subr.mxu0 0.0
        %778 = vmatpush1.msra.mxu0 0.0
        %779 = vmatprep.subr.mxu0 0.0
        %780 = vmatpush1.msra.mxu0 0.0
        %781 = vmatprep.subr.mxu0 0.0
        %782 = vmatpush1.msra.mxu0 0.0
        %783 = vmatprep.subr.mxu0 0.0
        %784 = vmatpush1.msra.mxu0 0.0
        %785 = vmatprep.subr.mxu0 0.0
        %786 = vmatpush1.msra.mxu0 0.0
        %787 = vmatprep.subr.mxu0 0.0
        %788 = vmatpush1.msra.mxu0 0.0
        %789 = vmatprep.mubr.f32.mxu0 0.0
        %790 = vmatmul.mubr.f32.gmra.mrb[0].mxu0 %v718
        %v791 = vpop.f32.mrb[0].mxu0
        %v792 = vadd.f32 0.0, %v791
        %v793 = vpop.f32.mrb[0].mxu0
        %v794 = vadd.f32 0.0, %v793
        %795 = vdwg.mxu0
        %v796 = vld [vmem:[%s4] sm:$0xff]
        %s797 = scalar_lea.vmem %s1, 20
        %v798 = vld [vmem:[%s797] sm:$0xf]
        %s799 = scalar_lea.vmem %s2, 20
        %v800 = vld [vmem:[%s799] sm:$0xf]
        %802 = vset.pattern.permute.xlu0 0
        %803 = vperm.xlu0 %802, %v798
        %v804 = vpop.permute.xlu0 %803
        %v806 = vunpack.c.l.s4 839922192
        %v807 = vunpack.c.0.s8 %v806
        %v808 = vlaneseq
        %v809 = vshrl.u32 %v808, 7
        %v810 = vsub.s32 %v807, %v809
        %v811 = vrot.slane %v804, %v810
        %v813 = vmul.f32 %v547, %v811
        %815 = vset.pattern.permute.xlu0 0
        %816 = vperm.xlu0 %815, %v800
        %v817 = vpop.permute.xlu0 %816
        %v819 = vunpack.c.l.s4 839922192
        %v820 = vunpack.c.0.s8 %v819
        %v821 = vlaneseq
        %v822 = vshrl.u32 %v821, 7
        %v823 = vsub.s32 %v820, %v822
        %v824 = vrot.slane %v817, %v823
        %v826 = vadd.f32 %v813, %v824
        %v827 = vmax.f32 %v826, 0.0
        %v829 = vcombine.high %v547, %v547
        %831 = vmatprep.subr.mxu0 0.0
        %832 = vmatpush1.msra.mxu0 %v548
        %833 = vmatprep.subr.mxu0 0.0
        %834 = vmatpush1.msra.mxu0 %v549
        %835 = vmatprep.subr.mxu0 0.0
        %836 = vmatpush1.msra.mxu0 %v550
        %837 = vmatprep.subr.mxu0 0.0
        %838 = vmatpush1.msra.mxu0 %v551
        %839 = vmatprep.subr.mxu0 0.0
        %840 = vmatpush1.msra.mxu0 %v552
        %841 = vmatprep.subr.mxu0 0.0
        %842 = vmatpush1.msra.mxu0 %v553
        %843 = vmatprep.subr.mxu0 0.0
        %844 = vmatpush1.msra.mxu0 %v554
        %845 = vmatprep.subr.mxu0 0.0
        %846 = vmatpush1.msra.mxu0 %v555
        %847 = vmatprep.subr.mxu0 0.0
        %848 = vmatpush1.msra.mxu0 %v556
        %849 = vmatprep.subr.mxu0 0.0
        %850 = vmatpush1.msra.mxu0 %v557
        %851 = vmatprep.subr.mxu0 0.0
        %852 = vmatpush1.msra.mxu0 %v558
        %853 = vmatprep.subr.mxu0 0.0
        %854 = vmatpush1.msra.mxu0 %v559
        %855 = vmatprep.subr.mxu0 0.0
        %856 = vmatpush1.msra.mxu0 %v560
        %857 = vmatprep.subr.mxu0 0.0
        %858 = vmatpush1.msra.mxu0 %v561
        %859 = vmatprep.subr.mxu0 0.0
        %860 = vmatpush1.msra.mxu0 %v562
        %861 = vmatprep.subr.mxu0 0.0
        %862 = vmatpush1.msra.mxu0 %v563
        %863 = vmatprep.subr.mxu0 0.0
        %864 = vmatpush1.msra.mxu0 %v564
        %865 = vmatprep.subr.mxu0 0.0
        %866 = vmatpush1.msra.mxu0 %v565
        %867 = vmatprep.subr.mxu0 0.0
        %868 = vmatpush1.msra.mxu0 %v566
        %869 = vmatprep.subr.mxu0 0.0
        %870 = vmatpush1.msra.mxu0 %v567
        %871 = vmatprep.subr.mxu0 0.0
        %872 = vmatpush1.msra.mxu0 %v568
        %873 = vmatprep.subr.mxu0 0.0
        %874 = vmatpush1.msra.mxu0 %v569
        %875 = vmatprep.subr.mxu0 0.0
        %876 = vmatpush1.msra.mxu0 %v570
        %877 = vmatprep.subr.mxu0 0.0
        %878 = vmatpush1.msra.mxu0 %v571
        %879 = vmatprep.subr.mxu0 0.0
        %880 = vmatpush1.msra.mxu0 %v572
        %881 = vmatprep.subr.mxu0 0.0
        %882 = vmatpush1.msra.mxu0 %v573
        %883 = vmatprep.subr.mxu0 0.0
        %884 = vmatpush1.msra.mxu0 %v574
        %885 = vmatprep.subr.mxu0 0.0
        %886 = vmatpush1.msra.mxu0 %v575
        %887 = vmatprep.subr.mxu0 0.0
        %888 = vmatpush1.msra.mxu0 %v576
        %889 = vmatprep.subr.mxu0 0.0
        %890 = vmatpush1.msra.mxu0 %v577
        %891 = vmatprep.subr.mxu0 0.0
        %892 = vmatpush1.msra.mxu0 %v578
        %893 = vmatprep.subr.mxu0 0.0
        %894 = vmatpush1.msra.mxu0 %v579
        %895 = vmatprep.mubr.f32.mxu0 %v829
        %896 = vmatmul.mubr.f32.gmra.mrb[0].mxu0 %v547
        %v897 = vpop.f32.mrb[0].mxu0
        %v898 = vadd.f32 0.0, %v897
        %v899 = vpop.f32.mrb[0].mxu0
        %900 = vdwg.mxu0
        %s901 = scalar_lea.vmem %s1, 4
        %v902 = vld [vmem:[%s901] sm:$0xf]
        %s903 = scalar_lea.vmem %s2, 4
        %v904 = vld [vmem:[%s903] sm:$0xf]
        %906 = vset.pattern.permute.xlu0 0
        %907 = vperm.xlu0 %906, %v902
        %v908 = vpop.permute.xlu0 %907
        %v910 = vmul.f32 %v898, %v908
        %912 = vset.pattern.permute.xlu0 0
        %913 = vperm.xlu0 %912, %v904
        %v914 = vpop.permute.xlu0 %913
        %v916 = vadd.f32 %v910, %v914
        %v917 = vmax.f32 %v916, 0.0
        %s918 = scalar_lea.vmem %s3, 8
        %v919 = vld [vmem:[%s918] sm:$0xff]
        %v921 = vsel %vm716, %v919, 0
        %v924 = vsel %vm720, %v917, 0
        %926 = vmatprep.subr.mxu0 0.0
        %927 = vmatpush1.msra.mxu0 %v924
        %928 = vmatprep.subr.mxu0 0.0
        %929 = vmatpush1.msra.mxu0 0.0
        %930 = vmatprep.subr.mxu0 0.0
        %931 = vmatpush1.msra.mxu0 0.0
        %932 = vmatprep.subr.mxu0 0.0
        %933 = vmatpush1.msra.mxu0 0.0
        %934 = vmatprep.subr.mxu0 0.0
        %935 = vmatpush1.msra.mxu0 0.0
        %936 = vmatprep.subr.mxu0 0.0
        %937 = vmatpush1.msra.mxu0 0.0
        %938 = vmatprep.subr.mxu0 0.0
        %939 = vmatpush1.msra.mxu0 0.0
        %940 = vmatprep.subr.mxu0 0.0
        %941 = vmatpush1.msra.mxu0 0.0
        %942 = vmatprep.subr.mxu0 0.0
        %943 = vmatpush1.msra.mxu0 0.0
        %944 = vmatprep.subr.mxu0 0.0
        %945 = vmatpush1.msra.mxu0 0.0
        %946 = vmatprep.subr.mxu0 0.0
        %947 = vmatpush1.msra.mxu0 0.0
        %948 = vmatprep.subr.mxu0 0.0
        %949 = vmatpush1.msra.mxu0 0.0
        %950 = vmatprep.subr.mxu0 0.0
        %951 = vmatpush1.msra.mxu0 0.0
        %952 = vmatprep.subr.mxu0 0.0
        %953 = vmatpush1.msra.mxu0 0.0
        %954 = vmatprep.subr.mxu0 0.0
        %955 = vmatpush1.msra.mxu0 0.0
        %956 = vmatprep.subr.mxu0 0.0
        %957 = vmatpush1.msra.mxu0 0.0
        %958 = vmatprep.subr.mxu0 0.0
        %959 = vmatpush1.msra.mxu0 0.0
        %960 = vmatprep.subr.mxu0 0.0
        %961 = vmatpush1.msra.mxu0 0.0
        %962 = vmatprep.subr.mxu0 0.0
        %963 = vmatpush1.msra.mxu0 0.0
        %964 = vmatprep.subr.mxu0 0.0
        %965 = vmatpush1.msra.mxu0 0.0
        %966 = vmatprep.subr.mxu0 0.0
        %967 = vmatpush1.msra.mxu0 0.0
        %968 = vmatprep.subr.mxu0 0.0
        %969 = vmatpush1.msra.mxu0 0.0
        %970 = vmatprep.subr.mxu0 0.0
        %971 = vmatpush1.msra.mxu0 0.0
        %972 = vmatprep.subr.mxu0 0.0
        %973 = vmatpush1.msra.mxu0 0.0
        %974 = vmatprep.subr.mxu0 0.0
        %975 = vmatpush1.msra.mxu0 0.0
        %976 = vmatprep.subr.mxu0 0.0
        %977 = vmatpush1.msra.mxu0 0.0
        %978 = vmatprep.subr.mxu0 0.0
        %979 = vmatpush1.msra.mxu0 0.0
        %980 = vmatprep.subr.mxu0 0.0
        %981 = vmatpush1.msra.mxu0 0.0
        %982 = vmatprep.subr.mxu0 0.0
        %983 = vmatpush1.msra.mxu0 0.0
        %984 = vmatprep.subr.mxu0 0.0
        %985 = vmatpush1.msra.mxu0 0.0
        %986 = vmatprep.subr.mxu0 0.0
        %987 = vmatpush1.msra.mxu0 0.0
        %988 = vmatprep.subr.mxu0 0.0
        %989 = vmatpush1.msra.mxu0 0.0
        %990 = vmatprep.mubr.f32.mxu0 0.0
        %991 = vmatmul.mubr.f32.gmra.mrb[0].mxu0 %v921
        %v992 = vpop.f32.mrb[0].mxu0
        %v993 = vadd.f32 0.0, %v992
        %v994 = vpop.f32.mrb[0].mxu0
        %995 = vdwg.mxu0
        %vm996 = vcmask 523264
        %v998 = vsel %vm996, %v993, 0
        %1000 = vmatprep.subr.mxu0 %v645
        %1001 = vmatpush1.msra.mxu0 %v644
        %1002 = vmatprep.subr.mxu0 %v647
        %1003 = vmatpush1.msra.mxu0 %v646
        %1004 = vmatprep.subr.mxu0 %v649
        %1005 = vmatpush1.msra.mxu0 %v648
        %1006 = vmatprep.subr.mxu0 %v651
        %1007 = vmatpush1.msra.mxu0 %v650
        %1008 = vmatprep.subr.mxu0 %v653
        %1009 = vmatpush1.msra.mxu0 %v652
        %1010 = vmatprep.subr.mxu0 %v655
        %1011 = vmatpush1.msra.mxu0 %v654
        %1012 = vmatprep.subr.mxu0 %v657
        %1013 = vmatpush1.msra.mxu0 %v656
        %1014 = vmatprep.subr.mxu0 %v659
        %1015 = vmatpush1.msra.mxu0 %v658
        %1016 = vmatprep.subr.mxu0 0.0
        %1017 = vmatpush1.msra.mxu0 0.0
        %1018 = vmatprep.subr.mxu0 0.0
        %1019 = vmatpush1.msra.mxu0 0.0
        %1020 = vmatprep.subr.mxu0 0.0
        %1021 = vmatpush1.msra.mxu0 0.0
        %1022 = vmatprep.subr.mxu0 0.0
        %1023 = vmatpush1.msra.mxu0 0.0
        %1024 = vmatprep.subr.mxu0 0.0
        %1025 = vmatpush1.msra.mxu0 0.0
        %1026 = vmatprep.subr.mxu0 0.0
        %1027 = vmatpush1.msra.mxu0 0.0
        %1028 = vmatprep.subr.mxu0 0.0
        %1029 = vmatpush1.msra.mxu0 0.0
        %1030 = vmatprep.subr.mxu0 0.0
        %1031 = vmatpush1.msra.mxu0 0.0
        %1032 = vmatprep.subr.mxu0 0.0
        %1033 = vmatpush1.msra.mxu0 0.0
        %1034 = vmatprep.subr.mxu0 0.0
        %1035 = vmatpush1.msra.mxu0 0.0
        %1036 = vmatprep.subr.mxu0 0.0
        %1037 = vmatpush1.msra.mxu0 0.0
        %1038 = vmatprep.subr.mxu0 0.0
        %1039 = vmatpush1.msra.mxu0 0.0
        %1040 = vmatprep.subr.mxu0 0.0
        %1041 = vmatpush1.msra.mxu0 0.0
        %1042 = vmatprep.subr.mxu0 0.0
        %1043 = vmatpush1.msra.mxu0 0.0
        %1044 = vmatprep.subr.mxu0 0.0
        %1045 = vmatpush1.msra.mxu0 0.0
        %1046 = vmatprep.subr.mxu0 0.0
        %1047 = vmatpush1.msra.mxu0 0.0
        %1048 = vmatprep.subr.mxu0 0.0
        %1049 = vmatpush1.msra.mxu0 0.0
        %1050 = vmatprep.subr.mxu0 0.0
        %1051 = vmatpush1.msra.mxu0 0.0
        %1052 = vmatprep.subr.mxu0 0.0
        %1053 = vmatpush1.msra.mxu0 0.0
        %1054 = vmatprep.subr.mxu0 0.0
        %1055 = vmatpush1.msra.mxu0 0.0
        %1056 = vmatprep.subr.mxu0 0.0
        %1057 = vmatpush1.msra.mxu0 0.0
        %1058 = vmatprep.subr.mxu0 0.0
        %1059 = vmatpush1.msra.mxu0 0.0
        %1060 = vmatprep.subr.mxu0 0.0
        %1061 = vmatpush1.msra.mxu0 0.0
        %1062 = vmatprep.subr.mxu0 0.0
        %1063 = vmatpush1.msra.mxu0 0.0
        %1064 = vmatprep.mubr.f32.mxu0 0.0
        %1065 = vmatmul.mubr.f32.gmra.mrb[0].mxu0 %v998
        %v1066 = vpop.f32.mrb[0].mxu0
        %v1067 = vadd.f32 0.0, %v1066
        %v1068 = vpop.f32.mrb[0].mxu0
        %v1069 = vadd.f32 0.0, %v1068
        %1070 = vdwg.mxu0
        %v1071 = vadd.f32 %v792, %v1067
        %v1072 = vadd.f32 %v794, %v1069
        %1073 = vmatprep.subr.mxu0 0.0
        %1074 = vmatpush1.msra.mxu0 %v580
        %1075 = vmatprep.subr.mxu0 0.0
        %1076 = vmatpush1.msra.mxu0 %v581
        %1077 = vmatprep.subr.mxu0 0.0
        %1078 = vmatpush1.msra.mxu0 %v582
        %1079 = vmatprep.subr.mxu0 0.0
        %1080 = vmatpush1.msra.mxu0 %v583
        %1081 = vmatprep.subr.mxu0 0.0
        %1082 = vmatpush1.msra.mxu0 %v584
        %1083 = vmatprep.subr.mxu0 0.0
        %1084 = vmatpush1.msra.mxu0 %v585
        %1085 = vmatprep.subr.mxu0 0.0
        %1086 = vmatpush1.msra.mxu0 %v586
        %1087 = vmatprep.subr.mxu0 0.0
        %1088 = vmatpush1.msra.mxu0 %v587
        %1089 = vmatprep.subr.mxu0 0.0
        %1090 = vmatpush1.msra.mxu0 %v588
        %1091 = vmatprep.subr.mxu0 0.0
        %1092 = vmatpush1.msra.mxu0 %v589
        %1093 = vmatprep.subr.mxu0 0.0
        %1094 = vmatpush1.msra.mxu0 %v590
        %1095 = vmatprep.subr.mxu0 0.0
        %1096 = vmatpush1.msra.mxu0 %v591
        %1097 = vmatprep.subr.mxu0 0.0
        %1098 = vmatpush1.msra.mxu0 %v592
        %1099 = vmatprep.subr.mxu0 0.0
        %1100 = vmatpush1.msra.mxu0 %v593
        %1101 = vmatprep.subr.mxu0 0.0
        %1102 = vmatpush1.msra.mxu0 %v594
        %1103 = vmatprep.subr.mxu0 0.0
        %1104 = vmatpush1.msra.mxu0 %v595
        %1105 = vmatprep.subr.mxu0 0.0
        %1106 = vmatpush1.msra.mxu0 %v596
        %1107 = vmatprep.subr.mxu0 0.0
        %1108 = vmatpush1.msra.mxu0 %v597
        %1109 = vmatprep.subr.mxu0 0.0
        %1110 = vmatpush1.msra.mxu0 %v598
        %1111 = vmatprep.subr.mxu0 0.0
        %1112 = vmatpush1.msra.mxu0 %v599
        %1113 = vmatprep.subr.mxu0 0.0
        %1114 = vmatpush1.msra.mxu0 %v600
        %1115 = vmatprep.subr.mxu0 0.0
        %1116 = vmatpush1.msra.mxu0 %v601
        %1117 = vmatprep.subr.mxu0 0.0
        %1118 = vmatpush1.msra.mxu0 %v602
        %1119 = vmatprep.subr.mxu0 0.0
        %1120 = vmatpush1.msra.mxu0 %v603
        %1121 = vmatprep.subr.mxu0 0.0
        %1122 = vmatpush1.msra.mxu0 %v604
        %1123 = vmatprep.subr.mxu0 0.0
        %1124 = vmatpush1.msra.mxu0 %v605
        %1125 = vmatprep.subr.mxu0 0.0
        %1126 = vmatpush1.msra.mxu0 %v606
        %1127 = vmatprep.subr.mxu0 0.0
        %1128 = vmatpush1.msra.mxu0 %v607
        %1129 = vmatprep.subr.mxu0 0.0
        %1130 = vmatpush1.msra.mxu0 %v608
        %1131 = vmatprep.subr.mxu0 0.0
        %1132 = vmatpush1.msra.mxu0 %v609
        %1133 = vmatprep.subr.mxu0 0.0
        %1134 = vmatpush1.msra.mxu0 %v610
        %1135 = vmatprep.subr.mxu0 0.0
        %1136 = vmatpush1.msra.mxu0 %v611
        %1137 = vmatprep.mubr.f32.mxu0 %v829
        %1138 = vmatmul.mubr.f32.gmra.mrb[0].mxu0 %v547
        %v1139 = vpop.f32.mrb[0].mxu0
        %v1140 = vadd.f32 0.0, %v1139
        %v1141 = vpop.f32.mrb[0].mxu0
        %1142 = vdwg.mxu0
        %s1143 = scalar_lea.vmem %s1, 8
        %v1144 = vld [vmem:[%s1143] sm:$0xf]
        %s1145 = scalar_lea.vmem %s2, 8
        %v1146 = vld [vmem:[%s1145] sm:$0xf]
        %1148 = vset.pattern.permute.xlu0 0
        %1149 = vperm.xlu0 %1148, %v1144
        %v1150 = vpop.permute.xlu0 %1149
        %v1152 = vmul.f32 %v1140, %v1150
        %1154 = vset.pattern.permute.xlu0 0
        %1155 = vperm.xlu0 %1154, %v1146
        %v1156 = vpop.permute.xlu0 %1155
        %v1158 = vadd.f32 %v1152, %v1156
        %v1159 = vmax.f32 %v1158, 0.0
        %s1160 = scalar_lea.vmem %s3, 16
        %v1161 = vld [vmem:[%s1160] sm:$0xff]
        %v1163 = vsel %vm716, %v1161, 0
        %v1166 = vsel %vm720, %v1159, 0
        %1168 = vmatprep.subr.mxu0 0.0
        %1169 = vmatpush1.msra.mxu0 %v1166
        %1170 = vmatprep.subr.mxu0 0.0
        %1171 = vmatpush1.msra.mxu0 0.0
        %1172 = vmatprep.subr.mxu0 0.0
        %1173 = vmatpush1.msra.mxu0 0.0
        %1174 = vmatprep.subr.mxu0 0.0
        %1175 = vmatpush1.msra.mxu0 0.0
        %1176 = vmatprep.subr.mxu0 0.0
        %1177 = vmatpush1.msra.mxu0 0.0
        %1178 = vmatprep.subr.mxu0 0.0
        %1179 = vmatpush1.msra.mxu0 0.0
        %1180 = vmatprep.subr.mxu0 0.0
        %1181 = vmatpush1.msra.mxu0 0.0
        %1182 = vmatprep.subr.mxu0 0.0
        %1183 = vmatpush1.msra.mxu0 0.0
        %1184 = vmatprep.subr.mxu0 0.0
        %1185 = vmatpush1.msra.mxu0 0.0
        %1186 = vmatprep.subr.mxu0 0.0
        %1187 = vmatpush1.msra.mxu0 0.0
        %1188 = vmatprep.subr.mxu0 0.0
        %1189 = vmatpush1.msra.mxu0 0.0
        %1190 = vmatprep.subr.mxu0 0.0
        %1191 = vmatpush1.msra.mxu0 0.0
        %1192 = vmatprep.subr.mxu0 0.0
        %1193 = vmatpush1.msra.mxu0 0.0
        %1194 = vmatprep.subr.mxu0 0.0
        %1195 = vmatpush1.msra.mxu0 0.0
        %1196 = vmatprep.subr.mxu0 0.0
        %1197 = vmatpush1.msra.mxu0 0.0
        %1198 = vmatprep.subr.mxu0 0.0
        %1199 = vmatpush1.msra.mxu0 0.0
        %1200 = vmatprep.subr.mxu0 0.0
        %1201 = vmatpush1.msra.mxu0 0.0
        %1202 = vmatprep.subr.mxu0 0.0
        %1203 = vmatpush1.msra.mxu0 0.0
        %1204 = vmatprep.subr.mxu0 0.0
        %1205 = vmatpush1.msra.mxu0 0.0
        %1206 = vmatprep.subr.mxu0 0.0
        %1207 = vmatpush1.msra.mxu0 0.0
        %1208 = vmatprep.subr.mxu0 0.0
        %1209 = vmatpush1.msra.mxu0 0.0
        %1210 = vmatprep.subr.mxu0 0.0
        %1211 = vmatpush1.msra.mxu0 0.0
        %1212 = vmatprep.subr.mxu0 0.0
        %1213 = vmatpush1.msra.mxu0 0.0
        %1214 = vmatprep.subr.mxu0 0.0
        %1215 = vmatpush1.msra.mxu0 0.0
        %1216 = vmatprep.subr.mxu0 0.0
        %1217 = vmatpush1.msra.mxu0 0.0
        %1218 = vmatprep.subr.mxu0 0.0
        %1219 = vmatpush1.msra.mxu0 0.0
        %1220 = vmatprep.subr.mxu0 0.0
        %1221 = vmatpush1.msra.mxu0 0.0
        %1222 = vmatprep.subr.mxu0 0.0
        %1223 = vmatpush1.msra.mxu0 0.0
        %1224 = vmatprep.subr.mxu0 0.0
        %1225 = vmatpush1.msra.mxu0 0.0
        %1226 = vmatprep.subr.mxu0 0.0
        %1227 = vmatpush1.msra.mxu0 0.0
        %1228 = vmatprep.subr.mxu0 0.0
        %1229 = vmatpush1.msra.mxu0 0.0
        %1230 = vmatprep.subr.mxu0 0.0
        %1231 = vmatpush1.msra.mxu0 0.0
        %1232 = vmatprep.mubr.f32.mxu0 0.0
        %1233 = vmatmul.mubr.f32.gmra.mrb[0].mxu0 %v1163
        %v1234 = vpop.f32.mrb[0].mxu0
        %v1235 = vadd.f32 0.0, %v1234
        %v1236 = vpop.f32.mrb[0].mxu0
        %1237 = vdwg.mxu0
        %vm1238 = vcmask 130048
        %v1240 = vsel %vm1238, %v1235, 0
        %1242 = vmatprep.subr.mxu0 %v661
        %1243 = vmatpush1.msra.mxu0 %v660
        %1244 = vmatprep.subr.mxu0 %v663
        %1245 = vmatpush1.msra.mxu0 %v662
        %1246 = vmatprep.subr.mxu0 0.0
        %1247 = vmatpush1.msra.mxu0 0.0
        %1248 = vmatprep.subr.mxu0 0.0
        %1249 = vmatpush1.msra.mxu0 0.0
        %1250 = vmatprep.subr.mxu0 0.0
        %1251 = vmatpush1.msra.mxu0 0.0
        %1252 = vmatprep.subr.mxu0 0.0
        %1253 = vmatpush1.msra.mxu0 0.0
        %1254 = vmatprep.subr.mxu0 0.0
        %1255 = vmatpush1.msra.mxu0 0.0
        %1256 = vmatprep.subr.mxu0 0.0
        %1257 = vmatpush1.msra.mxu0 0.0
        %1258 = vmatprep.subr.mxu0 0.0
        %1259 = vmatpush1.msra.mxu0 0.0
        %1260 = vmatprep.subr.mxu0 0.0
        %1261 = vmatpush1.msra.mxu0 0.0
        %1262 = vmatprep.subr.mxu0 0.0
        %1263 = vmatpush1.msra.mxu0 0.0
        %1264 = vmatprep.subr.mxu0 0.0
        %1265 = vmatpush1.msra.mxu0 0.0
        %1266 = vmatprep.subr.mxu0 0.0
        %1267 = vmatpush1.msra.mxu0 0.0
        %1268 = vmatprep.subr.mxu0 0.0
        %1269 = vmatpush1.msra.mxu0 0.0
        %1270 = vmatprep.subr.mxu0 0.0
        %1271 = vmatpush1.msra.mxu0 0.0
        %1272 = vmatprep.subr.mxu0 0.0
        %1273 = vmatpush1.msra.mxu0 0.0
        %1274 = vmatprep.subr.mxu0 0.0
        %1275 = vmatpush1.msra.mxu0 0.0
        %1276 = vmatprep.subr.mxu0 0.0
        %1277 = vmatpush1.msra.mxu0 0.0
        %1278 = vmatprep.subr.mxu0 0.0
        %1279 = vmatpush1.msra.mxu0 0.0
        %1280 = vmatprep.subr.mxu0 0.0
        %1281 = vmatpush1.msra.mxu0 0.0
        %1282 = vmatprep.subr.mxu0 0.0
        %1283 = vmatpush1.msra.mxu0 0.0
        %1284 = vmatprep.subr.mxu0 0.0
        %1285 = vmatpush1.msra.mxu0 0.0
        %1286 = vmatprep.subr.mxu0 0.0
        %1287 = vmatpush1.msra.mxu0 0.0
        %1288 = vmatprep.subr.mxu0 0.0
        %1289 = vmatpush1.msra.mxu0 0.0
        %1290 = vmatprep.subr.mxu0 0.0
        %1291 = vmatpush1.msra.mxu0 0.0
        %1292 = vmatprep.subr.mxu0 0.0
        %1293 = vmatpush1.msra.mxu0 0.0
        %1294 = vmatprep.subr.mxu0 0.0
        %1295 = vmatpush1.msra.mxu0 0.0
        %1296 = vmatprep.subr.mxu0 0.0
        %1297 = vmatpush1.msra.mxu0 0.0
        %1298 = vmatprep.subr.mxu0 0.0
        %1299 = vmatpush1.msra.mxu0 0.0
        %1300 = vmatprep.subr.mxu0 0.0
        %1301 = vmatpush1.msra.mxu0 0.0
        %1302 = vmatprep.subr.mxu0 0.0
        %1303 = vmatpush1.msra.mxu0 0.0
        %1304 = vmatprep.subr.mxu0 0.0
        %1305 = vmatpush1.msra.mxu0 0.0
        %1306 = vmatprep.mubr.f32.mxu0 0.0
        %1307 = vmatmul.mubr.f32.gmra.mrb[0].mxu0 %v1240
        %v1308 = vpop.f32.mrb[0].mxu0
        %v1309 = vadd.f32 0.0, %v1308
        %v1310 = vpop.f32.mrb[0].mxu0
        %v1311 = vadd.f32 0.0, %v1310
        %1312 = vdwg.mxu0
        %v1313 = vadd.f32 %v792, %v1309
        %v1314 = vadd.f32 %v794, %v1311
        %1315 = vmatprep.subr.mxu0 0.0
        %1316 = vmatpush1.msra.mxu0 %v612
        %1317 = vmatprep.subr.mxu0 0.0
        %1318 = vmatpush1.msra.mxu0 %v613
        %1319 = vmatprep.subr.mxu0 0.0
        %1320 = vmatpush1.msra.mxu0 %v614
        %1321 = vmatprep.subr.mxu0 0.0
        %1322 = vmatpush1.msra.mxu0 %v615
        %1323 = vmatprep.subr.mxu0 0.0
        %1324 = vmatpush1.msra.mxu0 %v616
        %1325 = vmatprep.subr.mxu0 0.0
        %1326 = vmatpush1.msra.mxu0 %v617
        %1327 = vmatprep.subr.mxu0 0.0
        %1328 = vmatpush1.msra.mxu0 %v618
        %1329 = vmatprep.subr.mxu0 0.0
        %1330 = vmatpush1.msra.mxu0 %v619
        %1331 = vmatprep.subr.mxu0 0.0
        %1332 = vmatpush1.msra.mxu0 %v620
        %1333 = vmatprep.subr.mxu0 0.0
        %1334 = vmatpush1.msra.mxu0 %v621
        %1335 = vmatprep.subr.mxu0 0.0
        %1336 = vmatpush1.msra.mxu0 %v622
        %1337 = vmatprep.subr.mxu0 0.0
        %1338 = vmatpush1.msra.mxu0 %v623
        %1339 = vmatprep.subr.mxu0 0.0
        %1340 = vmatpush1.msra.mxu0 %v624
        %1341 = vmatprep.subr.mxu0 0.0
        %1342 = vmatpush1.msra.mxu0 %v625
        %1343 = vmatprep.subr.mxu0 0.0
        %1344 = vmatpush1.msra.mxu0 %v626
        %1345 = vmatprep.subr.mxu0 0.0
        %1346 = vmatpush1.msra.mxu0 %v627
        %1347 = vmatprep.subr.mxu0 0.0
        %1348 = vmatpush1.msra.mxu0 %v628
        %1349 = vmatprep.subr.mxu0 0.0
        %1350 = vmatpush1.msra.mxu0 %v629
        %1351 = vmatprep.subr.mxu0 0.0
        %1352 = vmatpush1.msra.mxu0 %v630
        %1353 = vmatprep.subr.mxu0 0.0
        %1354 = vmatpush1.msra.mxu0 %v631
        %1355 = vmatprep.subr.mxu0 0.0
        %1356 = vmatpush1.msra.mxu0 %v632
        %1357 = vmatprep.subr.mxu0 0.0
        %1358 = vmatpush1.msra.mxu0 %v633
        %1359 = vmatprep.subr.mxu0 0.0
        %1360 = vmatpush1.msra.mxu0 %v634
        %1361 = vmatprep.subr.mxu0 0.0
        %1362 = vmatpush1.msra.mxu0 %v635
        %1363 = vmatprep.subr.mxu0 0.0
        %1364 = vmatpush1.msra.mxu0 %v636
        %1365 = vmatprep.subr.mxu0 0.0
        %1366 = vmatpush1.msra.mxu0 %v637
        %1367 = vmatprep.subr.mxu0 0.0
        %1368 = vmatpush1.msra.mxu0 %v638
        %1369 = vmatprep.subr.mxu0 0.0
        %1370 = vmatpush1.msra.mxu0 %v639
        %1371 = vmatprep.subr.mxu0 0.0
        %1372 = vmatpush1.msra.mxu0 %v640
        %1373 = vmatprep.subr.mxu0 0.0
        %1374 = vmatpush1.msra.mxu0 %v641
        %1375 = vmatprep.subr.mxu0 0.0
        %1376 = vmatpush1.msra.mxu0 %v642
        %1377 = vmatprep.subr.mxu0 0.0
        %1378 = vmatpush1.msra.mxu0 %v643
        %1379 = vmatprep.mubr.f32.mxu0 %v829
        %1380 = vmatmul.mubr.f32.gmra.mrb[0].mxu0 %v547
        %v1381 = vpop.f32.mrb[0].mxu0
        %v1382 = vadd.f32 0.0, %v1381
        %v1383 = vpop.f32.mrb[0].mxu0
        %1384 = vdwg.mxu0
        %s1385 = scalar_lea.vmem %s1, 12
        %v1386 = vld [vmem:[%s1385] sm:$0xf]
        %s1387 = scalar_lea.vmem %s2, 12
        %v1388 = vld [vmem:[%s1387] sm:$0xf]
        %1390 = vset.pattern.permute.xlu0 0
        %1391 = vperm.xlu0 %1390, %v1386
        %v1392 = vpop.permute.xlu0 %1391
        %v1394 = vmul.f32 %v1382, %v1392
        %1396 = vset.pattern.permute.xlu0 0
        %1397 = vperm.xlu0 %1396, %v1388
        %v1398 = vpop.permute.xlu0 %1397
        %v1400 = vadd.f32 %v1394, %v1398
        %v1401 = vmax.f32 %v1400, 0.0
        %s1402 = scalar_lea.vmem %s3, 24
        %v1403 = vld [vmem:[%s1402] sm:$0xff]
        %v1405 = vsel %vm716, %v1403, 0
        %v1408 = vsel %vm720, %v1401, 0
        %1410 = vmatprep.subr.mxu0 0.0
        %1411 = vmatpush1.msra.mxu0 %v1408
        %1412 = vmatprep.subr.mxu0 0.0
        %1413 = vmatpush1.msra.mxu0 0.0
        %1414 = vmatprep.subr.mxu0 0.0
        %1415 = vmatpush1.msra.mxu0 0.0
        %1416 = vmatprep.subr.mxu0 0.0
        %1417 = vmatpush1.msra.mxu0 0.0
        %1418 = vmatprep.subr.mxu0 0.0
        %1419 = vmatpush1.msra.mxu0 0.0
        %1420 = vmatprep.subr.mxu0 0.0
        %1421 = vmatpush1.msra.mxu0 0.0
        %1422 = vmatprep.subr.mxu0 0.0
        %1423 = vmatpush1.msra.mxu0 0.0
        %1424 = vmatprep.subr.mxu0 0.0
        %1425 = vmatpush1.msra.mxu0 0.0
        %1426 = vmatprep.subr.mxu0 0.0
        %1427 = vmatpush1.msra.mxu0 0.0
        %1428 = vmatprep.subr.mxu0 0.0
        %1429 = vmatpush1.msra.mxu0 0.0
        %1430 = vmatprep.subr.mxu0 0.0
        %1431 = vmatpush1.msra.mxu0 0.0
        %1432 = vmatprep.subr.mxu0 0.0
        %1433 = vmatpush1.msra.mxu0 0.0
        %1434 = vmatprep.subr.mxu0 0.0
        %1435 = vmatpush1.msra.mxu0 0.0
        %1436 = vmatprep.subr.mxu0 0.0
        %1437 = vmatpush1.msra.mxu0 0.0
        %1438 = vmatprep.subr.mxu0 0.0
        %1439 = vmatpush1.msra.mxu0 0.0
        %1440 = vmatprep.subr.mxu0 0.0
        %1441 = vmatpush1.msra.mxu0 0.0
        %1442 = vmatprep.subr.mxu0 0.0
        %1443 = vmatpush1.msra.mxu0 0.0
        %1444 = vmatprep.subr.mxu0 0.0
        %1445 = vmatpush1.msra.mxu0 0.0
        %1446 = vmatprep.subr.mxu0 0.0
        %1447 = vmatpush1.msra.mxu0 0.0
        %1448 = vmatprep.subr.mxu0 0.0
        %1449 = vmatpush1.msra.mxu0 0.0
        %1450 = vmatprep.subr.mxu0 0.0
        %1451 = vmatpush1.msra.mxu0 0.0
        %1452 = vmatprep.subr.mxu0 0.0
        %1453 = vmatpush1.msra.mxu0 0.0
        %1454 = vmatprep.subr.mxu0 0.0
        %1455 = vmatpush1.msra.mxu0 0.0
        %1456 = vmatprep.subr.mxu0 0.0
        %1457 = vmatpush1.msra.mxu0 0.0
        %1458 = vmatprep.subr.mxu0 0.0
        %1459 = vmatpush1.msra.mxu0 0.0
        %1460 = vmatprep.subr.mxu0 0.0
        %1461 = vmatpush1.msra.mxu0 0.0
        %1462 = vmatprep.subr.mxu0 0.0
        %1463 = vmatpush1.msra.mxu0 0.0
        %1464 = vmatprep.subr.mxu0 0.0
        %1465 = vmatpush1.msra.mxu0 0.0
        %1466 = vmatprep.subr.mxu0 0.0
        %1467 = vmatpush1.msra.mxu0 0.0
        %1468 = vmatprep.subr.mxu0 0.0
        %1469 = vmatpush1.msra.mxu0 0.0
        %1470 = vmatprep.subr.mxu0 0.0
        %1471 = vmatpush1.msra.mxu0 0.0
        %1472 = vmatprep.subr.mxu0 0.0
        %1473 = vmatpush1.msra.mxu0 0.0
        %1474 = vmatprep.mubr.f32.mxu0 0.0
        %1475 = vmatmul.mubr.f32.gmra.mrb[0].mxu0 %v1405
        %v1476 = vpop.f32.mrb[0].mxu0
        %v1477 = vadd.f32 0.0, %v1476
        %v1478 = vpop.f32.mrb[0].mxu0
        %1479 = vdwg.mxu0
        %v1481 = vcombine.high %v664, %v664
        %v1483 = vsel %vm716, %v1477, 0
        %v1485 = vsel %vm720, %v664, 0
        %v1487 = vsel %vm720, %v1481, 0
        %1489 = vmatprep.subr.mxu0 %v1487
        %1490 = vmatpush1.msra.mxu0 %v1485
        %1491 = vmatprep.subr.mxu0 0.0
        %1492 = vmatpush1.msra.mxu0 0.0
        %1493 = vmatprep.subr.mxu0 0.0
        %1494 = vmatpush1.msra.mxu0 0.0
        %1495 = vmatprep.subr.mxu0 0.0
        %1496 = vmatpush1.msra.mxu0 0.0
        %1497 = vmatprep.subr.mxu0 0.0
        %1498 = vmatpush1.msra.mxu0 0.0
        %1499 = vmatprep.subr.mxu0 0.0
        %1500 = vmatpush1.msra.mxu0 0.0
        %1501 = vmatprep.subr.mxu0 0.0
        %1502 = vmatpush1.msra.mxu0 0.0
        %1503 = vmatprep.subr.mxu0 0.0
        %1504 = vmatpush1.msra.mxu0 0.0
        %1505 = vmatprep.subr.mxu0 0.0
        %1506 = vmatpush1.msra.mxu0 0.0
        %1507 = vmatprep.subr.mxu0 0.0
        %1508 = vmatpush1.msra.mxu0 0.0
        %1509 = vmatprep.subr.mxu0 0.0
        %1510 = vmatpush1.msra.mxu0 0.0
        %1511 = vmatprep.subr.mxu0 0.0
        %1512 = vmatpush1.msra.mxu0 0.0
        %1513 = vmatprep.subr.mxu0 0.0
        %1514 = vmatpush1.msra.mxu0 0.0
        %1515 = vmatprep.subr.mxu0 0.0
        %1516 = vmatpush1.msra.mxu0 0.0
        %1517 = vmatprep.subr.mxu0 0.0
        %1518 = vmatpush1.msra.mxu0 0.0
        %1519 = vmatprep.subr.mxu0 0.0
        %1520 = vmatpush1.msra.mxu0 0.0
        %1521 = vmatprep.subr.mxu0 0.0
        %1522 = vmatpush1.msra.mxu0 0.0
        %1523 = vmatprep.subr.mxu0 0.0
        %1524 = vmatpush1.msra.mxu0 0.0
        %1525 = vmatprep.subr.mxu0 0.0
        %1526 = vmatpush1.msra.mxu0 0.0
        %1527 = vmatprep.subr.mxu0 0.0
        %1528 = vmatpush1.msra.mxu0 0.0
        %1529 = vmatprep.subr.mxu0 0.0
        %1530 = vmatpush1.msra.mxu0 0.0
        %1531 = vmatprep.subr.mxu0 0.0
        %1532 = vmatpush1.msra.mxu0 0.0
        %1533 = vmatprep.subr.mxu0 0.0
        %1534 = vmatpush1.msra.mxu0 0.0
        %1535 = vmatprep.subr.mxu0 0.0
        %1536 = vmatpush1.msra.mxu0 0.0
        %1537 = vmatprep.subr.mxu0 0.0
        %1538 = vmatpush1.msra.mxu0 0.0
        %1539 = vmatprep.subr.mxu0 0.0
        %1540 = vmatpush1.msra.mxu0 0.0
        %1541 = vmatprep.subr.mxu0 0.0
        %1542 = vmatpush1.msra.mxu0 0.0
        %1543 = vmatprep.subr.mxu0 0.0
        %1544 = vmatpush1.msra.mxu0 0.0
        %1545 = vmatprep.subr.mxu0 0.0
        %1546 = vmatpush1.msra.mxu0 0.0
        %1547 = vmatprep.subr.mxu0 0.0
        %1548 = vmatpush1.msra.mxu0 0.0
        %1549 = vmatprep.subr.mxu0 0.0
        %1550 = vmatpush1.msra.mxu0 0.0
        %1551 = vmatprep.subr.mxu0 0.0
        %1552 = vmatpush1.msra.mxu0 0.0
        %1553 = vmatprep.mubr.f32.mxu0 0.0
        %1554 = vmatmul.mubr.f32.gmra.mrb[0].mxu0 %v1483
        %v1555 = vpop.f32.mrb[0].mxu0
        %v1556 = vadd.f32 0.0, %v1555
        %v1557 = vpop.f32.mrb[0].mxu0
        %v1558 = vadd.f32 0.0, %v1557
        %1559 = vdwg.mxu0
        %v1560 = vadd.f32 %v792, %v1556
        %v1561 = vadd.f32 %v794, %v1558
        %v1562 = vsel %vm720, %v547, 0.0
        %v1563 = vsel %vm720, %v829, 0.0
        %v1564 = vadd.f32 %v1562, %v1563
        %1565 = vadd.xlane.f32.xlu0 %v1564
        %v1566 = vpop.xlane.xlu0 %1565
        %v1567 = vrcp.pop 256.0
        %v1568 = vmul.f32 %v1566, %v1567
        %s1569 = scalar_lea.vmem %s1, 16
        %v1570 = vld [vmem:[%s1569] sm:$0xf]
        %s1571 = scalar_lea.vmem %s2, 16
        %v1572 = vld [vmem:[%s1571] sm:$0xf]
        %v1573 = vmul.f32 %v1568, %v1570
        %v1574 = vadd.f32 %v1573, %v1572
        %v1575 = vmax.f32 %v1574, 0.0
        %1577 = vset.pattern.permute.xlu0 0
        %1578 = vperm.xlu0 %1577, %v1575
        %v1579 = vpop.permute.xlu0 %1578
        %s1580 = scalar_lea.vmem %s3, 32
        %v1581 = vld [vmem:[%s1580] sm:$0xff]
        %v1583 = vsel %vm716, %v1581, 0
        %v1585 = vsel %vm720, %v1579, 0
        %1587 = vmatprep.subr.mxu0 %v1585
        %1588 = vmatpush1.msra.mxu0 %v1585
        %1589 = vmatprep.subr.mxu0 0.0
        %1590 = vmatpush1.msra.mxu0 0.0
        %1591 = vmatprep.subr.mxu0 0.0
        %1592 = vmatpush1.msra.mxu0 0.0
        %1593 = vmatprep.subr.mxu0 0.0
        %1594 = vmatpush1.msra.mxu0 0.0
        %1595 = vmatprep.subr.mxu0 0.0
        %1596 = vmatpush1.msra.mxu0 0.0
        %1597 = vmatprep.subr.mxu0 0.0
        %1598 = vmatpush1.msra.mxu0 0.0
        %1599 = vmatprep.subr.mxu0 0.0
        %1600 = vmatpush1.msra.mxu0 0.0
        %1601 = vmatprep.subr.mxu0 0.0
        %1602 = vmatpush1.msra.mxu0 0.0
        %1603 = vmatprep.subr.mxu0 0.0
        %1604 = vmatpush1.msra.mxu0 0.0
        %1605 = vmatprep.subr.mxu0 0.0
        %1606 = vmatpush1.msra.mxu0 0.0
        %1607 = vmatprep.subr.mxu0 0.0
        %1608 = vmatpush1.msra.mxu0 0.0
        %1609 = vmatprep.subr.mxu0 0.0
        %1610 = vmatpush1.msra.mxu0 0.0
        %1611 = vmatprep.subr.mxu0 0.0
        %1612 = vmatpush1.msra.mxu0 0.0
        %1613 = vmatprep.subr.mxu0 0.0
        %1614 = vmatpush1.msra.mxu0 0.0
        %1615 = vmatprep.subr.mxu0 0.0
        %1616 = vmatpush1.msra.mxu0 0.0
        %1617 = vmatprep.subr.mxu0 0.0
        %1618 = vmatpush1.msra.mxu0 0.0
        %1619 = vmatprep.subr.mxu0 0.0
        %1620 = vmatpush1.msra.mxu0 0.0
        %1621 = vmatprep.subr.mxu0 0.0
        %1622 = vmatpush1.msra.mxu0 0.0
        %1623 = vmatprep.subr.mxu0 0.0
        %1624 = vmatpush1.msra.mxu0 0.0
        %1625 = vmatprep.subr.mxu0 0.0
        %1626 = vmatpush1.msra.mxu0 0.0
        %1627 = vmatprep.subr.mxu0 0.0
        %1628 = vmatpush1.msra.mxu0 0.0
        %1629 = vmatprep.subr.mxu0 0.0
        %1630 = vmatpush1.msra.mxu0 0.0
        %1631 = vmatprep.subr.mxu0 0.0
        %1632 = vmatpush1.msra.mxu0 0.0
        %1633 = vmatprep.subr.mxu0 0.0
        %1634 = vmatpush1.msra.mxu0 0.0
        %1635 = vmatprep.subr.mxu0 0.0
        %1636 = vmatpush1.msra.mxu0 0.0
        %1637 = vmatprep.subr.mxu0 0.0
        %1638 = vmatpush1.msra.mxu0 0.0
        %1639 = vmatprep.subr.mxu0 0.0
        %1640 = vmatpush1.msra.mxu0 0.0
        %1641 = vmatprep.subr.mxu0 0.0
        %1642 = vmatpush1.msra.mxu0 0.0
        %1643 = vmatprep.subr.mxu0 0.0
        %1644 = vmatpush1.msra.mxu0 0.0
        %1645 = vmatprep.subr.mxu0 0.0
        %1646 = vmatpush1.msra.mxu0 0.0
        %1647 = vmatprep.subr.mxu0 0.0
        %1648 = vmatpush1.msra.mxu0 0.0
        %1649 = vmatprep.subr.mxu0 0.0
        %1650 = vmatpush1.msra.mxu0 0.0
        %1651 = vmatprep.mubr.f32.mxu0 0.0
        %1652 = vmatmul.mubr.f32.gmra.mrb[0].mxu0 %v1583
        %v1653 = vpop.f32.mrb[0].mxu0
        %v1654 = vadd.f32 0.0, %v1653
        %v1655 = vpop.f32.mrb[0].mxu0
        %v1656 = vadd.f32 0.0, %v1655
        %1657 = vdwg.mxu0
        %v1658 = vadd.f32 %v792, %v1654
        %v1659 = vadd.f32 %v794, %v1656
        %1661 = vset.pattern.permute.xlu0 0
        %1662 = vperm.xlu0 %1661, %v665
        %v1663 = vpop.permute.xlu0 %1662
        %1666 = vset.pattern.permute.xlu0 0
        %1667 = vperm.xlu0 %1666, %v666
        %v1668 = vpop.permute.xlu0 %1667
        %1671 = vset.pattern.permute.xlu0 0
        %1672 = vperm.xlu0 %1671, %v667
        %v1673 = vpop.permute.xlu0 %1672
        %1676 = vset.pattern.permute.xlu0 0
        %1677 = vperm.xlu0 %1676, %v668
        %v1678 = vpop.permute.xlu0 %1677
        %v1680 = vmul.f32 %v1071, %v1663
        %v1681 = vmul.f32 %v1072, %v1663
        %v1682 = vmul.f32 %v1313, %v1668
        %v1683 = vmul.f32 %v1314, %v1668
        %v1684 = vmul.f32 %v1560, %v1673
        %v1685 = vmul.f32 %v1561, %v1673
        %v1686 = vmul.f32 %v1658, %v1678
        %v1687 = vmul.f32 %v1659, %v1678
        %1689 = vset.pattern.permute.xlu0 0
        %1690 = vperm.xlu0 %1689, %v669
        %v1691 = vpop.permute.xlu0 %1690
        %1694 = vset.pattern.permute.xlu0 0
        %1695 = vperm.xlu0 %1694, %v670
        %v1696 = vpop.permute.xlu0 %1695
        %1699 = vset.pattern.permute.xlu0 0
        %1700 = vperm.xlu0 %1699, %v671
        %v1701 = vpop.permute.xlu0 %1700
        %1704 = vset.pattern.permute.xlu0 0
        %1705 = vperm.xlu0 %1704, %v672
        %v1706 = vpop.permute.xlu0 %1705
        %v1708 = vadd.f32 %v1680, %v1691
        %v1709 = vadd.f32 %v1681, %v1691
        %v1710 = vadd.f32 %v1682, %v1696
        %v1711 = vadd.f32 %v1683, %v1696
        %v1712 = vadd.f32 %v1684, %v1701
        %v1713 = vadd.f32 %v1685, %v1701
        %v1714 = vadd.f32 %v1686, %v1706
        %v1715 = vadd.f32 %v1687, %v1706
        %v1716 = vmax.f32 %v1708, 0.0
        %v1717 = vmax.f32 %v1709, 0.0
        %v1718 = vmax.f32 %v1710, 0.0
        %v1719 = vmax.f32 %v1711, 0.0
        %v1720 = vmax.f32 %v1712, 0.0
        %v1721 = vmax.f32 %v1713, 0.0
        %v1722 = vmax.f32 %v1714, 0.0
        %v1723 = vmax.f32 %v1715, 0.0
        %v1724 = vlaneseq
        %v1725 = vand.u32 %v1724, 127
        %v1726 = vadd.s32 %v1725, 128
        %vm1727 = vcmp.lt.s32.totalorder %v1725, 0
        %v1728 = vsub.s32 0, %v1725
        %v1729 = vsel %vm1727, %v1728, %v1725
        %v1730 = vshrl.u32 %v1729, 4
        %v1731 = vand.u32 %v1729, 15
        %v1732 = vsub.s32 0, %v1731
        %v1733 = vsel %vm1727, %v1732, %v1731
        %vm1734 = vcmp.lt.s32.totalorder %v1726, 0
        %v1735 = vsub.s32 0, %v1726
        %v1736 = vsel %vm1734, %v1735, %v1726
        %v1737 = vshrl.u32 %v1736, 4
        %v1738 = vand.u32 %v1736, 15
        %v1739 = vsub.s32 0, %v1738
        %v1740 = vsel %vm1734, %v1739, %v1738
        %vm1741 = vcmp.ne.s32.totalorder %v1733, 0
        %vm1742 = vcmp.ne.s32.totalorder %v1740, 0
        %vm1743 = vcmp.lt.s32.totalorder %v1733, 0
        %vm1744 = vcmp.lt.s32.totalorder %v1740, 0
        %vm1745 = vmand %vm1743, %vm1741
        %vm1746 = vmand %vm1744, %vm1742
        %v1747 = vadd.s32 %v1733, 16
        %v1748 = vadd.s32 %v1740, 16
        %v1749 = vsel %vm1745, %v1747, %v1733
        %v1750 = vsel %vm1746, %v1748, %v1740
        %vm1751 = vcmp.ne.s32.totalorder %v1749, 0
        %vm1752 = vcmp.ne.s32.totalorder %v1750, 0
        %v1753 = vsel %vm1751, 1.0, 0.0
        %v1754 = vsel %vm1752, 1.0, 0.0
        %vm1755 = vcmp.ne.s32.totalorder %v1749, 15
        %vm1756 = vcmp.ne.s32.totalorder %v1750, 15
        %v1757 = vsel %vm1755, 1.0, 0.0
        %v1758 = vsel %vm1756, 1.0, 0.0
        %1767 = vrot.lane.b32.xlu0 %v1716, 17
        %v1768 = vpop.permute.xlu0 %1767
        %1769 = vrot.lane.b32.xlu0 %v1717, 17
        %v1770 = vpop.permute.xlu0 %1769
        %1771 = vrot.lane.b32.xlu0 %v1718, 17
        %v1772 = vpop.permute.xlu0 %1771
        %1773 = vrot.lane.b32.xlu0 %v1719, 17
        %v1774 = vpop.permute.xlu0 %1773
        %1775 = vrot.lane.b32.xlu0 %v1720, 17
        %v1776 = vpop.permute.xlu0 %1775
        %1777 = vrot.lane.b32.xlu0 %v1721, 17
        %v1778 = vpop.permute.xlu0 %1777
        %1779 = vrot.lane.b32.xlu0 %v1722, 17
        %v1780 = vpop.permute.xlu0 %1779
        %1781 = vrot.lane.b32.xlu0 %v1723, 17
        %v1782 = vpop.permute.xlu0 %1781
        %vm1783 = vcmask 138240
        %v1784 = vsel %vm1783, %v1768, %v1770
        %v1785 = vsel %vm1783, %v1772, %v1774
        %v1786 = vsel %vm1783, %v1776, %v1778
        %v1787 = vsel %vm1783, %v1780, %v1782
        %v1800 = vsel %vm1783, 0.0, %v1768
        %v1801 = vsel %vm1783, 0.0, %v1772
        %v1802 = vsel %vm1783, 0.0, %v1776
        %v1803 = vsel %vm1783, 0.0, %v1780
        %v1804 = vsel %vm1783, %v1770, 0.0
        %v1805 = vsel %vm1783, %v1774, 0.0
        %v1806 = vsel %vm1783, %v1778, 0.0
        %v1807 = vsel %vm1783, %v1782, 0.0
        %v1808 = vmul.f32 %v1800, %v1753
        %v1809 = vmul.f32 %v1784, %v1754
        %v1810 = vmul.f32 %v1801, %v1753
        %v1811 = vmul.f32 %v1785, %v1754
        %v1812 = vmul.f32 %v1802, %v1753
        %v1813 = vmul.f32 %v1786, %v1754
        %v1814 = vmul.f32 %v1803, %v1753
        %v1815 = vmul.f32 %v1787, %v1754
        %1818 = vrot.lane.b32.xlu0 %v1757, 2
        %v1819 = vpop.permute.xlu0 %1818
        %1820 = vrot.lane.b32.xlu0 %v1758, 2
        %v1821 = vpop.permute.xlu0 %1820
        %vm1822 = vcmask 15360
        %v1823 = vsel %vm1822, %v1819, %v1821
        %v1827 = vmul.f32 %v1800, %v1819
        %v1828 = vmul.f32 %v1784, %v1823
        %v1829 = vmul.f32 %v1804, %v1821
        %v1830 = vmul.f32 %v1801, %v1819
        %v1831 = vmul.f32 %v1785, %v1823
        %v1832 = vmul.f32 %v1805, %v1821
        %v1833 = vmul.f32 %v1802, %v1819
        %v1834 = vmul.f32 %v1786, %v1823
        %v1835 = vmul.f32 %v1806, %v1821
        %v1836 = vmul.f32 %v1803, %v1819
        %v1837 = vmul.f32 %v1787, %v1823
        %v1838 = vmul.f32 %v1807, %v1821
        %1841 = vrot.lane.b32.xlu0 %v1753, 16
        %v1842 = vpop.permute.xlu0 %1841
        %1843 = vrot.lane.b32.xlu0 %v1754, 16
        %v1844 = vpop.permute.xlu0 %1843
        %v1845 = vsel %vm1238, %v1842, %v1844
        %v1849 = vmul.f32 %v1800, %v1842
        %v1850 = vmul.f32 %v1784, %v1845
        %v1851 = vmul.f32 %v1804, %v1844
        %v1852 = vmul.f32 %v1801, %v1842
        %v1853 = vmul.f32 %v1785, %v1845
        %v1854 = vmul.f32 %v1805, %v1844
        %v1855 = vmul.f32 %v1802, %v1842
        %v1856 = vmul.f32 %v1786, %v1845
        %v1857 = vmul.f32 %v1806, %v1844
        %v1858 = vmul.f32 %v1803, %v1842
        %v1859 = vmul.f32 %v1787, %v1845
        %v1860 = vmul.f32 %v1807, %v1844
        %1861 = vrot.lane.b32.xlu0 %v1757, 18
        %v1862 = vpop.permute.xlu0 %1861
        %1863 = vrot.lane.b32.xlu0 %v1758, 18
        %v1864 = vpop.permute.xlu0 %1863
        %vm1865 = vcmask 146432
        %v1866 = vsel %vm1865, %v1862, %v1864
        %v1870 = vmul.f32 %v1800, %v1862
        %v1871 = vmul.f32 %v1784, %v1866
        %v1872 = vmul.f32 %v1804, %v1864
        %v1873 = vmul.f32 %v1801, %v1862
        %v1874 = vmul.f32 %v1785, %v1866
        %v1875 = vmul.f32 %v1805, %v1864
        %v1876 = vmul.f32 %v1802, %v1862
        %v1877 = vmul.f32 %v1786, %v1866
        %v1878 = vmul.f32 %v1806, %v1864
        %v1879 = vmul.f32 %v1803, %v1862
        %v1880 = vmul.f32 %v1787, %v1866
        %v1881 = vmul.f32 %v1807, %v1864
        %1882 = vrot.lane.b32.xlu0 %v1753, 32
        %v1883 = vpop.permute.xlu0 %1882
        %1884 = vrot.lane.b32.xlu0 %v1754, 32
        %v1885 = vpop.permute.xlu0 %1884
        %vm1886 = vcmask 261120
        %v1887 = vsel %vm1886, %v1883, %v1885
        %v1891 = vmul.f32 %v1800, %v1883
        %v1892 = vmul.f32 %v1784, %v1887
        %v1893 = vmul.f32 %v1804, %v1885
        %v1894 = vmul.f32 %v1801, %v1883
        %v1895 = vmul.f32 %v1785, %v1887
        %v1896 = vmul.f32 %v1805, %v1885
        %v1897 = vmul.f32 %v1802, %v1883
        %v1898 = vmul.f32 %v1786, %v1887
        %v1899 = vmul.f32 %v1806, %v1885
        %v1900 = vmul.f32 %v1803, %v1883
        %v1901 = vmul.f32 %v1787, %v1887
        %v1902 = vmul.f32 %v1807, %v1885
        %1903 = vrot.lane.b32.xlu0 %v1757, 34
        %v1904 = vpop.permute.xlu0 %1903
        %1905 = vrot.lane.b32.xlu0 %v1758, 34
        %v1906 = vpop.permute.xlu0 %1905
        %vm1907 = vcmask 277504
        %v1908 = vsel %vm1907, %v1904, %v1906
        %v1912 = vmul.f32 %v1800, %v1904
        %v1913 = vmul.f32 %v1784, %v1908
        %v1914 = vmul.f32 %v1804, %v1906
        %v1915 = vmul.f32 %v1801, %v1904
        %v1916 = vmul.f32 %v1785, %v1908
        %v1917 = vmul.f32 %v1805, %v1906
        %v1918 = vmul.f32 %v1802, %v1904
        %v1919 = vmul.f32 %v1786, %v1908
        %v1920 = vmul.f32 %v1806, %v1906
        %v1921 = vmul.f32 %v1803, %v1904
        %v1922 = vmul.f32 %v1787, %v1908
        %v1923 = vmul.f32 %v1807, %v1906
        %1926 = vrot.lane.b32.xlu0 %v1800, 127
        %v1927 = vpop.permute.xlu0 %1926
        %1928 = vrot.lane.b32.xlu0 %v1784, 127
        %v1929 = vpop.permute.xlu0 %1928
        %1930 = vrot.lane.b32.xlu0 %v1804, 127
        %v1931 = vpop.permute.xlu0 %1930
        %vm1932 = vcmask 1039360
        %v1933 = vsel %vm1932, %v1927, %v1929
        %v1934 = vsel %vm1932, %v1929, %v1931
        %1940 = vrot.lane.b32.xlu0 %v1827, 126
        %v1941 = vpop.permute.xlu0 %1940
        %1942 = vrot.lane.b32.xlu0 %v1828, 126
        %v1943 = vpop.permute.xlu0 %1942
        %1944 = vrot.lane.b32.xlu0 %v1829, 126
        %v1945 = vpop.permute.xlu0 %1944
        %vm1946 = vcmask 1031168
        %v1947 = vsel %vm1946, %v1941, %v1943
        %v1948 = vsel %vm1946, %v1943, %v1945
        %1954 = vrot.lane.b32.xlu0 %v1849, 112
        %v1955 = vpop.permute.xlu0 %1954
        %1956 = vrot.lane.b32.xlu0 %v1850, 112
        %v1957 = vpop.permute.xlu0 %1956
        %1958 = vrot.lane.b32.xlu0 %v1851, 112
        %v1959 = vpop.permute.xlu0 %1958
        %vm1960 = vcmask 916480
        %v1961 = vsel %vm1960, %v1955, %v1957
        %v1962 = vsel %vm1960, %v1957, %v1959
        %1965 = vrot.lane.b32.xlu0 %v1800, 111
        %v1966 = vpop.permute.xlu0 %1965
        %1967 = vrot.lane.b32.xlu0 %v1784, 111
        %v1968 = vpop.permute.xlu0 %1967
        %1969 = vrot.lane.b32.xlu0 %v1804, 111
        %v1970 = vpop.permute.xlu0 %1969
        %vm1971 = vcmask 908288
        %v1972 = vsel %vm1971, %v1966, %v1968
        %v1973 = vsel %vm1971, %v1968, %v1970
        %1979 = vrot.lane.b32.xlu0 %v1870, 110
        %v1980 = vpop.permute.xlu0 %1979
        %1981 = vrot.lane.b32.xlu0 %v1871, 110
        %v1982 = vpop.permute.xlu0 %1981
        %1983 = vrot.lane.b32.xlu0 %v1872, 110
        %v1984 = vpop.permute.xlu0 %1983
        %vm1985 = vcmask 900096
        %v1986 = vsel %vm1985, %v1980, %v1982
        %v1987 = vsel %vm1985, %v1982, %v1984
        %1993 = vrot.lane.b32.xlu0 %v1891, 96
        %v1994 = vpop.permute.xlu0 %1993
        %1995 = vrot.lane.b32.xlu0 %v1892, 96
        %v1996 = vpop.permute.xlu0 %1995
        %1997 = vrot.lane.b32.xlu0 %v1893, 96
        %v1998 = vpop.permute.xlu0 %1997
        %vm1999 = vcmask 785408
        %v2000 = vsel %vm1999, %v1994, %v1996
        %v2001 = vsel %vm1999, %v1996, %v1998
        %2004 = vrot.lane.b32.xlu0 %v1800, 95
        %v2005 = vpop.permute.xlu0 %2004
        %2006 = vrot.lane.b32.xlu0 %v1784, 95
        %v2007 = vpop.permute.xlu0 %2006
        %2008 = vrot.lane.b32.xlu0 %v1804, 95
        %v2009 = vpop.permute.xlu0 %2008
        %vm2010 = vcmask 777216
        %v2011 = vsel %vm2010, %v2005, %v2007
        %v2012 = vsel %vm2010, %v2007, %v2009
        %2018 = vrot.lane.b32.xlu0 %v1912, 94
        %v2019 = vpop.permute.xlu0 %2018
        %2020 = vrot.lane.b32.xlu0 %v1913, 94
        %v2021 = vpop.permute.xlu0 %2020
        %2022 = vrot.lane.b32.xlu0 %v1914, 94
        %v2023 = vpop.permute.xlu0 %2022
        %vm2024 = vcmask 769024
        %v2025 = vsel %vm2024, %v2019, %v2021
        %v2026 = vsel %vm2024, %v2021, %v2023
        %v2029 = vld [vmem:[%s13] sm:$0xff]
        %vm2030 = vcmask 588800
        %v2032 = vsel %vm2030, %v2029, 0
        %2034 = vmatprep.subr.mxu0 %v1809
        %2035 = vmatpush1.msra.mxu0 %v1808
        %2036 = vmatprep.subr.mxu0 %v1934
        %2037 = vmatpush1.msra.mxu0 %v1933
        %2038 = vmatprep.subr.mxu0 %v1948
        %2039 = vmatpush1.msra.mxu0 %v1947
        %2040 = vmatprep.subr.mxu0 %v1962
        %2041 = vmatpush1.msra.mxu0 %v1961
        %2042 = vmatprep.subr.mxu0 %v1973
        %2043 = vmatpush1.msra.mxu0 %v1972
        %2044 = vmatprep.subr.mxu0 %v1987
        %2045 = vmatpush1.msra.mxu0 %v1986
        %2046 = vmatprep.subr.mxu0 %v2001
        %2047 = vmatpush1.msra.mxu0 %v2000
        %2048 = vmatprep.subr.mxu0 %v2012
        %2049 = vmatpush1.msra.mxu0 %v2011
        %2050 = vmatprep.subr.mxu0 %v2026
        %2051 = vmatpush1.msra.mxu0 %v2025
        %2052 = vmatprep.subr.mxu0 0.0
        %2053 = vmatpush1.msra.mxu0 0.0
        %2054 = vmatprep.subr.mxu0 0.0
        %2055 = vmatpush1.msra.mxu0 0.0
        %2056 = vmatprep.subr.mxu0 0.0
        %2057 = vmatpush1.msra.mxu0 0.0
        %2058 = vmatprep.subr.mxu0 0.0
        %2059 = vmatpush1.msra.mxu0 0.0
        %2060 = vmatprep.subr.mxu0 0.0
        %2061 = vmatpush1.msra.mxu0 0.0
        %2062 = vmatprep.subr.mxu0 0.0
        %2063 = vmatpush1.msra.mxu0 0.0
        %2064 = vmatprep.subr.mxu0 0.0
        %2065 = vmatpush1.msra.mxu0 0.0
        %2066 = vmatprep.subr.mxu0 0.0
        %2067 = vmatpush1.msra.mxu0 0.0
        %2068 = vmatprep.subr.mxu0 0.0
        %2069 = vmatpush1.msra.mxu0 0.0
        %2070 = vmatprep.subr.mxu0 0.0
        %2071 = vmatpush1.msra.mxu0 0.0
        %2072 = vmatprep.subr.mxu0 0.0
        %2073 = vmatpush1.msra.mxu0 0.0
        %2074 = vmatprep.subr.mxu0 0.0
        %2075 = vmatpush1.msra.mxu0 0.0
        %2076 = vmatprep.subr.mxu0 0.0
        %2077 = vmatpush1.msra.mxu0 0.0
        %2078 = vmatprep.subr.mxu0 0.0
        %2079 = vmatpush1.msra.mxu0 0.0
        %2080 = vmatprep.subr.mxu0 0.0
        %2081 = vmatpush1.msra.mxu0 0.0
        %2082 = vmatprep.subr.mxu0 0.0
        %2083 = vmatpush1.msra.mxu0 0.0
        %2084 = vmatprep.subr.mxu0 0.0
        %2085 = vmatpush1.msra.mxu0 0.0
        %2086 = vmatprep.subr.mxu0 0.0
        %2087 = vmatpush1.msra.mxu0 0.0
        %2088 = vmatprep.subr.mxu0 0.0
        %2089 = vmatpush1.msra.mxu0 0.0
        %2090 = vmatprep.subr.mxu0 0.0
        %2091 = vmatpush1.msra.mxu0 0.0
        %2092 = vmatprep.subr.mxu0 0.0
        %2093 = vmatpush1.msra.mxu0 0.0
        %2094 = vmatprep.subr.mxu0 0.0
        %2095 = vmatpush1.msra.mxu0 0.0
        %2096 = vmatprep.subr.mxu0 0.0
        %2097 = vmatpush1.msra.mxu0 0.0
        %2098 = vmatprep.mubr.f32.mxu0 0.0
        %2099 = vmatmul.mubr.f32.gmra.mrb[0].mxu0 %v2032
        %v2100 = vpop.f32.mrb[0].mxu0
        %v2101 = vadd.f32 0.0, %v2100
        %v2102 = vpop.f32.mrb[0].mxu0
        %v2103 = vadd.f32 0.0, %v2102
        %2104 = vdwg.mxu0
        %2107 = vrot.lane.b32.xlu0 %v1801, 127
        %v2108 = vpop.permute.xlu0 %2107
        %2109 = vrot.lane.b32.xlu0 %v1785, 127
        %v2110 = vpop.permute.xlu0 %2109
        %2111 = vrot.lane.b32.xlu0 %v1805, 127
        %v2112 = vpop.permute.xlu0 %2111
        %v2113 = vsel %vm1932, %v2108, %v2110
        %v2114 = vsel %vm1932, %v2110, %v2112
        %2120 = vrot.lane.b32.xlu0 %v1830, 126
        %v2121 = vpop.permute.xlu0 %2120
        %2122 = vrot.lane.b32.xlu0 %v1831, 126
        %v2123 = vpop.permute.xlu0 %2122
        %2124 = vrot.lane.b32.xlu0 %v1832, 126
        %v2125 = vpop.permute.xlu0 %2124
        %v2126 = vsel %vm1946, %v2121, %v2123
        %v2127 = vsel %vm1946, %v2123, %v2125
        %2133 = vrot.lane.b32.xlu0 %v1852, 112
        %v2134 = vpop.permute.xlu0 %2133
        %2135 = vrot.lane.b32.xlu0 %v1853, 112
        %v2136 = vpop.permute.xlu0 %2135
        %2137 = vrot.lane.b32.xlu0 %v1854, 112
        %v2138 = vpop.permute.xlu0 %2137
        %v2139 = vsel %vm1960, %v2134, %v2136
        %v2140 = vsel %vm1960, %v2136, %v2138
        %2143 = vrot.lane.b32.xlu0 %v1801, 111
        %v2144 = vpop.permute.xlu0 %2143
        %2145 = vrot.lane.b32.xlu0 %v1785, 111
        %v2146 = vpop.permute.xlu0 %2145
        %2147 = vrot.lane.b32.xlu0 %v1805, 111
        %v2148 = vpop.permute.xlu0 %2147
        %v2149 = vsel %vm1971, %v2144, %v2146
        %v2150 = vsel %vm1971, %v2146, %v2148
        %2156 = vrot.lane.b32.xlu0 %v1873, 110
        %v2157 = vpop.permute.xlu0 %2156
        %2158 = vrot.lane.b32.xlu0 %v1874, 110
        %v2159 = vpop.permute.xlu0 %2158
        %2160 = vrot.lane.b32.xlu0 %v1875, 110
        %v2161 = vpop.permute.xlu0 %2160
        %v2162 = vsel %vm1985, %v2157, %v2159
        %v2163 = vsel %vm1985, %v2159, %v2161
        %2169 = vrot.lane.b32.xlu0 %v1894, 96
        %v2170 = vpop.permute.xlu0 %2169
        %2171 = vrot.lane.b32.xlu0 %v1895, 96
        %v2172 = vpop.permute.xlu0 %2171
        %2173 = vrot.lane.b32.xlu0 %v1896, 96
        %v2174 = vpop.permute.xlu0 %2173
        %v2175 = vsel %vm1999, %v2170, %v2172
        %v2176 = vsel %vm1999, %v2172, %v2174
        %2179 = vrot.lane.b32.xlu0 %v1801, 95
        %v2180 = vpop.permute.xlu0 %2179
        %2181 = vrot.lane.b32.xlu0 %v1785, 95
        %v2182 = vpop.permute.xlu0 %2181
        %2183 = vrot.lane.b32.xlu0 %v1805, 95
        %v2184 = vpop.permute.xlu0 %2183
        %v2185 = vsel %vm2010, %v2180, %v2182
        %v2186 = vsel %vm2010, %v2182, %v2184
        %2192 = vrot.lane.b32.xlu0 %v1915, 94
        %v2193 = vpop.permute.xlu0 %2192
        %2194 = vrot.lane.b32.xlu0 %v1916, 94
        %v2195 = vpop.permute.xlu0 %2194
        %2196 = vrot.lane.b32.xlu0 %v1917, 94
        %v2197 = vpop.permute.xlu0 %2196
        %v2198 = vsel %vm2024, %v2193, %v2195
        %v2199 = vsel %vm2024, %v2195, %v2197
        %s2202 = scalar_lea.vmem %s13, 8
        %v2203 = vld [vmem:[%s2202] sm:$0xff]
        %v2205 = vsel %vm2030, %v2203, 0
        %2207 = vmatprep.subr.mxu0 %v1811
        %2208 = vmatpush1.msra.mxu0 %v1810
        %2209 = vmatprep.subr.mxu0 %v2114
        %2210 = vmatpush1.msra.mxu0 %v2113
        %2211 = vmatprep.subr.mxu0 %v2127
        %2212 = vmatpush1.msra.mxu0 %v2126
        %2213 = vmatprep.subr.mxu0 %v2140
        %2214 = vmatpush1.msra.mxu0 %v2139
        %2215 = vmatprep.subr.mxu0 %v2150
        %2216 = vmatpush1.msra.mxu0 %v2149
        %2217 = vmatprep.subr.mxu0 %v2163
        %2218 = vmatpush1.msra.mxu0 %v2162
        %2219 = vmatprep.subr.mxu0 %v2176
        %2220 = vmatpush1.msra.mxu0 %v2175
        %2221 = vmatprep.subr.mxu0 %v2186
        %2222 = vmatpush1.msra.mxu0 %v2185
        %2223 = vmatprep.subr.mxu0 %v2199
        %2224 = vmatpush1.msra.mxu0 %v2198
        %2225 = vmatprep.subr.mxu0 0.0
        %2226 = vmatpush1.msra.mxu0 0.0
        %2227 = vmatprep.subr.mxu0 0.0
        %2228 = vmatpush1.msra.mxu0 0.0
        %2229 = vmatprep.subr.mxu0 0.0
        %2230 = vmatpush1.msra.mxu0 0.0
        %2231 = vmatprep.subr.mxu0 0.0
        %2232 = vmatpush1.msra.mxu0 0.0
        %2233 = vmatprep.subr.mxu0 0.0
        %2234 = vmatpush1.msra.mxu0 0.0
        %2235 = vmatprep.subr.mxu0 0.0
        %2236 = vmatpush1.msra.mxu0 0.0
        %2237 = vmatprep.subr.mxu0 0.0
        %2238 = vmatpush1.msra.mxu0 0.0
        %2239 = vmatprep.subr.mxu0 0.0
        %2240 = vmatpush1.msra.mxu0 0.0
        %2241 = vmatprep.subr.mxu0 0.0
        %2242 = vmatpush1.msra.mxu0 0.0
        %2243 = vmatprep.subr.mxu0 0.0
        %2244 = vmatpush1.msra.mxu0 0.0
        %2245 = vmatprep.subr.mxu0 0.0
        %2246 = vmatpush1.msra.mxu0 0.0
        %2247 = vmatprep.subr.mxu0 0.0
        %2248 = vmatpush1.msra.mxu0 0.0
        %2249 = vmatprep.subr.mxu0 0.0
        %2250 = vmatpush1.msra.mxu0 0.0
        %2251 = vmatprep.subr.mxu0 0.0
        %2252 = vmatpush1.msra.mxu0 0.0
        %2253 = vmatprep.subr.mxu0 0.0
        %2254 = vmatpush1.msra.mxu0 0.0
        %2255 = vmatprep.subr.mxu0 0.0
        %2256 = vmatpush1.msra.mxu0 0.0
        %2257 = vmatprep.subr.mxu0 0.0
        %2258 = vmatpush1.msra.mxu0 0.0
        %2259 = vmatprep.subr.mxu0 0.0
        %2260 = vmatpush1.msra.mxu0 0.0
        %2261 = vmatprep.subr.mxu0 0.0
        %2262 = vmatpush1.msra.mxu0 0.0
        %2263 = vmatprep.subr.mxu0 0.0
        %2264 = vmatpush1.msra.mxu0 0.0
        %2265 = vmatprep.subr.mxu0 0.0
        %2266 = vmatpush1.msra.mxu0 0.0
        %2267 = vmatprep.subr.mxu0 0.0
        %2268 = vmatpush1.msra.mxu0 0.0
        %2269 = vmatprep.subr.mxu0 0.0
        %2270 = vmatpush1.msra.mxu0 0.0
        %2271 = vmatprep.mubr.f32.mxu0 0.0
        %2272 = vmatmul.mubr.f32.gmra.mrb[0].mxu0 %v2205
        %v2273 = vpop.f32.mrb[0].mxu0
        %v2274 = vadd.f32 0.0, %v2273
        %v2275 = vpop.f32.mrb[0].mxu0
        %v2276 = vadd.f32 0.0, %v2275
        %2277 = vdwg.mxu0
        %2280 = vrot.lane.b32.xlu0 %v1802, 127
        %v2281 = vpop.permute.xlu0 %2280
        %2282 = vrot.lane.b32.xlu0 %v1786, 127
        %v2283 = vpop.permute.xlu0 %2282
        %2284 = vrot.lane.b32.xlu0 %v1806, 127
        %v2285 = vpop.permute.xlu0 %2284
        %v2286 = vsel %vm1932, %v2281, %v2283
        %v2287 = vsel %vm1932, %v2283, %v2285
        %2293 = vrot.lane.b32.xlu0 %v1833, 126
        %v2294 = vpop.permute.xlu0 %2293
        %2295 = vrot.lane.b32.xlu0 %v1834, 126
        %v2296 = vpop.permute.xlu0 %2295
        %2297 = vrot.lane.b32.xlu0 %v1835, 126
        %v2298 = vpop.permute.xlu0 %2297
        %v2299 = vsel %vm1946, %v2294, %v2296
        %v2300 = vsel %vm1946, %v2296, %v2298
        %2306 = vrot.lane.b32.xlu0 %v1855, 112
        %v2307 = vpop.permute.xlu0 %2306
        %2308 = vrot.lane.b32.xlu0 %v1856, 112
        %v2309 = vpop.permute.xlu0 %2308
        %2310 = vrot.lane.b32.xlu0 %v1857, 112
        %v2311 = vpop.permute.xlu0 %2310
        %v2312 = vsel %vm1960, %v2307, %v2309
        %v2313 = vsel %vm1960, %v2309, %v2311
        %2316 = vrot.lane.b32.xlu0 %v1802, 111
        %v2317 = vpop.permute.xlu0 %2316
        %2318 = vrot.lane.b32.xlu0 %v1786, 111
        %v2319 = vpop.permute.xlu0 %2318
        %2320 = vrot.lane.b32.xlu0 %v1806, 111
        %v2321 = vpop.permute.xlu0 %2320
        %v2322 = vsel %vm1971, %v2317, %v2319
        %v2323 = vsel %vm1971, %v2319, %v2321
        %2329 = vrot.lane.b32.xlu0 %v1876, 110
        %v2330 = vpop.permute.xlu0 %2329
        %2331 = vrot.lane.b32.xlu0 %v1877, 110
        %v2332 = vpop.permute.xlu0 %2331
        %2333 = vrot.lane.b32.xlu0 %v1878, 110
        %v2334 = vpop.permute.xlu0 %2333
        %v2335 = vsel %vm1985, %v2330, %v2332
        %v2336 = vsel %vm1985, %v2332, %v2334
        %2342 = vrot.lane.b32.xlu0 %v1897, 96
        %v2343 = vpop.permute.xlu0 %2342
        %2344 = vrot.lane.b32.xlu0 %v1898, 96
        %v2345 = vpop.permute.xlu0 %2344
        %2346 = vrot.lane.b32.xlu0 %v1899, 96
        %v2347 = vpop.permute.xlu0 %2346
        %v2348 = vsel %vm1999, %v2343, %v2345
        %v2349 = vsel %vm1999, %v2345, %v2347
        %2352 = vrot.lane.b32.xlu0 %v1802, 95
        %v2353 = vpop.permute.xlu0 %2352
        %2354 = vrot.lane.b32.xlu0 %v1786, 95
        %v2355 = vpop.permute.xlu0 %2354
        %2356 = vrot.lane.b32.xlu0 %v1806, 95
        %v2357 = vpop.permute.xlu0 %2356
        %v2358 = vsel %vm2010, %v2353, %v2355
        %v2359 = vsel %vm2010, %v2355, %v2357
        %2365 = vrot.lane.b32.xlu0 %v1918, 94
        %v2366 = vpop.permute.xlu0 %2365
        %2367 = vrot.lane.b32.xlu0 %v1919, 94
        %v2368 = vpop.permute.xlu0 %2367
        %2369 = vrot.lane.b32.xlu0 %v1920, 94
        %v2370 = vpop.permute.xlu0 %2369
        %v2371 = vsel %vm2024, %v2366, %v2368
        %v2372 = vsel %vm2024, %v2368, %v2370
        %s2375 = scalar_lea.vmem %s13, 16
        %v2376 = vld [vmem:[%s2375] sm:$0xff]
        %v2378 = vsel %vm2030, %v2376, 0
        %2380 = vmatprep.subr.mxu0 %v1813
        %2381 = vmatpush1.msra.mxu0 %v1812
        %2382 = vmatprep.subr.mxu0 %v2287
        %2383 = vmatpush1.msra.mxu0 %v2286
        %2384 = vmatprep.subr.mxu0 %v2300
        %2385 = vmatpush1.msra.mxu0 %v2299
        %2386 = vmatprep.subr.mxu0 %v2313
        %2387 = vmatpush1.msra.mxu0 %v2312
        %2388 = vmatprep.subr.mxu0 %v2323
        %2389 = vmatpush1.msra.mxu0 %v2322
        %2390 = vmatprep.subr.mxu0 %v2336
        %2391 = vmatpush1.msra.mxu0 %v2335
        %2392 = vmatprep.subr.mxu0 %v2349
        %2393 = vmatpush1.msra.mxu0 %v2348
        %2394 = vmatprep.subr.mxu0 %v2359
        %2395 = vmatpush1.msra.mxu0 %v2358
        %2396 = vmatprep.subr.mxu0 %v2372
        %2397 = vmatpush1.msra.mxu0 %v2371
        %2398 = vmatprep.subr.mxu0 0.0
        %2399 = vmatpush1.msra.mxu0 0.0
        %2400 = vmatprep.subr.mxu0 0.0
        %2401 = vmatpush1.msra.mxu0 0.0
        %2402 = vmatprep.subr.mxu0 0.0
        %2403 = vmatpush1.msra.mxu0 0.0
        %2404 = vmatprep.subr.mxu0 0.0
        %2405 = vmatpush1.msra.mxu0 0.0
        %2406 = vmatprep.subr.mxu0 0.0
        %2407 = vmatpush1.msra.mxu0 0.0
        %2408 = vmatprep.subr.mxu0 0.0
        %2409 = vmatpush1.msra.mxu0 0.0
        %2410 = vmatprep.subr.mxu0 0.0
        %2411 = vmatpush1.msra.mxu0 0.0
        %2412 = vmatprep.subr.mxu0 0.0
        %2413 = vmatpush1.msra.mxu0 0.0
        %2414 = vmatprep.subr.mxu0 0.0
        %2415 = vmatpush1.msra.mxu0 0.0
        %2416 = vmatprep.subr.mxu0 0.0
        %2417 = vmatpush1.msra.mxu0 0.0
        %2418 = vmatprep.subr.mxu0 0.0
        %2419 = vmatpush1.msra.mxu0 0.0
        %2420 = vmatprep.subr.mxu0 0.0
        %2421 = vmatpush1.msra.mxu0 0.0
        %2422 = vmatprep.subr.mxu0 0.0
        %2423 = vmatpush1.msra.mxu0 0.0
        %2424 = vmatprep.subr.mxu0 0.0
        %2425 = vmatpush1.msra.mxu0 0.0
        %2426 = vmatprep.subr.mxu0 0.0
        %2427 = vmatpush1.msra.mxu0 0.0
        %2428 = vmatprep.subr.mxu0 0.0
        %2429 = vmatpush1.msra.mxu0 0.0
        %2430 = vmatprep.subr.mxu0 0.0
        %2431 = vmatpush1.msra.mxu0 0.0
        %2432 = vmatprep.subr.mxu0 0.0
        %2433 = vmatpush1.msra.mxu0 0.0
        %2434 = vmatprep.subr.mxu0 0.0
        %2435 = vmatpush1.msra.mxu0 0.0
        %2436 = vmatprep.subr.mxu0 0.0
        %2437 = vmatpush1.msra.mxu0 0.0
        %2438 = vmatprep.subr.mxu0 0.0
        %2439 = vmatpush1.msra.mxu0 0.0
        %2440 = vmatprep.subr.mxu0 0.0
        %2441 = vmatpush1.msra.mxu0 0.0
        %2442 = vmatprep.subr.mxu0 0.0
        %2443 = vmatpush1.msra.mxu0 0.0
        %2444 = vmatprep.mubr.f32.mxu0 0.0
        %2445 = vmatmul.mubr.f32.gmra.mrb[0].mxu0 %v2378
        %v2446 = vpop.f32.mrb[0].mxu0
        %v2447 = vadd.f32 0.0, %v2446
        %v2448 = vpop.f32.mrb[0].mxu0
        %v2449 = vadd.f32 0.0, %v2448
        %2450 = vdwg.mxu0
        %2453 = vrot.lane.b32.xlu0 %v1803, 127
        %v2454 = vpop.permute.xlu0 %2453
        %2455 = vrot.lane.b32.xlu0 %v1787, 127
        %v2456 = vpop.permute.xlu0 %2455
        %2457 = vrot.lane.b32.xlu0 %v1807, 127
        %v2458 = vpop.permute.xlu0 %2457
        %v2459 = vsel %vm1932, %v2454, %v2456
        %v2460 = vsel %vm1932, %v2456, %v2458
        %2466 = vrot.lane.b32.xlu0 %v1836, 126
        %v2467 = vpop.permute.xlu0 %2466
        %2468 = vrot.lane.b32.xlu0 %v1837, 126
        %v2469 = vpop.permute.xlu0 %2468
        %2470 = vrot.lane.b32.xlu0 %v1838, 126
        %v2471 = vpop.permute.xlu0 %2470
        %v2472 = vsel %vm1946, %v2467, %v2469
        %v2473 = vsel %vm1946, %v2469, %v2471
        %2479 = vrot.lane.b32.xlu0 %v1858, 112
        %v2480 = vpop.permute.xlu0 %2479
        %2481 = vrot.lane.b32.xlu0 %v1859, 112
        %v2482 = vpop.permute.xlu0 %2481
        %2483 = vrot.lane.b32.xlu0 %v1860, 112
        %v2484 = vpop.permute.xlu0 %2483
        %v2485 = vsel %vm1960, %v2480, %v2482
        %v2486 = vsel %vm1960, %v2482, %v2484
        %2489 = vrot.lane.b32.xlu0 %v1803, 111
        %v2490 = vpop.permute.xlu0 %2489
        %2491 = vrot.lane.b32.xlu0 %v1787, 111
        %v2492 = vpop.permute.xlu0 %2491
        %2493 = vrot.lane.b32.xlu0 %v1807, 111
        %v2494 = vpop.permute.xlu0 %2493
        %v2495 = vsel %vm1971, %v2490, %v2492
        %v2496 = vsel %vm1971, %v2492, %v2494
        %2502 = vrot.lane.b32.xlu0 %v1879, 110
        %v2503 = vpop.permute.xlu0 %2502
        %2504 = vrot.lane.b32.xlu0 %v1880, 110
        %v2505 = vpop.permute.xlu0 %2504
        %2506 = vrot.lane.b32.xlu0 %v1881, 110
        %v2507 = vpop.permute.xlu0 %2506
        %v2508 = vsel %vm1985, %v2503, %v2505
        %v2509 = vsel %vm1985, %v2505, %v2507
        %2515 = vrot.lane.b32.xlu0 %v1900, 96
        %v2516 = vpop.permute.xlu0 %2515
        %2517 = vrot.lane.b32.xlu0 %v1901, 96
        %v2518 = vpop.permute.xlu0 %2517
        %2519 = vrot.lane.b32.xlu0 %v1902, 96
        %v2520 = vpop.permute.xlu0 %2519
        %v2521 = vsel %vm1999, %v2516, %v2518
        %v2522 = vsel %vm1999, %v2518, %v2520
        %2525 = vrot.lane.b32.xlu0 %v1803, 95
        %v2526 = vpop.permute.xlu0 %2525
        %2527 = vrot.lane.b32.xlu0 %v1787, 95
        %v2528 = vpop.permute.xlu0 %2527
        %2529 = vrot.lane.b32.xlu0 %v1807, 95
        %v2530 = vpop.permute.xlu0 %2529
        %v2531 = vsel %vm2010, %v2526, %v2528
        %v2532 = vsel %vm2010, %v2528, %v2530
        %2538 = vrot.lane.b32.xlu0 %v1921, 94
        %v2539 = vpop.permute.xlu0 %2538
        %2540 = vrot.lane.b32.xlu0 %v1922, 94
        %v2541 = vpop.permute.xlu0 %2540
        %2542 = vrot.lane.b32.xlu0 %v1923, 94
        %v2543 = vpop.permute.xlu0 %2542
        %v2544 = vsel %vm2024, %v2539, %v2541
        %v2545 = vsel %vm2024, %v2541, %v2543
        %s2548 = scalar_lea.vmem %s13, 24
        %v2549 = vld [vmem:[%s2548] sm:$0xff]
        %v2551 = vsel %vm2030, %v2549, 0
        %2553 = vmatprep.subr.mxu0 %v1815
        %2554 = vmatpush1.msra.mxu0 %v1814
        %2555 = vmatprep.subr.mxu0 %v2460
        %2556 = vmatpush1.msra.mxu0 %v2459
        %2557 = vmatprep.subr.mxu0 %v2473
        %2558 = vmatpush1.msra.mxu0 %v2472
        %2559 = vmatprep.subr.mxu0 %v2486
        %2560 = vmatpush1.msra.mxu0 %v2485
        %2561 = vmatprep.subr.mxu0 %v2496
        %2562 = vmatpush1.msra.mxu0 %v2495
        %2563 = vmatprep.subr.mxu0 %v2509
        %2564 = vmatpush1.msra.mxu0 %v2508
        %2565 = vmatprep.subr.mxu0 %v2522
        %2566 = vmatpush1.msra.mxu0 %v2521
        %2567 = vmatprep.subr.mxu0 %v2532
        %2568 = vmatpush1.msra.mxu0 %v2531
        %2569 = vmatprep.subr.mxu0 %v2545
        %2570 = vmatpush1.msra.mxu0 %v2544
        %2571 = vmatprep.subr.mxu0 0.0
        %2572 = vmatpush1.msra.mxu0 0.0
        %2573 = vmatprep.subr.mxu0 0.0
        %2574 = vmatpush1.msra.mxu0 0.0
        %2575 = vmatprep.subr.mxu0 0.0
        %2576 = vmatpush1.msra.mxu0 0.0
        %2577 = vmatprep.subr.mxu0 0.0
        %2578 = vmatpush1.msra.mxu0 0.0
        %2579 = vmatprep.subr.mxu0 0.0
        %2580 = vmatpush1.msra.mxu0 0.0
        %2581 = vmatprep.subr.mxu0 0.0
        %2582 = vmatpush1.msra.mxu0 0.0
        %2583 = vmatprep.subr.mxu0 0.0
        %2584 = vmatpush1.msra.mxu0 0.0
        %2585 = vmatprep.subr.mxu0 0.0
        %2586 = vmatpush1.msra.mxu0 0.0
        %2587 = vmatprep.subr.mxu0 0.0
        %2588 = vmatpush1.msra.mxu0 0.0
        %2589 = vmatprep.subr.mxu0 0.0
        %2590 = vmatpush1.msra.mxu0 0.0
        %2591 = vmatprep.subr.mxu0 0.0
        %2592 = vmatpush1.msra.mxu0 0.0
        %2593 = vmatprep.subr.mxu0 0.0
        %2594 = vmatpush1.msra.mxu0 0.0
        %2595 = vmatprep.subr.mxu0 0.0
        %2596 = vmatpush1.msra.mxu0 0.0
        %2597 = vmatprep.subr.mxu0 0.0
        %2598 = vmatpush1.msra.mxu0 0.0
        %2599 = vmatprep.subr.mxu0 0.0
        %2600 = vmatpush1.msra.mxu0 0.0
        %2601 = vmatprep.subr.mxu0 0.0
        %2602 = vmatpush1.msra.mxu0 0.0
        %2603 = vmatprep.subr.mxu0 0.0
        %2604 = vmatpush1.msra.mxu0 0.0
        %2605 = vmatprep.subr.mxu0 0.0
        %2606 = vmatpush1.msra.mxu0 0.0
        %2607 = vmatprep.subr.mxu0 0.0
        %2608 = vmatpush1.msra.mxu0 0.0
        %2609 = vmatprep.subr.mxu0 0.0
        %2610 = vmatpush1.msra.mxu0 0.0
        %2611 = vmatprep.subr.mxu0 0.0
        %2612 = vmatpush1.msra.mxu0 0.0
        %2613 = vmatprep.subr.mxu0 0.0
        %2614 = vmatpush1.msra.mxu0 0.0
        %2615 = vmatprep.subr.mxu0 0.0
        %2616 = vmatpush1.msra.mxu0 0.0
        %2617 = vmatprep.mubr.f32.mxu0 0.0
        %2618 = vmatmul.mubr.f32.gmra.mrb[0].mxu0 %v2551
        %v2619 = vpop.f32.mrb[0].mxu0
        %v2620 = vadd.f32 0.0, %v2619
        %v2621 = vpop.f32.mrb[0].mxu0
        %v2622 = vadd.f32 0.0, %v2621
        %2623 = vdwg.mxu0
        %2625 = vset.pattern.permute.xlu0 0
        %2626 = vperm.xlu0 %2625, %v673
        %v2627 = vpop.permute.xlu0 %2626
        %2630 = vset.pattern.permute.xlu0 0
        %2631 = vperm.xlu0 %2630, %v674
        %v2632 = vpop.permute.xlu0 %2631
        %2635 = vset.pattern.permute.xlu0 0
        %2636 = vperm.xlu0 %2635, %v675
        %v2637 = vpop.permute.xlu0 %2636
        %2640 = vset.pattern.permute.xlu0 0
        %2641 = vperm.xlu0 %2640, %v676
        %v2642 = vpop.permute.xlu0 %2641
        %2645 = vset.pattern.permute.xlu0 0
        %2646 = vperm.xlu0 %2645, %v677
        %v2647 = vpop.permute.xlu0 %2646
        %v2649 = vmul.f32 %v792, %v2627
        %v2650 = vmul.f32 %v794, %v2627
        %v2651 = vmul.f32 %v2101, %v2632
        %v2652 = vmul.f32 %v2103, %v2632
        %v2653 = vmul.f32 %v2274, %v2637
        %v2654 = vmul.f32 %v2276, %v2637
        %v2655 = vmul.f32 %v2447, %v2642
        %v2656 = vmul.f32 %v2449, %v2642
        %v2657 = vmul.f32 %v2620, %v2647
        %v2658 = vmul.f32 %v2622, %v2647
        %2660 = vset.pattern.permute.xlu0 0
        %2661 = vperm.xlu0 %2660, %v678
        %v2662 = vpop.permute.xlu0 %2661
        %2665 = vset.pattern.permute.xlu0 0
        %2666 = vperm.xlu0 %2665, %v679
        %v2667 = vpop.permute.xlu0 %2666
        %2670 = vset.pattern.permute.xlu0 0
        %2671 = vperm.xlu0 %2670, %v680
        %v2672 = vpop.permute.xlu0 %2671
        %2675 = vset.pattern.permute.xlu0 0
        %2676 = vperm.xlu0 %2675, %v681
        %v2677 = vpop.permute.xlu0 %2676
        %2680 = vset.pattern.permute.xlu0 0
        %2681 = vperm.xlu0 %2680, %v682
        %v2682 = vpop.permute.xlu0 %2681
        %v2684 = vadd.f32 %v2649, %v2662
        %v2685 = vadd.f32 %v2650, %v2662
        %v2686 = vadd.f32 %v2651, %v2667
        %v2687 = vadd.f32 %v2652, %v2667
        %v2688 = vadd.f32 %v2653, %v2672
        %v2689 = vadd.f32 %v2654, %v2672
        %v2690 = vadd.f32 %v2655, %v2677
        %v2691 = vadd.f32 %v2656, %v2677
        %v2692 = vadd.f32 %v2657, %v2682
        %v2693 = vadd.f32 %v2658, %v2682
        %v2694 = vmax.f32 %v2684, 0.0
        %v2695 = vmax.f32 %v2685, 0.0
        %v2696 = vmax.f32 %v2686, 0.0
        %v2697 = vmax.f32 %v2687, 0.0
        %v2698 = vmax.f32 %v2688, 0.0
        %v2699 = vmax.f32 %v2689, 0.0
        %v2700 = vmax.f32 %v2690, 0.0
        %v2701 = vmax.f32 %v2691, 0.0
        %v2702 = vmax.f32 %v2692, 0.0
        %v2703 = vmax.f32 %v2693, 0.0
        %vm2704 = vcmask 326656
        %v2706 = vsel %vm2704, %v683, 0
        %2708 = vmatprep.subr.mxu0 %v2695
        %2709 = vmatpush1.msra.mxu0 %v2694
        %2710 = vmatprep.subr.mxu0 %v2697
        %2711 = vmatpush1.msra.mxu0 %v2696
        %2712 = vmatprep.subr.mxu0 %v2699
        %2713 = vmatpush1.msra.mxu0 %v2698
        %2714 = vmatprep.subr.mxu0 %v2701
        %2715 = vmatpush1.msra.mxu0 %v2700
        %2716 = vmatprep.subr.mxu0 %v2703
        %2717 = vmatpush1.msra.mxu0 %v2702
        %2718 = vmatprep.subr.mxu0 0.0
        %2719 = vmatpush1.msra.mxu0 0.0
        %2720 = vmatprep.subr.mxu0 0.0
        %2721 = vmatpush1.msra.mxu0 0.0
        %2722 = vmatprep.subr.mxu0 0.0
        %2723 = vmatpush1.msra.mxu0 0.0
        %2724 = vmatprep.subr.mxu0 0.0
        %2725 = vmatpush1.msra.mxu0 0.0
        %2726 = vmatprep.subr.mxu0 0.0
        %2727 = vmatpush1.msra.mxu0 0.0
        %2728 = vmatprep.subr.mxu0 0.0
        %2729 = vmatpush1.msra.mxu0 0.0
        %2730 = vmatprep.subr.mxu0 0.0
        %2731 = vmatpush1.msra.mxu0 0.0
        %2732 = vmatprep.subr.mxu0 0.0
        %2733 = vmatpush1.msra.mxu0 0.0
        %2734 = vmatprep.subr.mxu0 0.0
        %2735 = vmatpush1.msra.mxu0 0.0
        %2736 = vmatprep.subr.mxu0 0.0
        %2737 = vmatpush1.msra.mxu0 0.0
        %2738 = vmatprep.subr.mxu0 0.0
        %2739 = vmatpush1.msra.mxu0 0.0
        %2740 = vmatprep.subr.mxu0 0.0
        %2741 = vmatpush1.msra.mxu0 0.0
        %2742 = vmatprep.subr.mxu0 0.0
        %2743 = vmatpush1.msra.mxu0 0.0
        %2744 = vmatprep.subr.mxu0 0.0
        %2745 = vmatpush1.msra.mxu0 0.0
        %2746 = vmatprep.subr.mxu0 0.0
        %2747 = vmatpush1.msra.mxu0 0.0
        %2748 = vmatprep.subr.mxu0 0.0
        %2749 = vmatpush1.msra.mxu0 0.0
        %2750 = vmatprep.subr.mxu0 0.0
        %2751 = vmatpush1.msra.mxu0 0.0
        %2752 = vmatprep.subr.mxu0 0.0
        %2753 = vmatpush1.msra.mxu0 0.0
        %2754 = vmatprep.subr.mxu0 0.0
        %2755 = vmatpush1.msra.mxu0 0.0
        %2756 = vmatprep.subr.mxu0 0.0
        %2757 = vmatpush1.msra.mxu0 0.0
        %2758 = vmatprep.subr.mxu0 0.0
        %2759 = vmatpush1.msra.mxu0 0.0
        %2760 = vmatprep.subr.mxu0 0.0
        %2761 = vmatpush1.msra.mxu0 0.0
        %2762 = vmatprep.subr.mxu0 0.0
        %2763 = vmatpush1.msra.mxu0 0.0
        %2764 = vmatprep.subr.mxu0 0.0
        %2765 = vmatpush1.msra.mxu0 0.0
        %2766 = vmatprep.subr.mxu0 0.0
        %2767 = vmatpush1.msra.mxu0 0.0
        %2768 = vmatprep.subr.mxu0 0.0
        %2769 = vmatpush1.msra.mxu0 0.0
        %2770 = vmatprep.subr.mxu0 0.0
        %2771 = vmatpush1.msra.mxu0 0.0
        %2772 = vmatprep.mubr.f32.mxu0 0.0
        %2773 = vmatmul.mubr.f32.gmra.mrb[0].mxu0 %v2706
        %v2774 = vpop.f32.mrb[0].mxu0
        %v2775 = vadd.f32 0.0, %v2774
        %v2776 = vpop.f32.mrb[0].mxu0
        %v2777 = vadd.f32 0.0, %v2776
        %2778 = vdwg.mxu0
        %v2780 = vcombine.high %v827, %v827
        %v2782 = vsel %vm716, %v796, 0
        %v2784 = vsel %vm720, %v827, 0
        %v2786 = vsel %vm720, %v2780, 0
        %2788 = vmatprep.subr.mxu0 %v2786
        %2789 = vmatpush1.msra.mxu0 %v2784
        %2790 = vmatprep.subr.mxu0 0.0
        %2791 = vmatpush1.msra.mxu0 0.0
        %2792 = vmatprep.subr.mxu0 0.0
        %2793 = vmatpush1.msra.mxu0 0.0
        %2794 = vmatprep.subr.mxu0 0.0
        %2795 = vmatpush1.msra.mxu0 0.0
        %2796 = vmatprep.subr.mxu0 0.0
        %2797 = vmatpush1.msra.mxu0 0.0
        %2798 = vmatprep.subr.mxu0 0.0
        %2799 = vmatpush1.msra.mxu0 0.0
        %2800 = vmatprep.subr.mxu0 0.0
        %2801 = vmatpush1.msra.mxu0 0.0
        %2802 = vmatprep.subr.mxu0 0.0
        %2803 = vmatpush1.msra.mxu0 0.0
        %2804 = vmatprep.subr.mxu0 0.0
        %2805 = vmatpush1.msra.mxu0 0.0
        %2806 = vmatprep.subr.mxu0 0.0
        %2807 = vmatpush1.msra.mxu0 0.0
        %2808 = vmatprep.subr.mxu0 0.0
        %2809 = vmatpush1.msra.mxu0 0.0
        %2810 = vmatprep.subr.mxu0 0.0
        %2811 = vmatpush1.msra.mxu0 0.0
        %2812 = vmatprep.subr.mxu0 0.0
        %2813 = vmatpush1.msra.mxu0 0.0
        %2814 = vmatprep.subr.mxu0 0.0
        %2815 = vmatpush1.msra.mxu0 0.0
        %2816 = vmatprep.subr.mxu0 0.0
        %2817 = vmatpush1.msra.mxu0 0.0
        %2818 = vmatprep.subr.mxu0 0.0
        %2819 = vmatpush1.msra.mxu0 0.0
        %2820 = vmatprep.subr.mxu0 0.0
        %2821 = vmatpush1.msra.mxu0 0.0
        %2822 = vmatprep.subr.mxu0 0.0
        %2823 = vmatpush1.msra.mxu0 0.0
        %2824 = vmatprep.subr.mxu0 0.0
        %2825 = vmatpush1.msra.mxu0 0.0
        %2826 = vmatprep.subr.mxu0 0.0
        %2827 = vmatpush1.msra.mxu0 0.0
        %2828 = vmatprep.subr.mxu0 0.0
        %2829 = vmatpush1.msra.mxu0 0.0
        %2830 = vmatprep.subr.mxu0 0.0
        %2831 = vmatpush1.msra.mxu0 0.0
        %2832 = vmatprep.subr.mxu0 0.0
        %2833 = vmatpush1.msra.mxu0 0.0
        %2834 = vmatprep.subr.mxu0 0.0
        %2835 = vmatpush1.msra.mxu0 0.0
        %2836 = vmatprep.subr.mxu0 0.0
        %2837 = vmatpush1.msra.mxu0 0.0
        %2838 = vmatprep.subr.mxu0 0.0
        %2839 = vmatpush1.msra.mxu0 0.0
        %2840 = vmatprep.subr.mxu0 0.0
        %2841 = vmatpush1.msra.mxu0 0.0
        %2842 = vmatprep.subr.mxu0 0.0
        %2843 = vmatpush1.msra.mxu0 0.0
        %2844 = vmatprep.subr.mxu0 0.0
        %2845 = vmatpush1.msra.mxu0 0.0
        %2846 = vmatprep.subr.mxu0 0.0
        %2847 = vmatpush1.msra.mxu0 0.0
        %2848 = vmatprep.subr.mxu0 0.0
        %2849 = vmatpush1.msra.mxu0 0.0
        %2850 = vmatprep.subr.mxu0 0.0
        %2851 = vmatpush1.msra.mxu0 0.0
        %2852 = vmatprep.mubr.f32.mxu0 0.0
        %2853 = vmatmul.mubr.f32.gmra.mrb[0].mxu0 %v2782
        %v2854 = vpop.f32.mrb[0].mxu0
        %v2855 = vadd.f32 %v2775, %v2854
        %v2856 = vpop.f32.mrb[0].mxu0
        %v2857 = vadd.f32 %v2777, %v2856
        %2858 = vdwg.mxu0
        %2859 = vst [vmem:[%s541] sm:$0xff] %v2855
        %2860 = vst [vmem:[%s541 + $0x8] sm:$0xff] %v2857
        %s2861 = sand.u32 %s401, 1
        %s2862 = scalar_lea.sflag [#allocation3], %s2861
        %s2863 = sand.u32 %s401, 1
        %s2864 = smul.addr %s2863, 16
        %s2865 = scalar_lea.vmem [#allocation2], %s2864
        // Predicated region
        $region89: #{tpu_custom_call.1} parent=87 // pred_check
          %p2866 = pneg %p411
        $region90: #{tpu_custom_call.1} parent=87 // pred_check_branch
          %2868 = sbr.rel (%p2866) target = $region92
        $region91: #{tpu_custom_call.1} parent=87 // pred_region
          %s2870 = ssub.s32 256, 256
          %2871 = vsyncadd %s2862, %s2870
          %s2872 = smul.addr %s31, 2
          %s2873 = smul.addr %s2872, 128
          %s2874 = scalar_lea.hbm %s17, %s2873
          %s2876 = sshll.u32 %s2865, 4
          %s2877 = int_to_ptr.vmem [resolvable:$true] %s2876
          %2879 = dma.vmem_to_hbm [thread:$0]  %s2877, 256, %s2874, %s2862
        $region92: #{tpu_custom_call.1} parent=87 // pred_fallthru
          _
      $region88: #{tpu_custom_call.1} parent=5 // pred_fallthru
        _
      %p2880 = scmp.le.s32.totalorder 2, %s26
      // Predicated region
      $region93: #{tpu_custom_call.1} parent=5 // pred_check
        %p2881 = pneg %p2880
      $region94: #{tpu_custom_call.1} parent=5 // pred_check_branch
        %2883 = sbr.rel (%p2881) target = $region96
      $region95: #{tpu_custom_call.1} parent=5 // pred_region
        %s2884 = ssub.s32 %s26, 2
        // Predicated region
        $region97: #{tpu_custom_call.1} parent=95 // pred_check
          %p2885 = pneg %p417
        $region98: #{tpu_custom_call.1} parent=95 // pred_check_branch
          %2887 = sbr.rel (%p2885) target = $region100
        $region99: #{tpu_custom_call.1} parent=95 // pred_region
          %s2888 = sand.u32 %s402, 1
          %s2889 = scalar_lea.sflag [#allocation3], %s2888
          %s2890 = sand.u32 %s402, 1
          %s2891 = smul.addr %s2890, 16
          %s2892 = scalar_lea.vmem [#allocation2], %s2891
          %2893 = dma.done %s2889, 256
        $region100: #{tpu_custom_call.1} parent=95 // pred_fallthru
          _
      $region96: #{tpu_custom_call.1} parent=5 // pred_fallthru
        _
    $region6: #{tpu_custom_call.1} parent=1 // loop_footer
      %s30 = sadd.s32 1, %s26
    $region7: #{tpu_custom_call.1} parent=1 // loop_footer_branch
      %25 = sbr.rel target = $region3
    $region8: #{tpu_custom_call.1} parent=1 // loop_exit
      _
    %2894 = vsyncpa [#allocation3], 1
    %s2895 = scalar_lea.sflag [#allocation3], 1
    %2896 = vsyncpa %s2895, 1

</llo_original>
